<compile_context>
chip_gen: v6e
topology: v6e:2x2x1
jax: 0.10.0
libtpu: 0.0.40
codegen_flags: <defaults>
</compile_context>

<pallas_src>
import functools
import math

import jax
import jax.numpy as jnp
import numpy as np
from jax import lax
from jax.experimental import pallas as pl
from jax.experimental.pallas import tpu as pltpu


def _pair(v):
    return (v, v) if isinstance(v, int) else tuple(v)


def _round_up(a, b):
    return ((a + b - 1) // b) * b


def _vmem_capacity_bytes():
    # Generation-aware VMEM capacity (v5e/v6e: 128 MiB, v7x: 64 MiB per TC).
    try:
        info = pltpu.get_tpu_info()
        cap = getattr(info, "vmem_capacity_bytes", None)
        if cap:
            return int(cap)
    except Exception:
        pass
    return 64 * 1024 * 1024  # conservative default = v7x per-TensorCore VMEM


def _kernel2_tiling(P, HW, K, Cin, Cout, vmem_cap):
    """Pick the lane-dense P tile (TP), tap-loop unroll factor and vmem limit.

    Truthful per-grid-step VMEM model (review fix):
      fixed : z scratch [K*Cout, HW] + double-buffered x tile [Cin, HW] + weights
      perTP : (3 + unroll) live [HW, TP] f32 transients of the one-hot build
              + hw_row [HW, TP] i32 + double-buffered offs/base/out tiles + msig
    """
    big = vmem_cap >= 96 * 1024 * 1024          # v5e / v6e class (128 MiB VMEM)
    unroll = 3 if big else 1                    # overlap VALU one-hot with MXU
    tp_cap = 2048 if big else 512
    budget = int(vmem_cap * (0.45 if big else 0.35))
    fixed = 4 * (K * Cout * HW                  # z scratch (persists across p)
                 + 2 * Cin * HW                 # double-buffered x tile
                 + 2 * K * Cout * Cin           # double-buffered weights
                 + 4 * Cout)                    # bias
    live_hwtp = 4 + unroll                      # onehot + cmp + where tmp + iota (+unrolled)
    per_tp = 4 * (live_hwtp * HW                # [HW, TP]-shaped transients
                  + 2 * 3 * K                   # double-buffered offs tile
                  + 2 * 2 * K                   # double-buffered base_y/base_x tiles
                  + K                           # msig scratch
                  + 2 * Cout                    # double-buffered out tile
                  + 2 * Cout)                   # accumulator + store temp
    avail = max(budget - fixed, 128 * per_tp)
    tp = (avail // per_tp) // 128 * 128
    tp = int(max(128, min(tp, tp_cap, _round_up(P, 128))))
    vmem_limit = int(min(vmem_cap - 8 * 1024 * 1024, 100 * 1024 * 1024))
    return tp, unroll, vmem_limit


def _kernel1_tiling(Hout, Wout, KH, sh, Cin, K, Wp, vmem_cap):
    """Row tile (TH output rows / grid step) for the offset/mask conv."""
    # Lane-dense output: TH*Wout is kept a multiple of 128 (TH is a multiple of
    # th_unit = lcm(8, 128/gcd(Wout,128))); TH multiple of 8 also satisfies the
    # sublane constraint of the input row blocks.
    lane_unit = 128 // math.gcd(Wout, 128)
    th_unit = max(8, lane_unit)
    halo = max(0, KH - sh)
    budget = int(vmem_cap * 0.25)
    # per output row: double-buffered main + halo input blocks, the concat copy,
    # the [K*Cin, TH*Wout] im2col patch and the double-buffered output tile.
    per_row = 4 * (2 * 2 * Cin * sh * Wp + Cin * sh * Wp
                   + K * Cin * Wout + 2 * 3 * K * Wout)
    th = max(th_unit, (budget // max(per_row, 1)) // th_unit * th_unit)
    th = min(th, 512, _round_up(Hout, th_unit))
    while th * sh < halo:       # defensive: halo rows must fit in next block
        th += th_unit
    return int(th), halo


# -----------------------------------------------------------------------------
# Pallas kernel #1: conv_offset_mask (plain conv2d), grid over (batch, row tile)
# -----------------------------------------------------------------------------
def _offset_mask_conv_kernel(*refs, TH, Wout, KH, KW, sh, sw, halo):
    # refs (halo>0):  xa [Cin, TH*sh, Wp]   main input row block
    #                 xb [Cin, RH,    Wp]   next rows (halo for the conv window)
    #                 w  [3K, K*Cin]        im2col weights, channels pre-permuted
    #                 b  [3K, 1]
    #                 out[3K, TH*Wout]      lane-dense flat output tile
    if halo > 0:
        xa_ref, xb_ref, w_ref, b_ref, out_ref = refs
    else:
        xa_ref, w_ref, b_ref, out_ref = refs
    Cin = xa_ref.shape[0]
    xa = xa_ref[...]
    if halo > 0:
        xwin = jnp.concatenate([xa, xb_ref[:, 0:halo, :]], axis=1)
    else:
        xwin = xa                                   # [Cin, (TH-1)*sh + KH, Wp]
    cols = []
    for kh in range(KH):
        for kw in range(KW):
            xs = lax.slice(
                xwin,
                (0, kh, kw),
                (Cin, kh + (TH - 1) * sh + 1, kw + (Wout - 1) * sw + 1),
                (1, sh, sw))                        # [Cin, TH, Wout]
            cols.append(xs.reshape(Cin, TH * Wout))
    patch = jnp.concatenate(cols, axis=0)           # [K*Cin, TH*Wout]
    out_ref[...] = (jnp.dot(w_ref[...], patch, preferred_element_type=jnp.float32)
                    + b_ref[...])


# -----------------------------------------------------------------------------
# Pallas kernel #2: modulated deformable conv, grid over (batch, P-tiles)
# -----------------------------------------------------------------------------
def _deform_conv_kernel(x_ref, offs_ref, basey_ref, basex_ref, wall_ref, b_ref,
                        out_ref, z_ref, msig_ref, *, K, Cout, H, W, unroll):
    # x_ref:     [Cin, HW]       input features for this batch, spatially flat
    # offs_ref:  [3K, TP]        rows [0:K]=dy, [K:2K]=dx, [2K:3K]=mask logits
    # basey/x:   [K, TP]         static sampling grid for this P tile
    # wall_ref:  [K*Cout, Cin]   deform-conv weights, tap-major
    # b_ref:     [Cout, 1]
    # out_ref:   [Cout, TP]
    # z_ref:     [K*Cout, HW]    scratch: weights folded into features (per image)
    # msig_ref:  [K, TP]         scratch: hoisted sigmoid of modulation logits
    HW = H * W
    TP = out_ref.shape[-1]

    # z = W_all @ x depends only on the image, not on the P tile: compute it on
    # the first ("arbitrary") p step and carry the scratch across p tiles.
    @pl.when(pl.program_id(1) == 0)
    def _():
        z_ref[...] = jnp.dot(wall_ref[...], x_ref[...],
                             preferred_element_type=jnp.float32)

    # Hoisted sigmoid over all K modulation rows (one EUP pass per tile).
    msig_ref[...] = jax.nn.sigmoid(offs_ref[2 * K:3 * K, :])
    # Flat-index iota, hoisted once per tile (regenerate inside tap() instead if
    # holding it across the K loop ever shows up as spill pressure).
    hw_row = lax.broadcasted_iota(jnp.int32, (HW, TP), 0)

    def tap(k, acc):
        dy = offs_ref[pl.ds(k, 1), :]                         # [1, TP]
        dx = offs_ref[pl.ds(K + k, 1), :]
        m = msig_ref[pl.ds(k, 1), :]
        py = basey_ref[pl.ds(k, 1), :] + dy
        px = basex_ref[pl.ds(k, 1), :] + dx
        y0 = jnp.floor(py)
        x0 = jnp.floor(px)
        ly = py - y0
        lx = px - x0
        y0i = y0.astype(jnp.int32)
        x0i = x0.astype(jnp.int32)
        # Fully-outside samples contribute 0; each corner must land in-image.
        valid = (py > -1.0) & (py < float(H)) & (px > -1.0) & (px < float(W))
        ok_y0 = valid & (y0i >= 0) & (y0i < H)
        ok_y1 = valid & (y0i + 1 >= 0) & (y0i + 1 < H)
        ok_x0 = (x0i >= 0) & (x0i < W)
        ok_x1 = (x0i + 1 >= 0) & (x0i + 1 < W)
        zero = jnp.zeros_like(py)
        # validity + modulation folded into the bilinear corner weights ([1,TP])
        w00 = jnp.where(ok_y0 & ok_x0, (1.0 - ly) * (1.0 - lx) * m, zero)
        w01 = jnp.where(ok_y0 & ok_x1, (1.0 - ly) * lx * m, zero)
        w10 = jnp.where(ok_y1 & ok_x0, ly * (1.0 - lx) * m, zero)
        w11 = jnp.where(ok_y1 & ok_x1, ly * lx * m, zero)
        # One-hot bilinear gather built by comparing the flat-index iota against
        # the four broadcast [1, TP] corner indices: no [HW, TP] int delta is
        # materialized.  CAUTION: idx+1 / idx+W alias across row / image
        # boundaries; this is only safe because ok_* zero those corner weights.
        idx = y0i * W + x0i                                   # [1, TP] int32
        onehot = jnp.where(hw_row == idx, w00, 0.0)
        onehot = onehot + jnp.where(hw_row == idx + 1, w01, 0.0)
        onehot = onehot + jnp.where(hw_row == idx + W, w10, 0.0)
        onehot = onehot + jnp.where(hw_row == idx + (W + 1), w11, 0.0)
        start = k * Cout
        if Cout % 8 == 0:
            start = pl.multiple_of(start, 8)
        zk = z_ref[pl.ds(start, Cout), :]                     # [Cout, HW]
        # bilinear sample of the weight-folded features: [Cout,HW] @ [HW,TP]
        return acc + jnp.dot(zk, onehot, preferred_element_type=jnp.float32)

    # TODO(synk): if Cout >> Cin, restructure to gather x per tap and do one
    #   final [Cout, K*Cin] @ [K*Cin, TP] matmul for better MXU fill.
    init = jnp.zeros((Cout, TP), jnp.float32)
    if unroll > 1:
        # Partial unroll: the VALU one-hot build of tap k+1 overlaps the MXU
        # gather-matmul of tap k (extra live one-hots are accounted for in the
        # VMEM budget model).
        acc = lax.fori_loop(0, K, tap, init, unroll=unroll)
    else:
        acc = lax.fori_loop(0, K, tap, init)
    out_ref[...] = acc + b_ref[...]


# -----------------------------------------------------------------------------
# Parameter init (deterministic, shapes from the PyTorch module __init__)
# -----------------------------------------------------------------------------
def init_dcn_params(key, in_channels, out_channels, kernel_size):
    KH, KW = _pair(kernel_size)
    K = KH * KW
    k1, k2, k3, k4 = jax.random.split(key, 4)
    return dict(
        weight=0.1 * jax.random.normal(k1, (out_channels, in_channels, KH, KW), jnp.float32),
        bias=0.1 * jax.random.normal(k2, (out_channels,), jnp.float32),
        # NOTE(synk): the PyTorch module's init_offset() zeroes these two; small
        # random values are used so the deformable sampling path is exercised.
        w_off=0.05 * jax.random.normal(k3, (3 * K, in_channels, KH, KW), jnp.float32),
        b_off=0.05 * jax.random.normal(k4, (3 * K,), jnp.float32),
    )


# -----------------------------------------------------------------------------
# Forward wrapper
# -----------------------------------------------------------------------------
def dcn_forward(params, inp, *, kernel_size, stride, padding, extra_offset_mask=False):
    if extra_offset_mask:
        x, x_off_src = inp[0], inp[1]
    else:
        x = x_off_src = inp

    KH, KW = _pair(kernel_size)
    sh, sw = _pair(stride)
    ph, pw = _pair(padding)
    dh = dw = 1  # forward() never passes dilation to either conv
    B, Cin, H, W = x.shape
    Cout = params["weight"].shape[0]
    K = KH * KW
    C3 = 3 * K
    Hout = (H + 2 * ph - dh * (KH - 1) - 1) // sh + 1
    Wout = (W + 2 * pw - dw * (KW - 1) - 1) // sw + 1
    P = Hout * Wout
    HW = H * W
    Hp, Wp = H + 2 * ph, W + 2 * pw

    vmem_cap = _vmem_capacity_bytes()
    TP, unroll, vmem_limit = _kernel2_tiling(P, HW, K, Cin, Cout, vmem_cap)
    Pp = _round_up(P, TP)
    n_p = Pp // TP

    # ---- kernel #1: offset/mask conv, grid over (batch, output-row tiles) ----
    TH, halo = _kernel1_tiling(Hout, Wout, KH, sh, Cin, K, Wp, vmem_cap)
    n_rt = -(-Hout // TH)
    Hout_pad = n_rt * TH
    # Pad the input rows so (a) the extra Hout_pad-Hout output rows have source
    # rows and (b) the halo block of the last row tile is fully in-bounds.
    Hp_ext = _round_up(max(Hp, (n_rt + 1) * TH * sh), TH * sh)

    # De-interleave the conv_offset output channels at trace time so the kernel
    # directly emits [dy(K), dx(K), mask_logits(K)] channel blocks.
    perm = np.concatenate([2 * np.arange(K), 2 * np.arange(K) + 1, 2 * K + np.arange(K)])
    w_perm = params["w_off"][perm].astype(jnp.float32)          # [3K, Cin, KH, KW]
    b_perm = params["b_off"][perm].reshape(C3, 1).astype(jnp.float32)
    w_mat = jnp.transpose(w_perm, (0, 2, 3, 1)).reshape(C3, K * Cin)

    xpad = jnp.pad(x_off_src.astype(jnp.float32),
                   ((0, 0), (0, 0), (ph, ph + Hp_ext - Hp), (pw, pw)))

    # Halo block: only round_up(halo, 8) rows of the next row block (re-fetching
    # the whole next block would double the input traffic for no reason).
    in_specs1 = [pl.BlockSpec((None, Cin, TH * sh, Wp), lambda b, r: (b, 0, r, 0))]
    args1 = [xpad]
    if halo > 0:
        RH = min(TH * sh, _round_up(halo, 8))
        if (TH * sh) % RH != 0:
            RH = TH * sh
        step_blocks = (TH * sh) // RH
        in_specs1.append(
            pl.BlockSpec((None, Cin, RH, Wp),
                         lambda b, r: (b, 0, (r + 1) * step_blocks, 0)))
        args1.append(xpad)
    in_specs1 += [pl.BlockSpec((C3, K * Cin), lambda b, r: (0, 0)),
                  pl.BlockSpec((C3, 1), lambda b, r: (0, 0))]
    args1 += [w_mat, b_perm]

    offs_rows = pl.pallas_call(
        functools.partial(_offset_mask_conv_kernel, TH=TH, Wout=Wout,
                          KH=KH, KW=KW, sh=sh, sw=sw, halo=halo),
        out_shape=jax.ShapeDtypeStruct((B, C3, Hout_pad * Wout), jnp.float32),
        grid=(B, n_rt),
        in_specs=in_specs1,
        out_specs=pl.BlockSpec((None, C3, TH * Wout), lambda b, r: (b, 0, r)),
        compiler_params=pltpu.CompilerParams(
            dimension_semantics=("parallel", "parallel"),
            vmem_limit_bytes=vmem_limit),
    )(*args1)

    # Layout plumbing (tiny, 3K channels): row-tiled output -> flat [B,C3,Pp]
    # expected by kernel #2.
    offs = offs_rows.reshape(B, C3, Hout_pad, Wout)[:, :, :Hout, :].reshape(B, C3, P)
    if Pp > P:
        offs = jnp.pad(offs, ((0, 0), (0, 0), (0, Pp - P)))

    # ---- kernel #2: modulated deformable conv ------------------------------
    # static sampling grid, padded to Pp with far out-of-bounds points
    oy, ox = np.meshgrid(np.arange(Hout), np.arange(Wout), indexing="ij")
    ky, kx = np.meshgrid(np.arange(KH), np.arange(KW), indexing="ij")
    base_y = np.full((K, Pp), -1.0e4, np.float32)
    base_x = np.full((K, Pp), -1.0e4, np.float32)
    base_y[:, :P] = oy.reshape(1, P) * sh - ph + ky.reshape(K, 1) * dh
    base_x[:, :P] = ox.reshape(1, P) * sw - pw + kx.reshape(K, 1) * dw

    xT = x.astype(jnp.float32).reshape(B, Cin, HW)
    # W_all[k*Cout + co, ci] = weight[co, ci, kh, kw] with k = kh*KW + kw
    wall = jnp.transpose(params["weight"].astype(jnp.float32),
                         (2, 3, 0, 1)).reshape(K * Cout, Cin)
    b2d = params["bias"].reshape(Cout, 1).astype(jnp.float32)

    out = pl.pallas_call(
        functools.partial(_deform_conv_kernel, K=K, Cout=Cout, H=H, W=W,
                          unroll=unroll),
        out_shape=jax.ShapeDtypeStruct((B, Cout, Pp), jnp.float32),
        grid=(B, n_p),
        in_specs=[
            pl.BlockSpec((None, Cin, HW), lambda b, p: (b, 0, 0)),
            pl.BlockSpec((None, C3, TP), lambda b, p: (b, 0, p)),
            pl.BlockSpec((K, TP), lambda b, p: (0, p)),
            pl.BlockSpec((K, TP), lambda b, p: (0, p)),
            pl.BlockSpec((K * Cout, Cin), lambda b, p: (0, 0)),
            pl.BlockSpec((Cout, 1), lambda b, p: (0, 0)),
        ],
        out_specs=pl.BlockSpec((None, Cout, TP), lambda b, p: (b, 0, p)),
        scratch_shapes=[pltpu.VMEM((K * Cout, HW), jnp.float32),
                        pltpu.VMEM((K, TP), jnp.float32)],
        compiler_params=pltpu.CompilerParams(
            # p-axis is "arbitrary": z scratch is carried across P tiles.
            dimension_semantics=("parallel", "arbitrary"),
            vmem_limit_bytes=vmem_limit),
    )(xT, offs, jnp.asarray(base_y), jnp.asarray(base_x), wall, b2d)

    return out[:, :, :P].reshape(B, Cout, Hout, Wout)


# -----------------------------------------------------------------------------
# Pure-JAX reference (mirrors torchvision.ops.deform_conv2d) for a sanity check
# -----------------------------------------------------------------------------
def _deform_conv2d_ref(x, offset, mask, weight, bias, stride, padding):
    B, Cin, H, W = x.shape
    Cout, _, KH, KW = weight.shape
    sh, sw = stride
    ph, pw = padding
    K = KH * KW
    Hout, Wout = offset.shape[2], offset.shape[3]
    P = Hout * Wout
    dy = offset[:, 0:2 * K:2].reshape(B, K, P)
    dx = offset[:, 1:2 * K:2].reshape(B, K, P)
    m = mask.reshape(B, K, P)

    oy, ox = np.meshgrid(np.arange(Hout), np.arange(Wout), indexing="ij")
    ky, kx = np.meshgrid(np.arange(KH), np.arange(KW), indexing="ij")
    base_y = jnp.asarray((oy.reshape(1, P) * sh - ph + ky.reshape(K, 1)).astype(np.float32))
    base_x = jnp.asarray((ox.reshape(1, P) * sw - pw + kx.reshape(K, 1)).astype(np.float32))
    py = base_y[None] + dy
    px = base_x[None] + dx
    valid = (py > -1.0) & (py < H) & (px > -1.0) & (px < W)
    y0 = jnp.floor(py); x0 = jnp.floor(px)
    ly = py - y0; lx = px - x0
    y0i = y0.astype(jnp.int32); x0i = x0.astype(jnp.int32)
    x_flat = x.reshape(B, Cin, H * W)

    def corner(yi, xi, wgt):
        ok = valid & (yi >= 0) & (yi < H) & (xi >= 0) & (xi < W)
        flat = jnp.clip(yi * W + xi, 0, H * W - 1)
        vals = jax.vmap(lambda xf, ix: xf[:, ix])(x_flat, flat.reshape(B, K * P))
        vals = vals.reshape(B, Cin, K, P)
        return vals * (wgt * ok.astype(jnp.float32))[:, None]

    sampled = (corner(y0i, x0i, (1 - ly) * (1 - lx))
               + corner(y0i, x0i + 1, (1 - ly) * lx)
               + corner(y0i + 1, x0i, ly * (1 - lx))
               + corner(y0i + 1, x0i + 1, ly * lx))
    modulated = sampled * m[:, None]
    w_r = weight.reshape(Cout, Cin, K)
    out = jnp.einsum("bckp,ock->bop", modulated, w_r) + bias[None, :, None]
    return out.reshape(B, Cout, Hout, Wout)


def dcn_forward_ref(params, x, *, kernel_size, stride, padding):
    KH, KW = _pair(kernel_size)
    sh, sw = _pair(stride)
    ph, pw = _pair(padding)
    K = KH * KW
    off_out = lax.conv_general_dilated(
        x.astype(jnp.float32), params["w_off"],
        window_strides=(sh, sw), padding=((ph, ph), (pw, pw)),
        dimension_numbers=("NCHW", "OIHW", "NCHW"),
    ) + params["b_off"].reshape(1, -1, 1, 1)
    offset = off_out[:, :2 * K]
    mask = jax.nn.sigmoid(off_out[:, 2 * K:])
    return _deform_conv2d_ref(x, offset, mask, params["weight"], params["bias"],
                              (sh, sw), (ph, pw))


if __name__ == "__main__":
    B, Cin, Cout, H, W = 2, 4, 8, 16, 16
    ksize, stride, padding = 3, 1, 1

    key = jax.random.PRNGKey(0)
    pkey, xkey = jax.random.split(key)
    params = init_dcn_params(pkey, Cin, Cout, ksize)
    x = jax.random.normal(xkey, (B, Cin, H, W), jnp.float32)

    fwd = jax.jit(functools.partial(dcn_forward, kernel_size=ksize,
                                    stride=stride, padding=padding))
    out = jax.block_until_ready(fwd(params, x))

    ref = jax.block_until_ready(
        dcn_forward_ref(params, x, kernel_size=ksize, stride=stride, padding=padding))

    assert out.shape == (B, Cout, H, W), out.shape
    if not np.allclose(np.asarray(out), np.asarray(ref), atol=1e-4, rtol=1e-4):
        max_err = float(np.max(np.abs(np.asarray(out) - np.asarray(ref))))
        raise AssertionError(f"mismatch vs reference, max abs err = {max_err}")
    print("KERNEL_OK")
</pallas_src>

<mosaic_0001>
module attributes {stable_mosaic.version = 11 : i64} {
  func.func @_offset_mask_conv_kernel(%arg0: i32, %arg1: i32, %arg2: memref<1x4x16x18xf32, #tpu.memory_space<vmem>>, %arg3: memref<1x4x8x18xf32, #tpu.memory_space<vmem>>, %arg4: memref<27x36xf32, #tpu.memory_space<vmem>>, %arg5: memref<27x1xf32, #tpu.memory_space<vmem>>, %arg6: memref<1x27x256xf32, #tpu.memory_space<vmem>>) attributes {dimension_semantics = [#tpu.dimension_semantics<parallel>, #tpu.dimension_semantics<parallel>], iteration_bounds = array<i64: 2, 1>, scalar_prefetch = 0 : i64, scratch_operands = 0 : i64, tpu.core_type = #tpu.core_type<tc>, window_params = [{transform_indices = @transform_0, window_bounds = array<i64: 1, 4, 16, 18>}, {transform_indices = @transform_1, window_bounds = array<i64: 1, 4, 8, 18>}, {pipeline_mode = #tpu.pipeline_mode<synchronous>, transform_indices = @transform_2, window_bounds = array<i64: 27, 36>}, {pipeline_mode = #tpu.pipeline_mode<synchronous>, transform_indices = @transform_3, window_bounds = array<i64: 27, 1>}, {transform_indices = @transform_4, window_bounds = array<i64: 1, 27, 256>}]} {
    %c0 = arith.constant 0 : index
    %c0_0 = arith.constant 0 : index
    %c0_1 = arith.constant 0 : index
    %c0_2 = arith.constant 0 : index
    %0 = vector.load %arg2[%c0, %c0_0, %c0_1, %c0_2] : memref<1x4x16x18xf32, #tpu.memory_space<vmem>>, vector<1x4x16x18xf32>
    %1 = vector.shape_cast %0 : vector<1x4x16x18xf32> to vector<4x16x18xf32>
    %c0_3 = arith.constant 0 : index
    %c0_4 = arith.constant 0 : index
    %c0_5 = arith.constant 0 : index
    %c0_6 = arith.constant 0 : index
    %2 = vector.load %arg3[%c0_3, %c0_4, %c0_5, %c0_6] : memref<1x4x8x18xf32, #tpu.memory_space<vmem>>, vector<1x4x2x18xf32>
    %3 = vector.shape_cast %2 : vector<1x4x2x18xf32> to vector<4x2x18xf32>
    %4 = tpu.concatenate %1, %3 in 1 : vector<4x16x18xf32>, vector<4x2x18xf32> -> vector<4x18x18xf32>
    %5 = vector.extract_strided_slice %4 {offsets = [0, 0, 0], sizes = [4, 16, 16], strides = [1, 1, 1]} : vector<4x18x18xf32> to vector<4x16x16xf32>
    %6 = vector.shape_cast %5 : vector<4x16x16xf32> to vector<4x256xf32>
    %7 = vector.extract_strided_slice %4 {offsets = [0, 0, 1], sizes = [4, 16, 16], strides = [1, 1, 1]} : vector<4x18x18xf32> to vector<4x16x16xf32>
    %8 = vector.shape_cast %7 : vector<4x16x16xf32> to vector<4x256xf32>
    %9 = vector.extract_strided_slice %4 {offsets = [0, 0, 2], sizes = [4, 16, 16], strides = [1, 1, 1]} : vector<4x18x18xf32> to vector<4x16x16xf32>
    %10 = vector.shape_cast %9 : vector<4x16x16xf32> to vector<4x256xf32>
    %11 = vector.extract_strided_slice %4 {offsets = [0, 1, 0], sizes = [4, 16, 16], strides = [1, 1, 1]} : vector<4x18x18xf32> to vector<4x16x16xf32>
    %12 = vector.shape_cast %11 : vector<4x16x16xf32> to vector<4x256xf32>
    %13 = vector.extract_strided_slice %4 {offsets = [0, 1, 1], sizes = [4, 16, 16], strides = [1, 1, 1]} : vector<4x18x18xf32> to vector<4x16x16xf32>
    %14 = vector.shape_cast %13 : vector<4x16x16xf32> to vector<4x256xf32>
    %15 = vector.extract_strided_slice %4 {offsets = [0, 1, 2], sizes = [4, 16, 16], strides = [1, 1, 1]} : vector<4x18x18xf32> to vector<4x16x16xf32>
    %16 = vector.shape_cast %15 : vector<4x16x16xf32> to vector<4x256xf32>
    %17 = vector.extract_strided_slice %4 {offsets = [0, 2, 0], sizes = [4, 16, 16], strides = [1, 1, 1]} : vector<4x18x18xf32> to vector<4x16x16xf32>
    %18 = vector.shape_cast %17 : vector<4x16x16xf32> to vector<4x256xf32>
    %19 = vector.extract_strided_slice %4 {offsets = [0, 2, 1], sizes = [4, 16, 16], strides = [1, 1, 1]} : vector<4x18x18xf32> to vector<4x16x16xf32>
    %20 = vector.shape_cast %19 : vector<4x16x16xf32> to vector<4x256xf32>
    %21 = vector.extract_strided_slice %4 {offsets = [0, 2, 2], sizes = [4, 16, 16], strides = [1, 1, 1]} : vector<4x18x18xf32> to vector<4x16x16xf32>
    %22 = vector.shape_cast %21 : vector<4x16x16xf32> to vector<4x256xf32>
    %23 = tpu.concatenate %6, %8, %10, %12, %14, %16, %18, %20, %22 in 0 : vector<4x256xf32>, vector<4x256xf32>, vector<4x256xf32>, vector<4x256xf32>, vector<4x256xf32>, vector<4x256xf32>, vector<4x256xf32>, vector<4x256xf32>, vector<4x256xf32> -> vector<36x256xf32>
    %c0_7 = arith.constant 0 : index
    %c0_8 = arith.constant 0 : index
    %24 = vector.load %arg4[%c0_7, %c0_8] : memref<27x36xf32, #tpu.memory_space<vmem>>, vector<27x36xf32>
    %cst = arith.constant dense<0.000000e+00> : vector<27x256xf32>
    %25 = tpu.matmul %24, %23, %cst {dimension_numbers = #tpu.dot_dimension_numbers<[1], [0], [0], [1], [0, 0, 1, 1], [], []>} : vector<27x36xf32>, vector<36x256xf32>, vector<27x256xf32> -> vector<27x256xf32>
    %c0_9 = arith.constant 0 : index
    %c0_10 = arith.constant 0 : index
    %26 = vector.load %arg5[%c0_9, %c0_10] : memref<27x1xf32, #tpu.memory_space<vmem>>, vector<27x1xf32>
    %27 = vector.broadcast %26 : vector<27x1xf32> to vector<27x256xf32>
    %28 = arith.addf %25, %27 : vector<27x256xf32>
    %c0_11 = arith.constant 0 : index
    %c0_12 = arith.constant 0 : index
    %c0_13 = arith.constant 0 : index
    %29 = vector.load %arg6[%c0_11, %c0_12, %c0_13] : memref<1x27x256xf32, #tpu.memory_space<vmem>>, vector<1x27x256xf32>
    %30 = vector.shape_cast %29 : vector<1x27x256xf32> to vector<27x256xf32>
    %31 = vector.shape_cast %28 : vector<27x256xf32> to vector<1x27x256xf32>
    tpu.vector_store %arg6[%c0_11, %c0_12, %c0_13], %31 {strides = array<i32>} : memref<1x27x256xf32, #tpu.memory_space<vmem>>, vector<1x27x256xf32>,
    return
  }
  func.func @transform_0(%arg0: i32, %arg1: i32) -> (i32, i32, i32, i32) {
    %c0_i32 = arith.constant 0 : i32
    %c0_i32_0 = arith.constant 0 : i32
    %c0_i32_1 = arith.constant 0 : i32
    return %arg0, %c0_i32, %arg1, %c0_i32_0 : i32, i32, i32, i32
  }
  func.func @transform_1(%arg0: i32, %arg1: i32) -> (i32, i32, i32, i32) {
    %c1_i32 = arith.constant 1 : i32
    %0 = arith.addi %arg1, %c1_i32 : i32
    %c2_i32 = arith.constant 2 : i32
    %1 = arith.muli %0, %c2_i32 : i32
    %c0_i32 = arith.constant 0 : i32
    %c0_i32_0 = arith.constant 0 : i32
    %c0_i32_1 = arith.constant 0 : i32
    return %arg0, %c0_i32, %1, %c0_i32_0 : i32, i32, i32, i32
  }
  func.func @transform_2(%arg0: i32, %arg1: i32) -> (i32, i32) {
    %c0_i32 = arith.constant 0 : i32
    %c0_i32_0 = arith.constant 0 : i32
    %c0_i32_1 = arith.constant 0 : i32
    return %c0_i32, %c0_i32_0 : i32, i32
  }
  func.func @transform_3(%arg0: i32, %arg1: i32) -> (i32, i32) {
    %c0_i32 = arith.constant 0 : i32
    %c0_i32_0 = arith.constant 0 : i32
    %c0_i32_1 = arith.constant 0 : i32
    return %c0_i32, %c0_i32_0 : i32, i32
  }
  func.func @transform_4(%arg0: i32, %arg1: i32) -> (i32, i32, i32) {
    %c0_i32 = arith.constant 0 : i32
    %c0_i32_0 = arith.constant 0 : i32
    return %arg0, %c0_i32, %arg1 : i32, i32, i32
  }
}

module attributes {stable_mosaic.version = 11 : i64} {
  func.func @_deform_conv_kernel(%arg0: i32, %arg1: i32, %arg2: memref<1x4x256xf32, #tpu.memory_space<vmem>>, %arg3: memref<1x27x256xf32, #tpu.memory_space<vmem>>, %arg4: memref<9x256xf32, #tpu.memory_space<vmem>>, %arg5: memref<9x256xf32, #tpu.memory_space<vmem>>, %arg6: memref<72x4xf32, #tpu.memory_space<vmem>>, %arg7: memref<8x1xf32, #tpu.memory_space<vmem>>, %arg8: memref<1x8x256xf32, #tpu.memory_space<vmem>>, %arg9: memref<72x256xf32, #tpu.memory_space<vmem>>, %arg10: memref<9x256xf32, #tpu.memory_space<vmem>>) attributes {dimension_semantics = [#tpu.dimension_semantics<parallel>, #tpu.dimension_semantics<arbitrary>], iteration_bounds = array<i64: 2, 1>, scalar_prefetch = 0 : i64, scratch_operands = 2 : i64, tpu.core_type = #tpu.core_type<tc>, window_params = [{transform_indices = @transform_0, window_bounds = array<i64: 1, 4, 256>}, {transform_indices = @transform_1, window_bounds = array<i64: 1, 27, 256>}, {transform_indices = @transform_2, window_bounds = array<i64: 9, 256>}, {transform_indices = @transform_3, window_bounds = array<i64: 9, 256>}, {pipeline_mode = #tpu.pipeline_mode<synchronous>, transform_indices = @transform_4, window_bounds = array<i64: 72, 4>}, {pipeline_mode = #tpu.pipeline_mode<synchronous>, transform_indices = @transform_5, window_bounds = array<i64: 8, 1>}, {transform_indices = @transform_6, window_bounds = array<i64: 1, 8, 256>}]} {
    %c0_i32 = arith.constant 0 : i32
    %0 = arith.cmpi eq, %arg1, %c0_i32 : i32
    %1 = arith.extui %0 : i1 to i32
    %c0_i32_0 = arith.constant 0 : i32
    %2 = arith.cmpi ne, %1, %c0_i32_0 : i32
    scf.if %2 {
      %c0_12 = arith.constant 0 : index
      %c0_13 = arith.constant 0 : index
      %21 = vector.load %arg6[%c0_12, %c0_13] : memref<72x4xf32, #tpu.memory_space<vmem>>, vector<72x4xf32>
      %c0_14 = arith.constant 0 : index
      %c0_15 = arith.constant 0 : index
      %c0_16 = arith.constant 0 : index
      %22 = vector.load %arg2[%c0_14, %c0_15, %c0_16] : memref<1x4x256xf32, #tpu.memory_space<vmem>>, vector<1x4x256xf32>
      %23 = vector.shape_cast %22 : vector<1x4x256xf32> to vector<4x256xf32>
      %cst_17 = arith.constant dense<0.000000e+00> : vector<72x256xf32>
      %24 = tpu.matmul %21, %23, %cst_17 {dimension_numbers = #tpu.dot_dimension_numbers<[1], [0], [0], [1], [0, 0, 1, 1], [], []>} : vector<72x4xf32>, vector<4x256xf32>, vector<72x256xf32> -> vector<72x256xf32>
      %c0_18 = arith.constant 0 : index
      %c0_19 = arith.constant 0 : index
      %25 = vector.load %arg9[%c0_18, %c0_19] : memref<72x256xf32, #tpu.memory_space<vmem>>, vector<72x256xf32>
      tpu.vector_store %arg9[%c0_18, %c0_19], %24 {strides = array<i32>} : memref<72x256xf32, #tpu.memory_space<vmem>>, vector<72x256xf32>,
    } else {
    }
    %c0 = arith.constant 0 : index
    %c18 = arith.constant 18 : index
    %c0_1 = arith.constant 0 : index
    %3 = vector.load %arg3[%c0, %c18, %c0_1] : memref<1x27x256xf32, #tpu.memory_space<vmem>>, vector<1x9x256xf32>
    %4 = vector.shape_cast %3 : vector<1x9x256xf32> to vector<9x256xf32>
    %5 = arith.negf %4 : vector<9x256xf32>
    %6 = math.exp %5 : vector<9x256xf32>
    %cst = arith.constant 1.000000e+00 : f32
    %7 = vector.broadcast %cst : f32 to vector<9x256xf32>
    %8 = arith.addf %7, %6 : vector<9x256xf32>
    %9 = arith.divf %7, %8 : vector<9x256xf32>
    %c0_2 = arith.constant 0 : index
    %c0_3 = arith.constant 0 : index
    %10 = vector.load %arg10[%c0_2, %c0_3] : memref<9x256xf32, #tpu.memory_space<vmem>>, vector<9x256xf32>
    tpu.vector_store %arg10[%c0_2, %c0_3], %9 {strides = array<i32>} : memref<9x256xf32, #tpu.memory_space<vmem>>, vector<9x256xf32>,
    %11 = tpu.iota {dimensions = array<i32: 0>} : vector<256x256xi32>
    %cst_4 = arith.constant 0.000000e+00 : f32
    %12 = vector.broadcast %cst_4 : f32 to vector<8x256xf32>
    %c0_i32_5 = arith.constant 0 : i32
    %c9_i32 = arith.constant 9 : i32
    %13 = arith.addi %c0_i32_5, %c9_i32 : i32
    %c1_i32 = arith.constant 1 : i32
    %14 = scf.for %arg11 = %c0_i32_5 to %13 step %c1_i32 iter_args(%arg12 = %12) -> (vector<8x256xf32>)  : i32 {
      %c0_12 = arith.constant 0 : index
      %21 = arith.index_cast %arg11 : i32 to index
      %c0_13 = arith.constant 0 : index
      %22 = vector.load %arg3[%c0_12, %21, %c0_13] : memref<1x27x256xf32, #tpu.memory_space<vmem>>, vector<1x1x256xf32>
      %23 = vector.shape_cast %22 : vector<1x1x256xf32> to vector<1x256xf32>
      %c9_i32_14 = arith.constant 9 : i32
      %24 = arith.addi %c9_i32_14, %arg11 : i32
      %c0_15 = arith.constant 0 : index
      %25 = arith.index_cast %24 : i32 to index
      %c0_16 = arith.constant 0 : index
      %26 = vector.load %arg3[%c0_15, %25, %c0_16] : memref<1x27x256xf32, #tpu.memory_space<vmem>>, vector<1x1x256xf32>
      %27 = vector.shape_cast %26 : vector<1x1x256xf32> to vector<1x256xf32>
      %28 = arith.index_cast %arg11 : i32 to index
      %c0_17 = arith.constant 0 : index
      %29 = vector.load %arg10[%28, %c0_17] : memref<9x256xf32, #tpu.memory_space<vmem>>, vector<1x256xf32>
      %30 = arith.index_cast %arg11 : i32 to index
      %c0_18 = arith.constant 0 : index
      %31 = vector.load %arg4[%30, %c0_18] : memref<9x256xf32, #tpu.memory_space<vmem>>, vector<1x256xf32>
      %32 = arith.addf %31, %23 : vector<1x256xf32>
      %33 = arith.index_cast %arg11 : i32 to index
      %c0_19 = arith.constant 0 : index
      %34 = vector.load %arg5[%33, %c0_19] : memref<9x256xf32, #tpu.memory_space<vmem>>, vector<1x256xf32>
      %35 = arith.addf %34, %27 : vector<1x256xf32>
      %36 = math.floor %32 : vector<1x256xf32>
      %37 = math.floor %35 : vector<1x256xf32>
      %38 = arith.subf %32, %36 : vector<1x256xf32>
      %39 = arith.subf %35, %37 : vector<1x256xf32>
      %40 = arith.fptosi %36 : vector<1x256xf32> to vector<1x256xi32>
      %41 = arith.fptosi %37 : vector<1x256xf32> to vector<1x256xi32>
      %cst_20 = arith.constant -1.000000e+00 : f32
      %42 = vector.broadcast %cst_20 : f32 to vector<1x256xf32>
      %43 = arith.cmpf ogt, %32, %42 : vector<1x256xf32>
      %cst_21 = arith.constant 1.600000e+01 : f32
      %44 = vector.broadcast %cst_21 : f32 to vector<1x256xf32>
      %45 = arith.cmpf olt, %32, %44 : vector<1x256xf32>
      %46 = arith.andi %43, %45 : vector<1x256xi1>
      %cst_22 = arith.constant -1.000000e+00 : f32
      %47 = vector.broadcast %cst_22 : f32 to vector<1x256xf32>
      %48 = arith.cmpf ogt, %35, %47 : vector<1x256xf32>
      %49 = arith.andi %46, %48 : vector<1x256xi1>
      %cst_23 = arith.constant 1.600000e+01 : f32
      %50 = vector.broadcast %cst_23 : f32 to vector<1x256xf32>
      %51 = arith.cmpf olt, %35, %50 : vector<1x256xf32>
      %52 = arith.andi %49, %51 : vector<1x256xi1>
      %c0_i32_24 = arith.constant 0 : i32
      %53 = vector.broadcast %c0_i32_24 : i32 to vector<1x256xi32>
      %54 = arith.cmpi sge, %40, %53 : vector<1x256xi32>
      %55 = arith.andi %52, %54 : vector<1x256xi1>
      %c16_i32 = arith.constant 16 : i32
      %56 = vector.broadcast %c16_i32 : i32 to vector<1x256xi32>
      %57 = arith.cmpi slt, %40, %56 : vector<1x256xi32>
      %58 = arith.andi %55, %57 : vector<1x256xi1>
      %c1_i32_25 = arith.constant 1 : i32
      %59 = vector.broadcast %c1_i32_25 : i32 to vector<1x256xi32>
      %60 = arith.addi %40, %59 : vector<1x256xi32>
      %c0_i32_26 = arith.constant 0 : i32
      %61 = vector.broadcast %c0_i32_26 : i32 to vector<1x256xi32>
      %62 = arith.cmpi sge, %60, %61 : vector<1x256xi32>
      %63 = arith.andi %52, %62 : vector<1x256xi1>
      %c1_i32_27 = arith.constant 1 : i32
      %64 = vector.broadcast %c1_i32_27 : i32 to vector<1x256xi32>
      %65 = arith.addi %40, %64 : vector<1x256xi32>
      %c16_i32_28 = arith.constant 16 : i32
      %66 = vector.broadcast %c16_i32_28 : i32 to vector<1x256xi32>
      %67 = arith.cmpi slt, %65, %66 : vector<1x256xi32>
      %68 = arith.andi %63, %67 : vector<1x256xi1>
      %c0_i32_29 = arith.constant 0 : i32
      %69 = vector.broadcast %c0_i32_29 : i32 to vector<1x256xi32>
      %70 = arith.cmpi sge, %41, %69 : vector<1x256xi32>
      %c16_i32_30 = arith.constant 16 : i32
      %71 = vector.broadcast %c16_i32_30 : i32 to vector<1x256xi32>
      %72 = arith.cmpi slt, %41, %71 : vector<1x256xi32>
      %73 = arith.andi %70, %72 : vector<1x256xi1>
      %c1_i32_31 = arith.constant 1 : i32
      %74 = vector.broadcast %c1_i32_31 : i32 to vector<1x256xi32>
      %75 = arith.addi %41, %74 : vector<1x256xi32>
      %c0_i32_32 = arith.constant 0 : i32
      %76 = vector.broadcast %c0_i32_32 : i32 to vector<1x256xi32>
      %77 = arith.cmpi sge, %75, %76 : vector<1x256xi32>
      %c1_i32_33 = arith.constant 1 : i32
      %78 = vector.broadcast %c1_i32_33 : i32 to vector<1x256xi32>
      %79 = arith.addi %41, %78 : vector<1x256xi32>
      %c16_i32_34 = arith.constant 16 : i32
      %80 = vector.broadcast %c16_i32_34 : i32 to vector<1x256xi32>
      %81 = arith.cmpi slt, %79, %80 : vector<1x256xi32>
      %82 = arith.andi %77, %81 : vector<1x256xi1>
      %cst_35 = arith.constant 0.000000e+00 : f32
      %83 = vector.broadcast %cst_35 : f32 to vector<1x256xf32>
      %84 = arith.andi %58, %73 : vector<1x256xi1>
      %cst_36 = arith.constant 1.000000e+00 : f32
      %85 = vector.broadcast %cst_36 : f32 to vector<1x256xf32>
      %86 = arith.subf %85, %38 : vector<1x256xf32>
      %cst_37 = arith.constant 1.000000e+00 : f32
      %87 = vector.broadcast %cst_37 : f32 to vector<1x256xf32>
      %88 = arith.subf %87, %39 : vector<1x256xf32>
      %89 = arith.mulf %86, %88 : vector<1x256xf32>
      %90 = arith.mulf %89, %29 : vector<1x256xf32>
      %91 = arith.select %84, %90, %83 : vector<1x256xi1>, vector<1x256xf32>
      %92 = arith.andi %58, %82 : vector<1x256xi1>
      %cst_38 = arith.constant 1.000000e+00 : f32
      %93 = vector.broadcast %cst_38 : f32 to vector<1x256xf32>
      %94 = arith.subf %93, %38 : vector<1x256xf32>
      %95 = arith.mulf %94, %39 : vector<1x256xf32>
      %96 = arith.mulf %95, %29 : vector<1x256xf32>
      %97 = arith.select %92, %96, %83 : vector<1x256xi1>, vector<1x256xf32>
      %98 = arith.andi %68, %73 : vector<1x256xi1>
      %cst_39 = arith.constant 1.000000e+00 : f32
      %99 = vector.broadcast %cst_39 : f32 to vector<1x256xf32>
      %100 = arith.subf %99, %39 : vector<1x256xf32>
      %101 = arith.mulf %38, %100 : vector<1x256xf32>
      %102 = arith.mulf %101, %29 : vector<1x256xf32>
      %103 = arith.select %98, %102, %83 : vector<1x256xi1>, vector<1x256xf32>
      %104 = arith.andi %68, %82 : vector<1x256xi1>
      %105 = arith.mulf %38, %39 : vector<1x256xf32>
      %106 = arith.mulf %105, %29 : vector<1x256xf32>
      %107 = arith.select %104, %106, %83 : vector<1x256xi1>, vector<1x256xf32>
      %c16_i32_40 = arith.constant 16 : i32
      %108 = vector.broadcast %c16_i32_40 : i32 to vector<1x256xi32>
      %109 = arith.muli %40, %108 : vector<1x256xi32>
      %110 = arith.addi %109, %41 : vector<1x256xi32>
      %111 = vector.broadcast %110 : vector<1x256xi32> to vector<256x256xi32>
      %112 = arith.cmpi eq, %11, %111 : vector<256x256xi32>
      %cst_41 = arith.constant 0.000000e+00 : f32
      %113 = vector.shape_cast %91 : vector<1x256xf32> to vector<1x256xf32>
      %114 = vector.broadcast %113 : vector<1x256xf32> to vector<256x256xf32>
      %115 = vector.broadcast %cst_41 : f32 to vector<256x256xf32>
      %116 = arith.select %112, %114, %115 : vector<256x256xi1>, vector<256x256xf32>
      %c1_i32_42 = arith.constant 1 : i32
      %117 = vector.broadcast %c1_i32_42 : i32 to vector<1x256xi32>
      %118 = arith.addi %110, %117 : vector<1x256xi32>
      %119 = vector.broadcast %118 : vector<1x256xi32> to vector<256x256xi32>
      %120 = arith.cmpi eq, %11, %119 : vector<256x256xi32>
      %cst_43 = arith.constant 0.000000e+00 : f32
      %121 = vector.shape_cast %97 : vector<1x256xf32> to vector<1x256xf32>
      %122 = vector.broadcast %121 : vector<1x256xf32> to vector<256x256xf32>
      %123 = vector.broadcast %cst_43 : f32 to vector<256x256xf32>
      %124 = arith.select %120, %122, %123 : vector<256x256xi1>, vector<256x256xf32>
      %125 = arith.addf %116, %124 : vector<256x256xf32>
      %c16_i32_44 = arith.constant 16 : i32
      %126 = vector.broadcast %c16_i32_44 : i32 to vector<1x256xi32>
      %127 = arith.addi %110, %126 : vector<1x256xi32>
      %128 = vector.broadcast %127 : vector<1x256xi32> to vector<256x256xi32>
      %129 = arith.cmpi eq, %11, %128 : vector<256x256xi32>
      %cst_45 = arith.constant 0.000000e+00 : f32
      %130 = vector.shape_cast %103 : vector<1x256xf32> to vector<1x256xf32>
      %131 = vector.broadcast %130 : vector<1x256xf32> to vector<256x256xf32>
      %132 = vector.broadcast %cst_45 : f32 to vector<256x256xf32>
      %133 = arith.select %129, %131, %132 : vector<256x256xi1>, vector<256x256xf32>
      %134 = arith.addf %125, %133 : vector<256x256xf32>
      %c17_i32 = arith.constant 17 : i32
      %135 = vector.broadcast %c17_i32 : i32 to vector<1x256xi32>
      %136 = arith.addi %110, %135 : vector<1x256xi32>
      %137 = vector.broadcast %136 : vector<1x256xi32> to vector<256x256xi32>
      %138 = arith.cmpi eq, %11, %137 : vector<256x256xi32>
      %cst_46 = arith.constant 0.000000e+00 : f32
      %139 = vector.shape_cast %107 : vector<1x256xf32> to vector<1x256xf32>
      %140 = vector.broadcast %139 : vector<1x256xf32> to vector<256x256xf32>
      %141 = vector.broadcast %cst_46 : f32 to vector<256x256xf32>
      %142 = arith.select %138, %140, %141 : vector<256x256xi1>, vector<256x256xf32>
      %143 = arith.addf %134, %142 : vector<256x256xf32>
      %c8_i32 = arith.constant 8 : i32
      %144 = arith.muli %arg11, %c8_i32 : i32
      %145 = tpu.assume_multiple %144, 8 : i32
      %146 = arith.index_cast %145 : i32 to index
      %c0_47 = arith.constant 0 : index
      %147 = vector.load %arg9[%146, %c0_47] : memref<72x256xf32, #tpu.memory_space<vmem>>, vector<8x256xf32>
      %cst_48 = arith.constant dense<0.000000e+00> : vector<8x256xf32>
      %148 = tpu.matmul %147, %143, %cst_48 {dimension_numbers = #tpu.dot_dimension_numbers<[1], [0], [0], [1], [0, 0, 1, 1], [], []>} : vector<8x256xf32>, vector<256x256xf32>, vector<8x256xf32> -> vector<8x256xf32>
      %149 = arith.addf %arg12, %148 : vector<8x256xf32>
      scf.yield %149 : vector<8x256xf32>
    }
    %c9_i32_6 = arith.constant 9 : i32
    %c0_7 = arith.constant 0 : index
    %c0_8 = arith.constant 0 : index
    %15 = vector.load %arg7[%c0_7, %c0_8] : memref<8x1xf32, #tpu.memory_space<vmem>>, vector<8x1xf32>
    %16 = vector.broadcast %15 : vector<8x1xf32> to vector<8x256xf32>
    %17 = arith.addf %14, %16 : vector<8x256xf32>
    %c0_9 = arith.constant 0 : index
    %c0_10 = arith.constant 0 : index
    %c0_11 = arith.constant 0 : index
    %18 = vector.load %arg8[%c0_9, %c0_10, %c0_11] : memref<1x8x256xf32, #tpu.memory_space<vmem>>, vector<1x8x256xf32>
    %19 = vector.shape_cast %18 : vector<1x8x256xf32> to vector<8x256xf32>
    %20 = vector.shape_cast %17 : vector<8x256xf32> to vector<1x8x256xf32>
    tpu.vector_store %arg8[%c0_9, %c0_10, %c0_11], %20 {strides = array<i32>} : memref<1x8x256xf32, #tpu.memory_space<vmem>>, vector<1x8x256xf32>,
    return
  }
  func.func @transform_0(%arg0: i32, %arg1: i32) -> (i32, i32, i32) {
    %c0_i32 = arith.constant 0 : i32
    %c0_i32_0 = arith.constant 0 : i32
    %c0_i32_1 = arith.constant 0 : i32
    return %arg0, %c0_i32, %c0_i32_0 : i32, i32, i32
  }
  func.func @transform_1(%arg0: i32, %arg1: i32) -> (i32, i32, i32) {
    %c0_i32 = arith.constant 0 : i32
    %c0_i32_0 = arith.constant 0 : i32
    return %arg0, %c0_i32, %arg1 : i32, i32, i32
  }
  func.func @transform_2(%arg0: i32, %arg1: i32) -> (i32, i32) {
    %c0_i32 = arith.constant 0 : i32
    %c0_i32_0 = arith.constant 0 : i32
    return %c0_i32, %arg1 : i32, i32
  }
  func.func @transform_3(%arg0: i32, %arg1: i32) -> (i32, i32) {
    %c0_i32 = arith.constant 0 : i32
    %c0_i32_0 = arith.constant 0 : i32
    return %c0_i32, %arg1 : i32, i32
  }
  func.func @transform_4(%arg0: i32, %arg1: i32) -> (i32, i32) {
    %c0_i32 = arith.constant 0 : i32
    %c0_i32_0 = arith.constant 0 : i32
    %c0_i32_1 = arith.constant 0 : i32
    return %c0_i32, %c0_i32_0 : i32, i32
  }
  func.func @transform_5(%arg0: i32, %arg1: i32) -> (i32, i32) {
    %c0_i32 = arith.constant 0 : i32
    %c0_i32_0 = arith.constant 0 : i32
    %c0_i32_1 = arith.constant 0 : i32
    return %c0_i32, %c0_i32_0 : i32, i32
  }
  func.func @transform_6(%arg0: i32, %arg1: i32) -> (i32, i32, i32) {
    %c0_i32 = arith.constant 0 : i32
    %c0_i32_0 = arith.constant 0 : i32
    return %arg0, %c0_i32, %arg1 : i32, i32, i32
  }
}

</mosaic_0001>

<llo_original>
// kernel: dcn_forward.2
$region0: #{dcn_forward.2}
  #allocation0 [shape = 'u32[]', space=smem, size = 0x4, offset = 0x4, fixed_abs, tag = 'smem constant byte address 0x4 - core index']
  #allocation1 [shape = 'u32[144,128]{1,0:T(1,128)}', space=vmem, size = 0x12000, scoped, tag = 'internal scratch']
  %s0 = inlined_call_operand.vmem [shape: f32[2,4,32,18], index: 0, kind: input, shape index: {}, may-alias: {0,1}]
  %s1 = inlined_call_operand.vmem [shape: f32[2,4,32,18], index: 1, kind: input, shape index: {}, may-alias: {0,1}]
  %s2 = inlined_call_operand.vmem [shape: f32[27,36], index: 2, kind: input, shape index: {}]
  %s3 = inlined_call_operand.vmem [shape: f32[27,1], index: 3, kind: input, shape index: {}]
  %s4 = inlined_call_operand.vmem [shape: f32[2,27,256], index: 4, kind: output, shape index: {}]
  %s5 = sld [smem:[#allocation0]]
  $region125: #{dcn_forward.2} parent=0
    _
  %s7 = ssub.s32 1, %s5
  %s8 = scalar_select 0, %s7, %s5
  $region1: #{dcn_forward.2} parent=0
    #allocation2 [shape = 'u8[65536]{0}', space=vmem, size = 0x10000, scoped, tag = 'input window, operand 0']
    #allocation3 [shape = 'u8[32768]{0}', space=vmem, size = 0x8000, scoped, tag = 'input window, operand 1']
    loop: start=0, step=1, limit=4
    $region2: #{dcn_forward.2} parent=1 // loop_pre_header
      _
    $region3: #{dcn_forward.2} parent=1 // loop_header
      %s10 = sphi 0, %s14
      %p11 = scmp.ge.s32.totalorder %s10, 4
      %s17 = sphi 0, %s29
      %s18 = sphi 0, %s25
      %s19 = sphi 0, %s17
      %s20 = sphi 0, %s18
      %s21 = sphi 0, %s19
      %s22 = sphi 0, %s20
      %s34 = sphi 0, %s36
      %s37 = sphi 0, %s34
      %s38 = sphi 0, %s37
      %s54 = sphi 0, %s38
      %s66 = sphi 0, %s68
      %s69 = sphi 0, %s66
      %s70 = sphi 0, %s69
      %s86 = sphi 0, %s70
      %s90 = sphi 0, %s90
      %s92 = sphi 0, %s90
      %s93 = sphi 0, %s92
      %s107 = sphi 0, %s93
      %s111 = sphi 0, %s111
      %s113 = sphi 0, %s111
      %s114 = sphi 0, %s113
      %s128 = sphi 0, %s114
      %s136 = sphi 0, %s138
      %s139 = sphi 0, %s136
      %s140 = sphi 0, %s139
      %s156 = sphi 0, %s140
    $region4: #{dcn_forward.2} parent=1 // loop_header_branch
      %13 = sbr.rel (%p11) target = $region8
    $region5: #{dcn_forward.2} parent=1 // loop_body
      %s15 = ssub.s32 %s10, 1
      %s16 = ssub.s32 %s10, 2
      %s23 = sadd.s32 1, %s18
      %p24 = scmp.ge.s32.totalorder %s23, 1
      %s25 = scalar_select %p24, 0, %s23
      %s26 = sadd.s32 1, %s17
      %s27 = scalar_select %p24, %s26, %s17
      %p28 = scmp.ge.s32.totalorder %s27, 2
      %s29 = scalar_select %p28, 0, %s27
      %s30 = ssub.s32 %s17, %s29
      %s31 = ssub.s32 %s18, %s25
      %s32 = sor.u32 %s30, %s31
      %p33 = scmp.eq.s32.totalorder %s32, 0
      %s35 = sadd.s32 %s34, 1
      %s36 = scalar_select %p33, %s34, %s35
      %p39 = pneg %p33
      %p40 = scmp.eq.s32.totalorder %s10, 1
      %p41 = por %p39, %p40
      %p42 = scmp.ne.s32.totalorder %s34, %s37
      %p43 = scmp.eq.s32.totalorder %s10, 0
      %p44 = por %p42, %p43
      %p45 = scmp.ne.s32.totalorder %s34, %s37
      %p46 = scmp.eq.s32.totalorder %s15, 1
      %p47 = por %p45, %p46
      %p48 = scmp.ne.s32.totalorder %s37, %s38
      %p49 = scmp.eq.s32.totalorder %s15, 0
      %p50 = por %p48, %p49
      %p51 = scmp.ne.s32.totalorder %s37, %s38
      %p52 = scmp.eq.s32.totalorder %s16, 1
      %p53 = por %p51, %p52
      %p55 = scmp.ne.s32.totalorder %s38, %s54
      %p56 = scmp.eq.s32.totalorder %s16, 0
      %p57 = por %p55, %p56
      %s58 = sadd.s32 %s18, 1
      %s59 = smul.u32 %s58, 2
      %s60 = sadd.s32 %s25, 1
      %s61 = smul.u32 %s60, 2
      %s62 = ssub.s32 %s17, %s29
      %s63 = ssub.s32 %s59, %s61
      %s64 = sor.u32 %s62, %s63
      %p65 = scmp.eq.s32.totalorder %s64, 0
      %s67 = sadd.s32 %s66, 1
      %s68 = scalar_select %p65, %s66, %s67
      %p71 = pneg %p65
      %p72 = scmp.eq.s32.totalorder %s10, 1
      %p73 = por %p71, %p72
      %p74 = scmp.ne.s32.totalorder %s66, %s69
      %p75 = scmp.eq.s32.totalorder %s10, 0
      %p76 = por %p74, %p75
      %p77 = scmp.ne.s32.totalorder %s66, %s69
      %p78 = scmp.eq.s32.totalorder %s15, 1
      %p79 = por %p77, %p78
      %p80 = scmp.ne.s32.totalorder %s69, %s70
      %p81 = scmp.eq.s32.totalorder %s15, 0
      %p82 = por %p80, %p81
      %p83 = scmp.ne.s32.totalorder %s69, %s70
      %p84 = scmp.eq.s32.totalorder %s16, 1
      %p85 = por %p83, %p84
      %p87 = scmp.ne.s32.totalorder %s70, %s86
      %p88 = scmp.eq.s32.totalorder %s16, 0
      %p89 = por %p87, %p88
      %s91 = sadd.s32 %s90, 1
      %p94 = scmp.eq.s32.totalorder %s10, 1
      %p95 = scmp.ne.s32.totalorder %s90, %s92
      %p96 = scmp.eq.s32.totalorder %s10, 0
      %p97 = por %p95, %p96
      %p98 = scmp.ne.s32.totalorder %s90, %s92
      %p99 = scmp.eq.s32.totalorder %s15, 1
      %p100 = por %p98, %p99
      %p101 = scmp.ne.s32.totalorder %s92, %s93
      %p102 = scmp.eq.s32.totalorder %s15, 0
      %p103 = por %p101, %p102
      %p104 = scmp.ne.s32.totalorder %s92, %s93
      %p105 = scmp.eq.s32.totalorder %s16, 1
      %p106 = por %p104, %p105
      %p108 = scmp.ne.s32.totalorder %s93, %s107
      %p109 = scmp.eq.s32.totalorder %s16, 0
      %p110 = por %p108, %p109
      %s112 = sadd.s32 %s111, 1
      %p115 = scmp.eq.s32.totalorder %s10, 1
      %p116 = scmp.ne.s32.totalorder %s111, %s113
      %p117 = scmp.eq.s32.totalorder %s10, 0
      %p118 = por %p116, %p117
      %p119 = scmp.ne.s32.totalorder %s111, %s113
      %p120 = scmp.eq.s32.totalorder %s15, 1
      %p121 = por %p119, %p120
      %p122 = scmp.ne.s32.totalorder %s113, %s114
      %p123 = scmp.eq.s32.totalorder %s15, 0
      %p124 = por %p122, %p123
      %p125 = scmp.ne.s32.totalorder %s113, %s114
      %p126 = scmp.eq.s32.totalorder %s16, 1
      %p127 = por %p125, %p126
      %p129 = scmp.ne.s32.totalorder %s114, %s128
      %p130 = scmp.eq.s32.totalorder %s16, 0
      %p131 = por %p129, %p130
      %s132 = ssub.s32 %s17, %s29
      %s133 = ssub.s32 %s18, %s25
      %s134 = sor.u32 %s132, %s133
      %p135 = scmp.eq.s32.totalorder %s134, 0
      %s137 = sadd.s32 %s136, 1
      %s138 = scalar_select %p135, %s136, %s137
      %p141 = pneg %p135
      %p142 = scmp.eq.s32.totalorder %s10, 1
      %p143 = por %p141, %p142
      %p144 = scmp.ne.s32.totalorder %s136, %s139
      %p145 = scmp.eq.s32.totalorder %s10, 0
      %p146 = por %p144, %p145
      %p147 = scmp.ne.s32.totalorder %s136, %s139
      %p148 = scmp.eq.s32.totalorder %s15, 1
      %p149 = por %p147, %p148
      %p150 = scmp.ne.s32.totalorder %s139, %s140
      %p151 = scmp.eq.s32.totalorder %s15, 0
      %p152 = por %p150, %p151
      %p153 = scmp.ne.s32.totalorder %s139, %s140
      %p154 = scmp.eq.s32.totalorder %s16, 1
      %p155 = por %p153, %p154
      %p157 = scmp.ne.s32.totalorder %s140, %s156
      %p158 = scmp.eq.s32.totalorder %s16, 0
      %p159 = por %p157, %p158
      %p160 = scmp.le.s32.totalorder 1, %s10
      %p161 = scmp.lt.s32.totalorder %s10, 3
      %p162 = pnand %p160, %p161
      %p163 = pneg %p162
      // Predicated region
      $region9: #{dcn_forward.2} parent=5 // pred_check
        _
      $region10: #{dcn_forward.2} parent=5 // pred_check_branch
        %165 = sbr.rel (%p162) target = $region12
      $region11: #{dcn_forward.2} parent=5 // pred_region
        %s166 = ssub.s32 %s10, 1
        // Predicated region
        $region13: #{dcn_forward.2} parent=11 // pred_check
          %p167 = pneg %p103
        $region14: #{dcn_forward.2} parent=11 // pred_check_branch
          %169 = sbr.rel (%p167) target = $region16
        $region15: #{dcn_forward.2} parent=11 // pred_region
          _
        $region16: #{dcn_forward.2} parent=11 // pred_fallthru
          _
        // Predicated region
        $region17: #{dcn_forward.2} parent=11 // pred_check
          %p170 = pneg %p124
        $region18: #{dcn_forward.2} parent=11 // pred_check_branch
          %172 = sbr.rel (%p170) target = $region20
        $region19: #{dcn_forward.2} parent=11 // pred_region
          _
        $region20: #{dcn_forward.2} parent=11 // pred_fallthru
          _
      $region12: #{dcn_forward.2} parent=5 // pred_fallthru
        _
      %p173 = scmp.lt.s32.totalorder %s10, 2
      // Predicated region
      $region21: #{dcn_forward.2} parent=5 // pred_check
        %p174 = pneg %p173
      $region22: #{dcn_forward.2} parent=5 // pred_check_branch
        %176 = sbr.rel (%p174) target = $region24
      $region23: #{dcn_forward.2} parent=5 // pred_region
        // Predicated region
        $region25: #{dcn_forward.2} parent=23 // pred_check
          %p177 = pneg %p44
        $region26: #{dcn_forward.2} parent=23 // pred_check_branch
          %179 = sbr.rel (%p177) target = $region28
        $region27: #{dcn_forward.2} parent=23 // pred_region
          %s180 = sand.u32 %s34, 1
          %s181 = sand.u32 %s34, 1
          %s182 = smul.addr %s181, 64
          %s183 = scalar_lea.vmem [#allocation2], %s182
          %s184 = smul.u32 2, %s18
          %s185 = smul.addr %s17, 16
          %s186 = sadd.s32 %s184, %s185
          %s187 = smul.addr %s186, 8
          %s188 = scalar_lea.vmem %s0, %s187
          // Predicated region
          $region29: #{dcn_forward.2} parent=27 // pred_check
            _
          $region30: #{dcn_forward.2} parent=27 // pred_check_branch
            %190 = sbr.rel (0) target = $region32
          $region31: #{dcn_forward.2} parent=27 // pred_region
            // Predicated region
            $region33: #{dcn_forward.2} parent=31 // pred_check
              _
            $region34: #{dcn_forward.2} parent=31 // pred_check_branch
              %192 = sbr.rel (0) target = $region36
            $region35: #{dcn_forward.2} parent=31 // pred_region
              // Predicated region
              $region48: #{dcn_forward.2} parent=35 // pred_check
                _
              $region49: #{dcn_forward.2} parent=35 // pred_check_branch
                %222 = sbr.rel (0) target = $region51
              $region50: #{dcn_forward.2} parent=35 // pred_region
                loop: start=0, step=1, limit=1
                $region52: #{dcn_forward.2} parent=50 // loop_pre_header
                  _
                $region53: #{dcn_forward.2} parent=50 // loop_header
                  %s224 = sphi 0, %s228
                  %p225 = scmp.ge.s32.totalorder %s224, 1
                  %s229 = sphi %s188, %s188
                  %s230 = sphi %s183, %s183
                $region54: #{dcn_forward.2} parent=50 // loop_header_branch
                  %227 = sbr.rel (%p225) target = $region58
                $region55: #{dcn_forward.2} parent=50 // loop_body
                  %v231 = vld [vmem:[%s229] sm:$0xff]
                  %232 = vst [vmem:[%s230] sm:$0xff] %v231
                  %v233 = vld [vmem:[%s229 + $0x8] sm:$0xff]
                  %234 = vst [vmem:[%s230 + $0x8] sm:$0xff] %v233
                  %v235 = vld [vmem:[%s229 + $0x20] sm:$0xff]
                  %236 = vst [vmem:[%s230 + $0x10] sm:$0xff] %v235
                  %v237 = vld [vmem:[%s229 + $0x28] sm:$0xff]
                  %238 = vst [vmem:[%s230 + $0x18] sm:$0xff] %v237
                  %v239 = vld [vmem:[%s229 + $0x40] sm:$0xff]
                  %240 = vst [vmem:[%s230 + $0x20] sm:$0xff] %v239
                  %v241 = vld [vmem:[%s229 + $0x48] sm:$0xff]
                  %242 = vst [vmem:[%s230 + $0x28] sm:$0xff] %v241
                  %v243 = vld [vmem:[%s229 + $0x60] sm:$0xff]
                  %244 = vst [vmem:[%s230 + $0x30] sm:$0xff] %v243
                  %v245 = vld [vmem:[%s229 + $0x68] sm:$0xff]
                  %246 = vst [vmem:[%s230 + $0x38] sm:$0xff] %v245
                $region56: #{dcn_forward.2} parent=50 // loop_footer
                  %s228 = sadd.s32 1, %s224
                $region57: #{dcn_forward.2} parent=50 // loop_footer_branch
                  %223 = sbr.rel target = $region53
                $region58: #{dcn_forward.2} parent=50 // loop_exit
                  _
              $region51: #{dcn_forward.2} parent=35 // pred_fallthru
                _
              // Predicated region
              $region59: #{dcn_forward.2} parent=35 // pred_check
                _
              $region60: #{dcn_forward.2} parent=35 // pred_check_branch
                %248 = sbr.rel target = $region62
              $region61: #{dcn_forward.2} parent=35 // pred_region
                _
              $region62: #{dcn_forward.2} parent=35 // pred_fallthru
                _
            $region36: #{dcn_forward.2} parent=31 // pred_fallthru
              _
            // Predicated region
            $region37: #{dcn_forward.2} parent=31 // pred_check
              _
            $region38: #{dcn_forward.2} parent=31 // pred_check_branch
              %194 = sbr.rel target = $region40
            $region39: #{dcn_forward.2} parent=31 // pred_region
              %s196 = ssub.s32 256, 1
              loop: start=0, step=1, limit=1
              $region41: #{dcn_forward.2} parent=39 // loop_pre_header
                _
              $region42: #{dcn_forward.2} parent=39 // loop_header
                %s198 = sphi 0, %s202
                %p199 = scmp.ge.s32.totalorder %s198, 1
                %s203 = sphi %s188, %s188
                %s204 = sphi %s183, %s183
              $region43: #{dcn_forward.2} parent=39 // loop_header_branch
                %201 = sbr.rel (%p199) target = $region47
              $region44: #{dcn_forward.2} parent=39 // loop_body
                %v205 = vld [vmem:[%s203] sm:%s196]
                %206 = vst [vmem:[%s204] sm:%s196] %v205
                %v207 = vld [vmem:[%s203 + $0x8] sm:%s196]
                %208 = vst [vmem:[%s204 + $0x8] sm:%s196] %v207
                %v209 = vld [vmem:[%s203 + $0x20] sm:%s196]
                %210 = vst [vmem:[%s204 + $0x10] sm:%s196] %v209
                %v211 = vld [vmem:[%s203 + $0x28] sm:%s196]
                %212 = vst [vmem:[%s204 + $0x18] sm:%s196] %v211
                %v213 = vld [vmem:[%s203 + $0x40] sm:%s196]
                %214 = vst [vmem:[%s204 + $0x20] sm:%s196] %v213
                %v215 = vld [vmem:[%s203 + $0x48] sm:%s196]
                %216 = vst [vmem:[%s204 + $0x28] sm:%s196] %v215
                %v217 = vld [vmem:[%s203 + $0x60] sm:%s196]
                %218 = vst [vmem:[%s204 + $0x30] sm:%s196] %v217
                %v219 = vld [vmem:[%s203 + $0x68] sm:%s196]
                %220 = vst [vmem:[%s204 + $0x38] sm:%s196] %v219
              $region45: #{dcn_forward.2} parent=39 // loop_footer
                %s202 = sadd.s32 1, %s198
              $region46: #{dcn_forward.2} parent=39 // loop_footer_branch
                %197 = sbr.rel target = $region42
              $region47: #{dcn_forward.2} parent=39 // loop_exit
                _
            $region40: #{dcn_forward.2} parent=31 // pred_fallthru
              _
          $region32: #{dcn_forward.2} parent=27 // pred_fallthru
            _
          %249 = vnop
        $region28: #{dcn_forward.2} parent=23 // pred_fallthru
          _
        // Predicated region
        $region63: #{dcn_forward.2} parent=23 // pred_check
          %p250 = pneg %p76
        $region64: #{dcn_forward.2} parent=23 // pred_check_branch
          %252 = sbr.rel (%p250) target = $region66
        $region65: #{dcn_forward.2} parent=23 // pred_region
          %s253 = sand.u32 %s66, 1
          %s254 = sand.u32 %s66, 1
          %s255 = smul.addr %s254, 32
          %s256 = scalar_lea.vmem [#allocation3], %s255
          %s257 = sadd.s32 %s18, 1
          %s258 = smul.u32 %s257, 2
          %s259 = smul.addr %s17, 16
          %s260 = sadd.s32 %s258, %s259
          %s261 = smul.addr %s260, 8
          %s262 = scalar_lea.vmem %s1, %s261
          // Predicated region
          $region67: #{dcn_forward.2} parent=65 // pred_check
            _
          $region68: #{dcn_forward.2} parent=65 // pred_check_branch
            %264 = sbr.rel (0) target = $region70
          $region69: #{dcn_forward.2} parent=65 // pred_region
            // Predicated region
            $region71: #{dcn_forward.2} parent=69 // pred_check
              _
            $region72: #{dcn_forward.2} parent=69 // pred_check_branch
              %266 = sbr.rel (0) target = $region74
            $region73: #{dcn_forward.2} parent=69 // pred_region
              // Predicated region
              $region86: #{dcn_forward.2} parent=73 // pred_check
                _
              $region87: #{dcn_forward.2} parent=73 // pred_check_branch
                %288 = sbr.rel (0) target = $region89
              $region88: #{dcn_forward.2} parent=73 // pred_region
                loop: start=0, step=1, limit=1
                $region90: #{dcn_forward.2} parent=88 // loop_pre_header
                  _
                $region91: #{dcn_forward.2} parent=88 // loop_header
                  %s290 = sphi 0, %s294
                  %p291 = scmp.ge.s32.totalorder %s290, 1
                  %s295 = sphi %s262, %s262
                  %s296 = sphi %s256, %s256
                $region92: #{dcn_forward.2} parent=88 // loop_header_branch
                  %293 = sbr.rel (%p291) target = $region96
                $region93: #{dcn_forward.2} parent=88 // loop_body
                  %v297 = vld [vmem:[%s295] sm:$0xff]
                  %298 = vst [vmem:[%s296] sm:$0xff] %v297
                  %v299 = vld [vmem:[%s295 + $0x20] sm:$0xff]
                  %300 = vst [vmem:[%s296 + $0x8] sm:$0xff] %v299
                  %v301 = vld [vmem:[%s295 + $0x40] sm:$0xff]
                  %302 = vst [vmem:[%s296 + $0x10] sm:$0xff] %v301
                  %v303 = vld [vmem:[%s295 + $0x60] sm:$0xff]
                  %304 = vst [vmem:[%s296 + $0x18] sm:$0xff] %v303
                $region94: #{dcn_forward.2} parent=88 // loop_footer
                  %s294 = sadd.s32 1, %s290
                $region95: #{dcn_forward.2} parent=88 // loop_footer_branch
                  %289 = sbr.rel target = $region91
                $region96: #{dcn_forward.2} parent=88 // loop_exit
                  _
              $region89: #{dcn_forward.2} parent=73 // pred_fallthru
                _
              // Predicated region
              $region97: #{dcn_forward.2} parent=73 // pred_check
                _
              $region98: #{dcn_forward.2} parent=73 // pred_check_branch
                %306 = sbr.rel target = $region100
              $region99: #{dcn_forward.2} parent=73 // pred_region
                _
              $region100: #{dcn_forward.2} parent=73 // pred_fallthru
                _
            $region74: #{dcn_forward.2} parent=69 // pred_fallthru
              _
            // Predicated region
            $region75: #{dcn_forward.2} parent=69 // pred_check
              _
            $region76: #{dcn_forward.2} parent=69 // pred_check_branch
              %268 = sbr.rel target = $region78
            $region77: #{dcn_forward.2} parent=69 // pred_region
              %s270 = ssub.s32 256, 1
              loop: start=0, step=1, limit=1
              $region79: #{dcn_forward.2} parent=77 // loop_pre_header
                _
              $region80: #{dcn_forward.2} parent=77 // loop_header
                %s272 = sphi 0, %s276
                %p273 = scmp.ge.s32.totalorder %s272, 1
                %s277 = sphi %s262, %s262
                %s278 = sphi %s256, %s256
              $region81: #{dcn_forward.2} parent=77 // loop_header_branch
                %275 = sbr.rel (%p273) target = $region85
              $region82: #{dcn_forward.2} parent=77 // loop_body
                %v279 = vld [vmem:[%s277] sm:%s270]
                %280 = vst [vmem:[%s278] sm:%s270] %v279
                %v281 = vld [vmem:[%s277 + $0x20] sm:%s270]
                %282 = vst [vmem:[%s278 + $0x8] sm:%s270] %v281
                %v283 = vld [vmem:[%s277 + $0x40] sm:%s270]
                %284 = vst [vmem:[%s278 + $0x10] sm:%s270] %v283
                %v285 = vld [vmem:[%s277 + $0x60] sm:%s270]
                %286 = vst [vmem:[%s278 + $0x18] sm:%s270] %v285
              $region83: #{dcn_forward.2} parent=77 // loop_footer
                %s276 = sadd.s32 1, %s272
              $region84: #{dcn_forward.2} parent=77 // loop_footer_branch
                %271 = sbr.rel target = $region80
              $region85: #{dcn_forward.2} parent=77 // loop_exit
                _
            $region78: #{dcn_forward.2} parent=69 // pred_fallthru
              _
          $region70: #{dcn_forward.2} parent=65 // pred_fallthru
            _
          %307 = vnop
        $region66: #{dcn_forward.2} parent=23 // pred_fallthru
          _
      $region24: #{dcn_forward.2} parent=5 // pred_fallthru
        _
      %p308 = scmp.le.s32.totalorder 1, %s10
      %p309 = scmp.lt.s32.totalorder %s10, 3
      %p310 = pnand %p308, %p309
      %p311 = pneg %p310
      // Predicated region
      $region101: #{dcn_forward.2} parent=5 // pred_check
        _
      $region102: #{dcn_forward.2} parent=5 // pred_check_branch
        %313 = sbr.rel (%p310) target = $region104
      $region103: #{dcn_forward.2} parent=5 // pred_region
        %s314 = ssub.s32 %s10, 1
        %s315 = sand.u32 %s37, 1
        %s316 = sand.u32 %s37, 1
        %s317 = smul.addr %s316, 64
        %s318 = scalar_lea.vmem [#allocation2], %s317
        // Predicated region
        $region105: #{dcn_forward.2} parent=103 // pred_check
          %p319 = pneg %p50
        $region106: #{dcn_forward.2} parent=103 // pred_check_branch
          %321 = sbr.rel (%p319) target = $region108
        $region107: #{dcn_forward.2} parent=103 // pred_region
          _
        $region108: #{dcn_forward.2} parent=103 // pred_fallthru
          _
        %s322 = sand.u32 %s69, 1
        %s323 = sand.u32 %s69, 1
        %s324 = smul.addr %s323, 32
        %s325 = scalar_lea.vmem [#allocation3], %s324
        // Predicated region
        $region109: #{dcn_forward.2} parent=103 // pred_check
          %p326 = pneg %p82
        $region110: #{dcn_forward.2} parent=103 // pred_check_branch
          %328 = sbr.rel (%p326) target = $region112
        $region111: #{dcn_forward.2} parent=103 // pred_region
          _
        $region112: #{dcn_forward.2} parent=103 // pred_fallthru
          _
        %s329 = sand.u32 %s37, 1
        %s330 = sand.u32 %s37, 1
        %s331 = smul.addr %s330, 64
        %s332 = scalar_lea.vmem [#allocation2], %s331
        %p333 = pneg %p50
        %p334 = pneg %p47
        %s335 = sand.u32 %s69, 1
        %s336 = sand.u32 %s69, 1
        %s337 = smul.addr %s336, 32
        %s338 = scalar_lea.vmem [#allocation3], %s337
        %p339 = pneg %p82
        %p340 = pneg %p79
        %p341 = pneg %p103
        %p342 = pneg %p100
        %p343 = pneg %p124
        %p344 = pneg %p121
        %p345 = pneg %p152
        %p346 = pneg %p149
        %s347 = smul.u32 2, %s20
        %p348 = scmp.lt.s32.totalorder %s19, 1
        %s349 = scalar_select %p348, %s19, 1
        %p350 = scmp.lt.s32.totalorder %s347, 1
        %s351 = scalar_select %p350, %s347, 1
        %s352 = smul.addr %s349, 8
        %s353 = sadd.s32 %s351, %s352
        %s354 = smul.addr %s353, 8
        %s355 = scalar_lea.vmem %s4, %s354
        %s356 = smul.u32 2, %s20
        %s357 = sadd.s32 %s20, 1
        %s358 = smul.u32 %s357, 2
        %s359 = smul.u32 2, %s20
        %p360 = scmp.lt.s32.totalorder %s19, 1
        %s361 = scalar_select %p360, %s19, 1
        %p362 = scmp.lt.s32.totalorder %s359, 1
        %s363 = scalar_select %p362, %s359, 1
        %s364 = smul.addr %s361, 8
        %s365 = sadd.s32 %s363, %s364
        %s366 = smul.addr %s365, 8
        %s367 = scalar_lea.vmem %s4, %s366
        %s368 = smul.u32 2, %s20
        %v369 = vld [vmem:[%s318] sm:$0xff]
        %v370 = vld [vmem:[%s318 + $0x8] sm:$0xff]
        %v371 = vld [vmem:[%s318 + $0x10] sm:$0xff]
        %v372 = vld [vmem:[%s318 + $0x18] sm:$0xff]
        %v373 = vld [vmem:[%s318 + $0x20] sm:$0xff]
        %v374 = vld [vmem:[%s318 + $0x28] sm:$0xff]
        %v375 = vld [vmem:[%s318 + $0x30] sm:$0xff]
        %v376 = vld [vmem:[%s318 + $0x38] sm:$0xff]
        %v377 = vld [vmem:[%s325] sm:$0x3]
        %v378 = vld [vmem:[%s325 + $0x8] sm:$0x3]
        %v379 = vld [vmem:[%s325 + $0x10] sm:$0x3]
        %v380 = vld [vmem:[%s325 + $0x18] sm:$0x3]
        %v381 = vcombine.low %v369, %v373
        %v382 = vcombine.high %v369, %v373
        %v384 = vunpack.c.l.s4 1983009808
        %v385 = vunpack.c.0.s8 %v384
        %v386 = vlaneseq
        %v387 = vshrl.u32 %v386, 7
        %v388 = vsub.s32 %v385, %v387
        %v389 = vrot.slane %v381, %v388
        %v391 = vunpack.c.l.s4 1983009808
        %v392 = vunpack.c.0.s8 %v391
        %v393 = vlaneseq
        %v394 = vshrl.u32 %v393, 7
        %v395 = vsub.s32 %v392, %v394
        %v396 = vrot.slane %v382, %v395
        %v397 = vcombine.low %v371, %v375
        %v398 = vcombine.high %v371, %v375
        %v400 = vunpack.c.l.s4 1983009808
        %v401 = vunpack.c.0.s8 %v400
        %v402 = vlaneseq
        %v403 = vshrl.u32 %v402, 7
        %v404 = vsub.s32 %v401, %v403
        %v405 = vrot.slane %v397, %v404
        %v407 = vunpack.c.l.s4 1983009808
        %v408 = vunpack.c.0.s8 %v407
        %v409 = vlaneseq
        %v410 = vshrl.u32 %v409, 7
        %v411 = vsub.s32 %v408, %v410
        %v412 = vrot.slane %v398, %v411
        %v413 = vcombine.low %v389, %v405
        %v414 = vcombine.high %v389, %v405
        %v416 = vunpack.c.l.s4 1934713408
        %v417 = vunpack.c.0.s8 %v416
        %v418 = vlaneseq
        %v419 = vshrl.u32 %v418, 7
        %v420 = vsub.s32 %v417, %v419
        %v421 = vrot.slane %v413, %v420
        %v423 = vunpack.c.l.s4 1934713408
        %v424 = vunpack.c.0.s8 %v423
        %v425 = vlaneseq
        %v426 = vshrl.u32 %v425, 7
        %v427 = vsub.s32 %v424, %v426
        %v428 = vrot.slane %v414, %v427
        %v429 = vcombine.low %v396, %v412
        %v430 = vcombine.high %v396, %v412
        %v432 = vunpack.c.l.s4 1934713408
        %v433 = vunpack.c.0.s8 %v432
        %v434 = vlaneseq
        %v435 = vshrl.u32 %v434, 7
        %v436 = vsub.s32 %v433, %v435
        %v437 = vrot.slane %v429, %v436
        %v439 = vunpack.c.l.s4 1934713408
        %v440 = vunpack.c.0.s8 %v439
        %v441 = vlaneseq
        %v442 = vshrl.u32 %v441, 7
        %v443 = vsub.s32 %v440, %v442
        %v444 = vrot.slane %v430, %v443
        %v445 = vcombine.high %v421, 0.0
        %v446 = vcombine.high %v428, 0.0
        %v447 = vcombine.high %v437, 0.0
        %v448 = vcombine.high %v444, 0.0
        %v449 = vcombine.low %v370, %v374
        %v450 = vcombine.high %v370, %v374
        %v452 = vunpack.c.l.s4 1983009808
        %v453 = vunpack.c.0.s8 %v452
        %v454 = vlaneseq
        %v455 = vshrl.u32 %v454, 7
        %v456 = vsub.s32 %v453, %v455
        %v457 = vrot.slane %v449, %v456
        %v459 = vunpack.c.l.s4 1983009808
        %v460 = vunpack.c.0.s8 %v459
        %v461 = vlaneseq
        %v462 = vshrl.u32 %v461, 7
        %v463 = vsub.s32 %v460, %v462
        %v464 = vrot.slane %v450, %v463
        %v465 = vcombine.low %v372, %v376
        %v466 = vcombine.high %v372, %v376
        %v468 = vunpack.c.l.s4 1983009808
        %v469 = vunpack.c.0.s8 %v468
        %v470 = vlaneseq
        %v471 = vshrl.u32 %v470, 7
        %v472 = vsub.s32 %v469, %v471
        %v473 = vrot.slane %v465, %v472
        %v475 = vunpack.c.l.s4 1983009808
        %v476 = vunpack.c.0.s8 %v475
        %v477 = vlaneseq
        %v478 = vshrl.u32 %v477, 7
        %v479 = vsub.s32 %v476, %v478
        %v480 = vrot.slane %v466, %v479
        %v481 = vcombine.low %v457, %v473
        %v482 = vcombine.high %v457, %v473
        %v484 = vunpack.c.l.s4 1934713408
        %v485 = vunpack.c.0.s8 %v484
        %v486 = vlaneseq
        %v487 = vshrl.u32 %v486, 7
        %v488 = vsub.s32 %v485, %v487
        %v489 = vrot.slane %v481, %v488
        %v491 = vunpack.c.l.s4 1934713408
        %v492 = vunpack.c.0.s8 %v491
        %v493 = vlaneseq
        %v494 = vshrl.u32 %v493, 7
        %v495 = vsub.s32 %v492, %v494
        %v496 = vrot.slane %v482, %v495
        %v497 = vcombine.low %v464, %v480
        %v498 = vcombine.high %v464, %v480
        %v500 = vunpack.c.l.s4 1934713408
        %v501 = vunpack.c.0.s8 %v500
        %v502 = vlaneseq
        %v503 = vshrl.u32 %v502, 7
        %v504 = vsub.s32 %v501, %v503
        %v505 = vrot.slane %v497, %v504
        %v507 = vunpack.c.l.s4 1934713408
        %v508 = vunpack.c.0.s8 %v507
        %v509 = vlaneseq
        %v510 = vshrl.u32 %v509, 7
        %v511 = vsub.s32 %v508, %v510
        %v512 = vrot.slane %v498, %v511
        %v513 = vcombine.high %v489, 0.0
        %v514 = vcombine.high %v496, 0.0
        %v515 = vcombine.high %v505, 0.0
        %v516 = vcombine.high %v512, 0.0
        %518 = vrot.lane.b32.xlu0 %v445, 16
        %v519 = vpop.permute.xlu0 %518
        %522 = vrot.lane.b32.xlu0 %v428, 32
        %v523 = vpop.permute.xlu0 %522
        %526 = vrot.lane.b32.xlu0 %v446, 48
        %v527 = vpop.permute.xlu0 %526
        %530 = vrot.lane.b32.xlu0 %v437, 64
        %v531 = vpop.permute.xlu0 %530
        %534 = vrot.lane.b32.xlu0 %v447, 80
        %v535 = vpop.permute.xlu0 %534
        %538 = vrot.lane.b32.xlu0 %v444, 96
        %v539 = vpop.permute.xlu0 %538
        %542 = vrot.lane.b32.xlu0 %v448, 112
        %v543 = vpop.permute.xlu0 %542
        %546 = vrot.lane.b32.xlu0 %v513, 16
        %v547 = vpop.permute.xlu0 %546
        %550 = vrot.lane.b32.xlu0 %v496, 32
        %v551 = vpop.permute.xlu0 %550
        %554 = vrot.lane.b32.xlu0 %v514, 48
        %v555 = vpop.permute.xlu0 %554
        %558 = vrot.lane.b32.xlu0 %v505, 64
        %v559 = vpop.permute.xlu0 %558
        %562 = vrot.lane.b32.xlu0 %v515, 80
        %v563 = vpop.permute.xlu0 %562
        %566 = vrot.lane.b32.xlu0 %v512, 96
        %v567 = vpop.permute.xlu0 %566
        %570 = vrot.lane.b32.xlu0 %v516, 112
        %v571 = vpop.permute.xlu0 %570
        %vm573 = vcmask 130048
        %v574 = vsel %vm573, %v421, %v519
        %vm575 = vcmask 261120
        %v576 = vsel %vm575, %v574, %v523
        %vm577 = vcmask 392192
        %v578 = vsel %vm577, %v576, %v527
        %vm579 = vcmask 523264
        %v580 = vsel %vm579, %v578, %v531
        %vm581 = vcmask 654336
        %v582 = vsel %vm581, %v580, %v535
        %vm583 = vcmask 785408
        %v584 = vsel %vm583, %v582, %v539
        %vm585 = vcmask 916480
        %v586 = vsel %vm585, %v584, %v543
        %v587 = vsel %vm573, %v489, %v547
        %v588 = vsel %vm575, %v587, %v551
        %v589 = vsel %vm577, %v588, %v555
        %v590 = vsel %vm579, %v589, %v559
        %v591 = vsel %vm581, %v590, %v563
        %v592 = vsel %vm583, %v591, %v567
        %v593 = vsel %vm585, %v592, %v571
        %602 = vrot.lane.b32.xlu0 %v369, 127
        %v603 = vpop.permute.xlu0 %602
        %604 = vrot.lane.b32.xlu0 %v370, 127
        %v605 = vpop.permute.xlu0 %604
        %606 = vrot.lane.b32.xlu0 %v371, 127
        %v607 = vpop.permute.xlu0 %606
        %608 = vrot.lane.b32.xlu0 %v372, 127
        %v609 = vpop.permute.xlu0 %608
        %610 = vrot.lane.b32.xlu0 %v373, 127
        %v611 = vpop.permute.xlu0 %610
        %612 = vrot.lane.b32.xlu0 %v374, 127
        %v613 = vpop.permute.xlu0 %612
        %614 = vrot.lane.b32.xlu0 %v375, 127
        %v615 = vpop.permute.xlu0 %614
        %616 = vrot.lane.b32.xlu0 %v376, 127
        %v617 = vpop.permute.xlu0 %616
        %v626 = vcombine.low %v603, %v611
        %v627 = vcombine.high %v603, %v611
        %v629 = vunpack.c.l.s4 1983009808
        %v630 = vunpack.c.0.s8 %v629
        %v631 = vlaneseq
        %v632 = vshrl.u32 %v631, 7
        %v633 = vsub.s32 %v630, %v632
        %v634 = vrot.slane %v626, %v633
        %v636 = vunpack.c.l.s4 1983009808
        %v637 = vunpack.c.0.s8 %v636
        %v638 = vlaneseq
        %v639 = vshrl.u32 %v638, 7
        %v640 = vsub.s32 %v637, %v639
        %v641 = vrot.slane %v627, %v640
        %v642 = vcombine.low %v607, %v615
        %v643 = vcombine.high %v607, %v615
        %v645 = vunpack.c.l.s4 1983009808
        %v646 = vunpack.c.0.s8 %v645
        %v647 = vlaneseq
        %v648 = vshrl.u32 %v647, 7
        %v649 = vsub.s32 %v646, %v648
        %v650 = vrot.slane %v642, %v649
        %v652 = vunpack.c.l.s4 1983009808
        %v653 = vunpack.c.0.s8 %v652
        %v654 = vlaneseq
        %v655 = vshrl.u32 %v654, 7
        %v656 = vsub.s32 %v653, %v655
        %v657 = vrot.slane %v643, %v656
        %v658 = vcombine.low %v634, %v650
        %v659 = vcombine.high %v634, %v650
        %v661 = vunpack.c.l.s4 1934713408
        %v662 = vunpack.c.0.s8 %v661
        %v663 = vlaneseq
        %v664 = vshrl.u32 %v663, 7
        %v665 = vsub.s32 %v662, %v664
        %v666 = vrot.slane %v658, %v665
        %v668 = vunpack.c.l.s4 1934713408
        %v669 = vunpack.c.0.s8 %v668
        %v670 = vlaneseq
        %v671 = vshrl.u32 %v670, 7
        %v672 = vsub.s32 %v669, %v671
        %v673 = vrot.slane %v659, %v672
        %v674 = vcombine.low %v641, %v657
        %v675 = vcombine.high %v641, %v657
        %v677 = vunpack.c.l.s4 1934713408
        %v678 = vunpack.c.0.s8 %v677
        %v679 = vlaneseq
        %v680 = vshrl.u32 %v679, 7
        %v681 = vsub.s32 %v678, %v680
        %v682 = vrot.slane %v674, %v681
        %v684 = vunpack.c.l.s4 1934713408
        %v685 = vunpack.c.0.s8 %v684
        %v686 = vlaneseq
        %v687 = vshrl.u32 %v686, 7
        %v688 = vsub.s32 %v685, %v687
        %v689 = vrot.slane %v675, %v688
        %v690 = vcombine.high %v666, 0.0
        %v691 = vcombine.high %v673, 0.0
        %v692 = vcombine.high %v682, 0.0
        %v693 = vcombine.high %v689, 0.0
        %v694 = vcombine.low %v605, %v613
        %v695 = vcombine.high %v605, %v613
        %v697 = vunpack.c.l.s4 1983009808
        %v698 = vunpack.c.0.s8 %v697
        %v699 = vlaneseq
        %v700 = vshrl.u32 %v699, 7
        %v701 = vsub.s32 %v698, %v700
        %v702 = vrot.slane %v694, %v701
        %v704 = vunpack.c.l.s4 1983009808
        %v705 = vunpack.c.0.s8 %v704
        %v706 = vlaneseq
        %v707 = vshrl.u32 %v706, 7
        %v708 = vsub.s32 %v705, %v707
        %v709 = vrot.slane %v695, %v708
        %v710 = vcombine.low %v609, %v617
        %v711 = vcombine.high %v609, %v617
        %v713 = vunpack.c.l.s4 1983009808
        %v714 = vunpack.c.0.s8 %v713
        %v715 = vlaneseq
        %v716 = vshrl.u32 %v715, 7
        %v717 = vsub.s32 %v714, %v716
        %v718 = vrot.slane %v710, %v717
        %v720 = vunpack.c.l.s4 1983009808
        %v721 = vunpack.c.0.s8 %v720
        %v722 = vlaneseq
        %v723 = vshrl.u32 %v722, 7
        %v724 = vsub.s32 %v721, %v723
        %v725 = vrot.slane %v711, %v724
        %v726 = vcombine.low %v702, %v718
        %v727 = vcombine.high %v702, %v718
        %v729 = vunpack.c.l.s4 1934713408
        %v730 = vunpack.c.0.s8 %v729
        %v731 = vlaneseq
        %v732 = vshrl.u32 %v731, 7
        %v733 = vsub.s32 %v730, %v732
        %v734 = vrot.slane %v726, %v733
        %v736 = vunpack.c.l.s4 1934713408
        %v737 = vunpack.c.0.s8 %v736
        %v738 = vlaneseq
        %v739 = vshrl.u32 %v738, 7
        %v740 = vsub.s32 %v737, %v739
        %v741 = vrot.slane %v727, %v740
        %v742 = vcombine.low %v709, %v725
        %v743 = vcombine.high %v709, %v725
        %v745 = vunpack.c.l.s4 1934713408
        %v746 = vunpack.c.0.s8 %v745
        %v747 = vlaneseq
        %v748 = vshrl.u32 %v747, 7
        %v749 = vsub.s32 %v746, %v748
        %v750 = vrot.slane %v742, %v749
        %v752 = vunpack.c.l.s4 1934713408
        %v753 = vunpack.c.0.s8 %v752
        %v754 = vlaneseq
        %v755 = vshrl.u32 %v754, 7
        %v756 = vsub.s32 %v753, %v755
        %v757 = vrot.slane %v743, %v756
        %v758 = vcombine.high %v734, 0.0
        %v759 = vcombine.high %v741, 0.0
        %v760 = vcombine.high %v750, 0.0
        %v761 = vcombine.high %v757, 0.0
        %763 = vrot.lane.b32.xlu0 %v690, 16
        %v764 = vpop.permute.xlu0 %763
        %767 = vrot.lane.b32.xlu0 %v673, 32
        %v768 = vpop.permute.xlu0 %767
        %771 = vrot.lane.b32.xlu0 %v691, 48
        %v772 = vpop.permute.xlu0 %771
        %775 = vrot.lane.b32.xlu0 %v682, 64
        %v776 = vpop.permute.xlu0 %775
        %779 = vrot.lane.b32.xlu0 %v692, 80
        %v780 = vpop.permute.xlu0 %779
        %783 = vrot.lane.b32.xlu0 %v689, 96
        %v784 = vpop.permute.xlu0 %783
        %787 = vrot.lane.b32.xlu0 %v693, 112
        %v788 = vpop.permute.xlu0 %787
        %791 = vrot.lane.b32.xlu0 %v758, 16
        %v792 = vpop.permute.xlu0 %791
        %795 = vrot.lane.b32.xlu0 %v741, 32
        %v796 = vpop.permute.xlu0 %795
        %799 = vrot.lane.b32.xlu0 %v759, 48
        %v800 = vpop.permute.xlu0 %799
        %803 = vrot.lane.b32.xlu0 %v750, 64
        %v804 = vpop.permute.xlu0 %803
        %807 = vrot.lane.b32.xlu0 %v760, 80
        %v808 = vpop.permute.xlu0 %807
        %811 = vrot.lane.b32.xlu0 %v757, 96
        %v812 = vpop.permute.xlu0 %811
        %815 = vrot.lane.b32.xlu0 %v761, 112
        %v816 = vpop.permute.xlu0 %815
        %v818 = vsel %vm573, %v666, %v764
        %v819 = vsel %vm575, %v818, %v768
        %v820 = vsel %vm577, %v819, %v772
        %v821 = vsel %vm579, %v820, %v776
        %v822 = vsel %vm581, %v821, %v780
        %v823 = vsel %vm583, %v822, %v784
        %v824 = vsel %vm585, %v823, %v788
        %v825 = vsel %vm573, %v734, %v792
        %v826 = vsel %vm575, %v825, %v796
        %v827 = vsel %vm577, %v826, %v800
        %v828 = vsel %vm579, %v827, %v804
        %v829 = vsel %vm581, %v828, %v808
        %v830 = vsel %vm583, %v829, %v812
        %v831 = vsel %vm585, %v830, %v816
        %832 = vrot.lane.b32.xlu0 %v369, 126
        %v833 = vpop.permute.xlu0 %832
        %834 = vrot.lane.b32.xlu0 %v370, 126
        %v835 = vpop.permute.xlu0 %834
        %836 = vrot.lane.b32.xlu0 %v371, 126
        %v837 = vpop.permute.xlu0 %836
        %838 = vrot.lane.b32.xlu0 %v372, 126
        %v839 = vpop.permute.xlu0 %838
        %840 = vrot.lane.b32.xlu0 %v373, 126
        %v841 = vpop.permute.xlu0 %840
        %842 = vrot.lane.b32.xlu0 %v374, 126
        %v843 = vpop.permute.xlu0 %842
        %844 = vrot.lane.b32.xlu0 %v375, 126
        %v845 = vpop.permute.xlu0 %844
        %846 = vrot.lane.b32.xlu0 %v376, 126
        %v847 = vpop.permute.xlu0 %846
        %v856 = vcombine.low %v833, %v841
        %v857 = vcombine.high %v833, %v841
        %v859 = vunpack.c.l.s4 1983009808
        %v860 = vunpack.c.0.s8 %v859
        %v861 = vlaneseq
        %v862 = vshrl.u32 %v861, 7
        %v863 = vsub.s32 %v860, %v862
        %v864 = vrot.slane %v856, %v863
        %v866 = vunpack.c.l.s4 1983009808
        %v867 = vunpack.c.0.s8 %v866
        %v868 = vlaneseq
        %v869 = vshrl.u32 %v868, 7
        %v870 = vsub.s32 %v867, %v869
        %v871 = vrot.slane %v857, %v870
        %v872 = vcombine.low %v837, %v845
        %v873 = vcombine.high %v837, %v845
        %v875 = vunpack.c.l.s4 1983009808
        %v876 = vunpack.c.0.s8 %v875
        %v877 = vlaneseq
        %v878 = vshrl.u32 %v877, 7
        %v879 = vsub.s32 %v876, %v878
        %v880 = vrot.slane %v872, %v879
        %v882 = vunpack.c.l.s4 1983009808
        %v883 = vunpack.c.0.s8 %v882
        %v884 = vlaneseq
        %v885 = vshrl.u32 %v884, 7
        %v886 = vsub.s32 %v883, %v885
        %v887 = vrot.slane %v873, %v886
        %v888 = vcombine.low %v864, %v880
        %v889 = vcombine.high %v864, %v880
        %v891 = vunpack.c.l.s4 1934713408
        %v892 = vunpack.c.0.s8 %v891
        %v893 = vlaneseq
        %v894 = vshrl.u32 %v893, 7
        %v895 = vsub.s32 %v892, %v894
        %v896 = vrot.slane %v888, %v895
        %v898 = vunpack.c.l.s4 1934713408
        %v899 = vunpack.c.0.s8 %v898
        %v900 = vlaneseq
        %v901 = vshrl.u32 %v900, 7
        %v902 = vsub.s32 %v899, %v901
        %v903 = vrot.slane %v889, %v902
        %v904 = vcombine.low %v871, %v887
        %v905 = vcombine.high %v871, %v887
        %v907 = vunpack.c.l.s4 1934713408
        %v908 = vunpack.c.0.s8 %v907
        %v909 = vlaneseq
        %v910 = vshrl.u32 %v909, 7
        %v911 = vsub.s32 %v908, %v910
        %v912 = vrot.slane %v904, %v911
        %v914 = vunpack.c.l.s4 1934713408
        %v915 = vunpack.c.0.s8 %v914
        %v916 = vlaneseq
        %v917 = vshrl.u32 %v916, 7
        %v918 = vsub.s32 %v915, %v917
        %v919 = vrot.slane %v905, %v918
        %v920 = vcombine.high %v896, 0.0
        %v921 = vcombine.high %v903, 0.0
        %v922 = vcombine.high %v912, 0.0
        %v923 = vcombine.high %v919, 0.0
        %v924 = vcombine.low %v835, %v843
        %v925 = vcombine.high %v835, %v843
        %v927 = vunpack.c.l.s4 1983009808
        %v928 = vunpack.c.0.s8 %v927
        %v929 = vlaneseq
        %v930 = vshrl.u32 %v929, 7
        %v931 = vsub.s32 %v928, %v930
        %v932 = vrot.slane %v924, %v931
        %v934 = vunpack.c.l.s4 1983009808
        %v935 = vunpack.c.0.s8 %v934
        %v936 = vlaneseq
        %v937 = vshrl.u32 %v936, 7
        %v938 = vsub.s32 %v935, %v937
        %v939 = vrot.slane %v925, %v938
        %v940 = vcombine.low %v839, %v847
        %v941 = vcombine.high %v839, %v847
        %v943 = vunpack.c.l.s4 1983009808
        %v944 = vunpack.c.0.s8 %v943
        %v945 = vlaneseq
        %v946 = vshrl.u32 %v945, 7
        %v947 = vsub.s32 %v944, %v946
        %v948 = vrot.slane %v940, %v947
        %v950 = vunpack.c.l.s4 1983009808
        %v951 = vunpack.c.0.s8 %v950
        %v952 = vlaneseq
        %v953 = vshrl.u32 %v952, 7
        %v954 = vsub.s32 %v951, %v953
        %v955 = vrot.slane %v941, %v954
        %v956 = vcombine.low %v932, %v948
        %v957 = vcombine.high %v932, %v948
        %v959 = vunpack.c.l.s4 1934713408
        %v960 = vunpack.c.0.s8 %v959
        %v961 = vlaneseq
        %v962 = vshrl.u32 %v961, 7
        %v963 = vsub.s32 %v960, %v962
        %v964 = vrot.slane %v956, %v963
        %v966 = vunpack.c.l.s4 1934713408
        %v967 = vunpack.c.0.s8 %v966
        %v968 = vlaneseq
        %v969 = vshrl.u32 %v968, 7
        %v970 = vsub.s32 %v967, %v969
        %v971 = vrot.slane %v957, %v970
        %v972 = vcombine.low %v939, %v955
        %v973 = vcombine.high %v939, %v955
        %v975 = vunpack.c.l.s4 1934713408
        %v976 = vunpack.c.0.s8 %v975
        %v977 = vlaneseq
        %v978 = vshrl.u32 %v977, 7
        %v979 = vsub.s32 %v976, %v978
        %v980 = vrot.slane %v972, %v979
        %v982 = vunpack.c.l.s4 1934713408
        %v983 = vunpack.c.0.s8 %v982
        %v984 = vlaneseq
        %v985 = vshrl.u32 %v984, 7
        %v986 = vsub.s32 %v983, %v985
        %v987 = vrot.slane %v973, %v986
        %v988 = vcombine.high %v964, 0.0
        %v989 = vcombine.high %v971, 0.0
        %v990 = vcombine.high %v980, 0.0
        %v991 = vcombine.high %v987, 0.0
        %993 = vrot.lane.b32.xlu0 %v920, 16
        %v994 = vpop.permute.xlu0 %993
        %997 = vrot.lane.b32.xlu0 %v903, 32
        %v998 = vpop.permute.xlu0 %997
        %1001 = vrot.lane.b32.xlu0 %v921, 48
        %v1002 = vpop.permute.xlu0 %1001
        %1005 = vrot.lane.b32.xlu0 %v912, 64
        %v1006 = vpop.permute.xlu0 %1005
        %1009 = vrot.lane.b32.xlu0 %v922, 80
        %v1010 = vpop.permute.xlu0 %1009
        %1013 = vrot.lane.b32.xlu0 %v919, 96
        %v1014 = vpop.permute.xlu0 %1013
        %1017 = vrot.lane.b32.xlu0 %v923, 112
        %v1018 = vpop.permute.xlu0 %1017
        %1021 = vrot.lane.b32.xlu0 %v988, 16
        %v1022 = vpop.permute.xlu0 %1021
        %1025 = vrot.lane.b32.xlu0 %v971, 32
        %v1026 = vpop.permute.xlu0 %1025
        %1029 = vrot.lane.b32.xlu0 %v989, 48
        %v1030 = vpop.permute.xlu0 %1029
        %1033 = vrot.lane.b32.xlu0 %v980, 64
        %v1034 = vpop.permute.xlu0 %1033
        %1037 = vrot.lane.b32.xlu0 %v990, 80
        %v1038 = vpop.permute.xlu0 %1037
        %1041 = vrot.lane.b32.xlu0 %v987, 96
        %v1042 = vpop.permute.xlu0 %1041
        %1045 = vrot.lane.b32.xlu0 %v991, 112
        %v1046 = vpop.permute.xlu0 %1045
        %v1048 = vsel %vm573, %v896, %v994
        %v1049 = vsel %vm575, %v1048, %v998
        %v1050 = vsel %vm577, %v1049, %v1002
        %v1051 = vsel %vm579, %v1050, %v1006
        %v1052 = vsel %vm581, %v1051, %v1010
        %v1053 = vsel %vm583, %v1052, %v1014
        %v1054 = vsel %vm585, %v1053, %v1018
        %v1055 = vsel %vm573, %v964, %v1022
        %v1056 = vsel %vm575, %v1055, %v1026
        %v1057 = vsel %vm577, %v1056, %v1030
        %v1058 = vsel %vm579, %v1057, %v1034
        %v1059 = vsel %vm581, %v1058, %v1038
        %v1060 = vsel %vm583, %v1059, %v1042
        %v1061 = vsel %vm585, %v1060, %v1046
        %vm1066 = vcmask 1046528
        %v1067 = vrot.slane %v369, 1
        %v1068 = vrot.slane %v370, 1
        %v1069 = vsel %vm1066, %v1067, %v1068
        %v1070 = vrot.slane %v377, 1
        %v1071 = vsel %vm1066, %v1068, %v1070
        %v1072 = vrot.slane %v371, 1
        %v1073 = vrot.slane %v372, 1
        %v1074 = vsel %vm1066, %v1072, %v1073
        %v1075 = vrot.slane %v378, 1
        %v1076 = vsel %vm1066, %v1073, %v1075
        %v1077 = vrot.slane %v373, 1
        %v1078 = vrot.slane %v374, 1
        %v1079 = vsel %vm1066, %v1077, %v1078
        %v1080 = vrot.slane %v379, 1
        %v1081 = vsel %vm1066, %v1078, %v1080
        %v1082 = vrot.slane %v375, 1
        %v1083 = vrot.slane %v376, 1
        %v1084 = vsel %vm1066, %v1082, %v1083
        %v1085 = vrot.slane %v380, 1
        %v1086 = vsel %vm1066, %v1083, %v1085
        %v1095 = vcombine.low %v1069, %v1079
        %v1096 = vcombine.high %v1069, %v1079
        %v1098 = vunpack.c.l.s4 1983009808
        %v1099 = vunpack.c.0.s8 %v1098
        %v1100 = vlaneseq
        %v1101 = vshrl.u32 %v1100, 7
        %v1102 = vsub.s32 %v1099, %v1101
        %v1103 = vrot.slane %v1095, %v1102
        %v1105 = vunpack.c.l.s4 1983009808
        %v1106 = vunpack.c.0.s8 %v1105
        %v1107 = vlaneseq
        %v1108 = vshrl.u32 %v1107, 7
        %v1109 = vsub.s32 %v1106, %v1108
        %v1110 = vrot.slane %v1096, %v1109
        %v1111 = vcombine.low %v1074, %v1084
        %v1112 = vcombine.high %v1074, %v1084
        %v1114 = vunpack.c.l.s4 1983009808
        %v1115 = vunpack.c.0.s8 %v1114
        %v1116 = vlaneseq
        %v1117 = vshrl.u32 %v1116, 7
        %v1118 = vsub.s32 %v1115, %v1117
        %v1119 = vrot.slane %v1111, %v1118
        %v1121 = vunpack.c.l.s4 1983009808
        %v1122 = vunpack.c.0.s8 %v1121
        %v1123 = vlaneseq
        %v1124 = vshrl.u32 %v1123, 7
        %v1125 = vsub.s32 %v1122, %v1124
        %v1126 = vrot.slane %v1112, %v1125
        %v1127 = vcombine.low %v1103, %v1119
        %v1128 = vcombine.high %v1103, %v1119
        %v1130 = vunpack.c.l.s4 1934713408
        %v1131 = vunpack.c.0.s8 %v1130
        %v1132 = vlaneseq
        %v1133 = vshrl.u32 %v1132, 7
        %v1134 = vsub.s32 %v1131, %v1133
        %v1135 = vrot.slane %v1127, %v1134
        %v1137 = vunpack.c.l.s4 1934713408
        %v1138 = vunpack.c.0.s8 %v1137
        %v1139 = vlaneseq
        %v1140 = vshrl.u32 %v1139, 7
        %v1141 = vsub.s32 %v1138, %v1140
        %v1142 = vrot.slane %v1128, %v1141
        %v1143 = vcombine.low %v1110, %v1126
        %v1144 = vcombine.high %v1110, %v1126
        %v1146 = vunpack.c.l.s4 1934713408
        %v1147 = vunpack.c.0.s8 %v1146
        %v1148 = vlaneseq
        %v1149 = vshrl.u32 %v1148, 7
        %v1150 = vsub.s32 %v1147, %v1149
        %v1151 = vrot.slane %v1143, %v1150
        %v1153 = vunpack.c.l.s4 1934713408
        %v1154 = vunpack.c.0.s8 %v1153
        %v1155 = vlaneseq
        %v1156 = vshrl.u32 %v1155, 7
        %v1157 = vsub.s32 %v1154, %v1156
        %v1158 = vrot.slane %v1144, %v1157
        %v1159 = vcombine.high %v1135, 0.0
        %v1160 = vcombine.high %v1142, 0.0
        %v1161 = vcombine.high %v1151, 0.0
        %v1162 = vcombine.high %v1158, 0.0
        %v1163 = vcombine.low %v1071, %v1081
        %v1164 = vcombine.high %v1071, %v1081
        %v1166 = vunpack.c.l.s4 1983009808
        %v1167 = vunpack.c.0.s8 %v1166
        %v1168 = vlaneseq
        %v1169 = vshrl.u32 %v1168, 7
        %v1170 = vsub.s32 %v1167, %v1169
        %v1171 = vrot.slane %v1163, %v1170
        %v1173 = vunpack.c.l.s4 1983009808
        %v1174 = vunpack.c.0.s8 %v1173
        %v1175 = vlaneseq
        %v1176 = vshrl.u32 %v1175, 7
        %v1177 = vsub.s32 %v1174, %v1176
        %v1178 = vrot.slane %v1164, %v1177
        %v1179 = vcombine.low %v1076, %v1086
        %v1180 = vcombine.high %v1076, %v1086
        %v1182 = vunpack.c.l.s4 1983009808
        %v1183 = vunpack.c.0.s8 %v1182
        %v1184 = vlaneseq
        %v1185 = vshrl.u32 %v1184, 7
        %v1186 = vsub.s32 %v1183, %v1185
        %v1187 = vrot.slane %v1179, %v1186
        %v1189 = vunpack.c.l.s4 1983009808
        %v1190 = vunpack.c.0.s8 %v1189
        %v1191 = vlaneseq
        %v1192 = vshrl.u32 %v1191, 7
        %v1193 = vsub.s32 %v1190, %v1192
        %v1194 = vrot.slane %v1180, %v1193
        %v1195 = vcombine.low %v1171, %v1187
        %v1196 = vcombine.high %v1171, %v1187
        %v1198 = vunpack.c.l.s4 1934713408
        %v1199 = vunpack.c.0.s8 %v1198
        %v1200 = vlaneseq
        %v1201 = vshrl.u32 %v1200, 7
        %v1202 = vsub.s32 %v1199, %v1201
        %v1203 = vrot.slane %v1195, %v1202
        %v1205 = vunpack.c.l.s4 1934713408
        %v1206 = vunpack.c.0.s8 %v1205
        %v1207 = vlaneseq
        %v1208 = vshrl.u32 %v1207, 7
        %v1209 = vsub.s32 %v1206, %v1208
        %v1210 = vrot.slane %v1196, %v1209
        %v1211 = vcombine.low %v1178, %v1194
        %v1212 = vcombine.high %v1178, %v1194
        %v1214 = vunpack.c.l.s4 1934713408
        %v1215 = vunpack.c.0.s8 %v1214
        %v1216 = vlaneseq
        %v1217 = vshrl.u32 %v1216, 7
        %v1218 = vsub.s32 %v1215, %v1217
        %v1219 = vrot.slane %v1211, %v1218
        %v1221 = vunpack.c.l.s4 1934713408
        %v1222 = vunpack.c.0.s8 %v1221
        %v1223 = vlaneseq
        %v1224 = vshrl.u32 %v1223, 7
        %v1225 = vsub.s32 %v1222, %v1224
        %v1226 = vrot.slane %v1212, %v1225
        %v1227 = vcombine.high %v1203, 0.0
        %v1228 = vcombine.high %v1210, 0.0
        %v1229 = vcombine.high %v1219, 0.0
        %v1230 = vcombine.high %v1226, 0.0
        %1232 = vrot.lane.b32.xlu0 %v1159, 16
        %v1233 = vpop.permute.xlu0 %1232
        %1236 = vrot.lane.b32.xlu0 %v1142, 32
        %v1237 = vpop.permute.xlu0 %1236
        %1240 = vrot.lane.b32.xlu0 %v1160, 48
        %v1241 = vpop.permute.xlu0 %1240
        %1244 = vrot.lane.b32.xlu0 %v1151, 64
        %v1245 = vpop.permute.xlu0 %1244
        %1248 = vrot.lane.b32.xlu0 %v1161, 80
        %v1249 = vpop.permute.xlu0 %1248
        %1252 = vrot.lane.b32.xlu0 %v1158, 96
        %v1253 = vpop.permute.xlu0 %1252
        %1256 = vrot.lane.b32.xlu0 %v1162, 112
        %v1257 = vpop.permute.xlu0 %1256
        %1260 = vrot.lane.b32.xlu0 %v1227, 16
        %v1261 = vpop.permute.xlu0 %1260
        %1264 = vrot.lane.b32.xlu0 %v1210, 32
        %v1265 = vpop.permute.xlu0 %1264
        %1268 = vrot.lane.b32.xlu0 %v1228, 48
        %v1269 = vpop.permute.xlu0 %1268
        %1272 = vrot.lane.b32.xlu0 %v1219, 64
        %v1273 = vpop.permute.xlu0 %1272
        %1276 = vrot.lane.b32.xlu0 %v1229, 80
        %v1277 = vpop.permute.xlu0 %1276
        %1280 = vrot.lane.b32.xlu0 %v1226, 96
        %v1281 = vpop.permute.xlu0 %1280
        %1284 = vrot.lane.b32.xlu0 %v1230, 112
        %v1285 = vpop.permute.xlu0 %1284
        %v1287 = vsel %vm573, %v1135, %v1233
        %v1288 = vsel %vm575, %v1287, %v1237
        %v1289 = vsel %vm577, %v1288, %v1241
        %v1290 = vsel %vm579, %v1289, %v1245
        %v1291 = vsel %vm581, %v1290, %v1249
        %v1292 = vsel %vm583, %v1291, %v1253
        %v1293 = vsel %vm585, %v1292, %v1257
        %v1294 = vsel %vm573, %v1203, %v1261
        %v1295 = vsel %vm575, %v1294, %v1265
        %v1296 = vsel %vm577, %v1295, %v1269
        %v1297 = vsel %vm579, %v1296, %v1273
        %v1298 = vsel %vm581, %v1297, %v1277
        %v1299 = vsel %vm583, %v1298, %v1281
        %v1300 = vsel %vm585, %v1299, %v1285
        %1301 = vrot.lane.b32.xlu0 %v1069, 127
        %v1302 = vpop.permute.xlu0 %1301
        %1303 = vrot.lane.b32.xlu0 %v1071, 127
        %v1304 = vpop.permute.xlu0 %1303
        %1305 = vrot.lane.b32.xlu0 %v1074, 127
        %v1306 = vpop.permute.xlu0 %1305
        %1307 = vrot.lane.b32.xlu0 %v1076, 127
        %v1308 = vpop.permute.xlu0 %1307
        %1309 = vrot.lane.b32.xlu0 %v1079, 127
        %v1310 = vpop.permute.xlu0 %1309
        %1311 = vrot.lane.b32.xlu0 %v1081, 127
        %v1312 = vpop.permute.xlu0 %1311
        %1313 = vrot.lane.b32.xlu0 %v1084, 127
        %v1314 = vpop.permute.xlu0 %1313
        %1315 = vrot.lane.b32.xlu0 %v1086, 127
        %v1316 = vpop.permute.xlu0 %1315
        %v1325 = vcombine.low %v1302, %v1310
        %v1326 = vcombine.high %v1302, %v1310
        %v1328 = vunpack.c.l.s4 1983009808
        %v1329 = vunpack.c.0.s8 %v1328
        %v1330 = vlaneseq
        %v1331 = vshrl.u32 %v1330, 7
        %v1332 = vsub.s32 %v1329, %v1331
        %v1333 = vrot.slane %v1325, %v1332
        %v1335 = vunpack.c.l.s4 1983009808
        %v1336 = vunpack.c.0.s8 %v1335
        %v1337 = vlaneseq
        %v1338 = vshrl.u32 %v1337, 7
        %v1339 = vsub.s32 %v1336, %v1338
        %v1340 = vrot.slane %v1326, %v1339
        %v1341 = vcombine.low %v1306, %v1314
        %v1342 = vcombine.high %v1306, %v1314
        %v1344 = vunpack.c.l.s4 1983009808
        %v1345 = vunpack.c.0.s8 %v1344
        %v1346 = vlaneseq
        %v1347 = vshrl.u32 %v1346, 7
        %v1348 = vsub.s32 %v1345, %v1347
        %v1349 = vrot.slane %v1341, %v1348
        %v1351 = vunpack.c.l.s4 1983009808
        %v1352 = vunpack.c.0.s8 %v1351
        %v1353 = vlaneseq
        %v1354 = vshrl.u32 %v1353, 7
        %v1355 = vsub.s32 %v1352, %v1354
        %v1356 = vrot.slane %v1342, %v1355
        %v1357 = vcombine.low %v1333, %v1349
        %v1358 = vcombine.high %v1333, %v1349
        %v1360 = vunpack.c.l.s4 1934713408
        %v1361 = vunpack.c.0.s8 %v1360
        %v1362 = vlaneseq
        %v1363 = vshrl.u32 %v1362, 7
        %v1364 = vsub.s32 %v1361, %v1363
        %v1365 = vrot.slane %v1357, %v1364
        %v1367 = vunpack.c.l.s4 1934713408
        %v1368 = vunpack.c.0.s8 %v1367
        %v1369 = vlaneseq
        %v1370 = vshrl.u32 %v1369, 7
        %v1371 = vsub.s32 %v1368, %v1370
        %v1372 = vrot.slane %v1358, %v1371
        %v1373 = vcombine.low %v1340, %v1356
        %v1374 = vcombine.high %v1340, %v1356
        %v1376 = vunpack.c.l.s4 1934713408
        %v1377 = vunpack.c.0.s8 %v1376
        %v1378 = vlaneseq
        %v1379 = vshrl.u32 %v1378, 7
        %v1380 = vsub.s32 %v1377, %v1379
        %v1381 = vrot.slane %v1373, %v1380
        %v1383 = vunpack.c.l.s4 1934713408
        %v1384 = vunpack.c.0.s8 %v1383
        %v1385 = vlaneseq
        %v1386 = vshrl.u32 %v1385, 7
        %v1387 = vsub.s32 %v1384, %v1386
        %v1388 = vrot.slane %v1374, %v1387
        %v1389 = vcombine.high %v1365, 0.0
        %v1390 = vcombine.high %v1372, 0.0
        %v1391 = vcombine.high %v1381, 0.0
        %v1392 = vcombine.high %v1388, 0.0
        %v1393 = vcombine.low %v1304, %v1312
        %v1394 = vcombine.high %v1304, %v1312
        %v1396 = vunpack.c.l.s4 1983009808
        %v1397 = vunpack.c.0.s8 %v1396
        %v1398 = vlaneseq
        %v1399 = vshrl.u32 %v1398, 7
        %v1400 = vsub.s32 %v1397, %v1399
        %v1401 = vrot.slane %v1393, %v1400
        %v1403 = vunpack.c.l.s4 1983009808
        %v1404 = vunpack.c.0.s8 %v1403
        %v1405 = vlaneseq
        %v1406 = vshrl.u32 %v1405, 7
        %v1407 = vsub.s32 %v1404, %v1406
        %v1408 = vrot.slane %v1394, %v1407
        %v1409 = vcombine.low %v1308, %v1316
        %v1410 = vcombine.high %v1308, %v1316
        %v1412 = vunpack.c.l.s4 1983009808
        %v1413 = vunpack.c.0.s8 %v1412
        %v1414 = vlaneseq
        %v1415 = vshrl.u32 %v1414, 7
        %v1416 = vsub.s32 %v1413, %v1415
        %v1417 = vrot.slane %v1409, %v1416
        %v1419 = vunpack.c.l.s4 1983009808
        %v1420 = vunpack.c.0.s8 %v1419
        %v1421 = vlaneseq
        %v1422 = vshrl.u32 %v1421, 7
        %v1423 = vsub.s32 %v1420, %v1422
        %v1424 = vrot.slane %v1410, %v1423
        %v1425 = vcombine.low %v1401, %v1417
        %v1426 = vcombine.high %v1401, %v1417
        %v1428 = vunpack.c.l.s4 1934713408
        %v1429 = vunpack.c.0.s8 %v1428
        %v1430 = vlaneseq
        %v1431 = vshrl.u32 %v1430, 7
        %v1432 = vsub.s32 %v1429, %v1431
        %v1433 = vrot.slane %v1425, %v1432
        %v1435 = vunpack.c.l.s4 1934713408
        %v1436 = vunpack.c.0.s8 %v1435
        %v1437 = vlaneseq
        %v1438 = vshrl.u32 %v1437, 7
        %v1439 = vsub.s32 %v1436, %v1438
        %v1440 = vrot.slane %v1426, %v1439
        %v1441 = vcombine.low %v1408, %v1424
        %v1442 = vcombine.high %v1408, %v1424
        %v1444 = vunpack.c.l.s4 1934713408
        %v1445 = vunpack.c.0.s8 %v1444
        %v1446 = vlaneseq
        %v1447 = vshrl.u32 %v1446, 7
        %v1448 = vsub.s32 %v1445, %v1447
        %v1449 = vrot.slane %v1441, %v1448
        %v1451 = vunpack.c.l.s4 1934713408
        %v1452 = vunpack.c.0.s8 %v1451
        %v1453 = vlaneseq
        %v1454 = vshrl.u32 %v1453, 7
        %v1455 = vsub.s32 %v1452, %v1454
        %v1456 = vrot.slane %v1442, %v1455
        %v1457 = vcombine.high %v1433, 0.0
        %v1458 = vcombine.high %v1440, 0.0
        %v1459 = vcombine.high %v1449, 0.0
        %v1460 = vcombine.high %v1456, 0.0
        %1462 = vrot.lane.b32.xlu0 %v1389, 16
        %v1463 = vpop.permute.xlu0 %1462
        %1466 = vrot.lane.b32.xlu0 %v1372, 32
        %v1467 = vpop.permute.xlu0 %1466
        %1470 = vrot.lane.b32.xlu0 %v1390, 48
        %v1471 = vpop.permute.xlu0 %1470
        %1474 = vrot.lane.b32.xlu0 %v1381, 64
        %v1475 = vpop.permute.xlu0 %1474
        %1478 = vrot.lane.b32.xlu0 %v1391, 80
        %v1479 = vpop.permute.xlu0 %1478
        %1482 = vrot.lane.b32.xlu0 %v1388, 96
        %v1483 = vpop.permute.xlu0 %1482
        %1486 = vrot.lane.b32.xlu0 %v1392, 112
        %v1487 = vpop.permute.xlu0 %1486
        %1490 = vrot.lane.b32.xlu0 %v1457, 16
        %v1491 = vpop.permute.xlu0 %1490
        %1494 = vrot.lane.b32.xlu0 %v1440, 32
        %v1495 = vpop.permute.xlu0 %1494
        %1498 = vrot.lane.b32.xlu0 %v1458, 48
        %v1499 = vpop.permute.xlu0 %1498
        %1502 = vrot.lane.b32.xlu0 %v1449, 64
        %v1503 = vpop.permute.xlu0 %1502
        %1506 = vrot.lane.b32.xlu0 %v1459, 80
        %v1507 = vpop.permute.xlu0 %1506
        %1510 = vrot.lane.b32.xlu0 %v1456, 96
        %v1511 = vpop.permute.xlu0 %1510
        %1514 = vrot.lane.b32.xlu0 %v1460, 112
        %v1515 = vpop.permute.xlu0 %1514
        %v1517 = vsel %vm573, %v1365, %v1463
        %v1518 = vsel %vm575, %v1517, %v1467
        %v1519 = vsel %vm577, %v1518, %v1471
        %v1520 = vsel %vm579, %v1519, %v1475
        %v1521 = vsel %vm581, %v1520, %v1479
        %v1522 = vsel %vm583, %v1521, %v1483
        %v1523 = vsel %vm585, %v1522, %v1487
        %v1524 = vsel %vm573, %v1433, %v1491
        %v1525 = vsel %vm575, %v1524, %v1495
        %v1526 = vsel %vm577, %v1525, %v1499
        %v1527 = vsel %vm579, %v1526, %v1503
        %v1528 = vsel %vm581, %v1527, %v1507
        %v1529 = vsel %vm583, %v1528, %v1511
        %v1530 = vsel %vm585, %v1529, %v1515
        %1531 = vrot.lane.b32.xlu0 %v1069, 126
        %v1532 = vpop.permute.xlu0 %1531
        %1533 = vrot.lane.b32.xlu0 %v1071, 126
        %v1534 = vpop.permute.xlu0 %1533
        %1535 = vrot.lane.b32.xlu0 %v1074, 126
        %v1536 = vpop.permute.xlu0 %1535
        %1537 = vrot.lane.b32.xlu0 %v1076, 126
        %v1538 = vpop.permute.xlu0 %1537
        %1539 = vrot.lane.b32.xlu0 %v1079, 126
        %v1540 = vpop.permute.xlu0 %1539
        %1541 = vrot.lane.b32.xlu0 %v1081, 126
        %v1542 = vpop.permute.xlu0 %1541
        %1543 = vrot.lane.b32.xlu0 %v1084, 126
        %v1544 = vpop.permute.xlu0 %1543
        %1545 = vrot.lane.b32.xlu0 %v1086, 126
        %v1546 = vpop.permute.xlu0 %1545
        %v1555 = vcombine.low %v1532, %v1540
        %v1556 = vcombine.high %v1532, %v1540
        %v1558 = vunpack.c.l.s4 1983009808
        %v1559 = vunpack.c.0.s8 %v1558
        %v1560 = vlaneseq
        %v1561 = vshrl.u32 %v1560, 7
        %v1562 = vsub.s32 %v1559, %v1561
        %v1563 = vrot.slane %v1555, %v1562
        %v1565 = vunpack.c.l.s4 1983009808
        %v1566 = vunpack.c.0.s8 %v1565
        %v1567 = vlaneseq
        %v1568 = vshrl.u32 %v1567, 7
        %v1569 = vsub.s32 %v1566, %v1568
        %v1570 = vrot.slane %v1556, %v1569
        %v1571 = vcombine.low %v1536, %v1544
        %v1572 = vcombine.high %v1536, %v1544
        %v1574 = vunpack.c.l.s4 1983009808
        %v1575 = vunpack.c.0.s8 %v1574
        %v1576 = vlaneseq
        %v1577 = vshrl.u32 %v1576, 7
        %v1578 = vsub.s32 %v1575, %v1577
        %v1579 = vrot.slane %v1571, %v1578
        %v1581 = vunpack.c.l.s4 1983009808
        %v1582 = vunpack.c.0.s8 %v1581
        %v1583 = vlaneseq
        %v1584 = vshrl.u32 %v1583, 7
        %v1585 = vsub.s32 %v1582, %v1584
        %v1586 = vrot.slane %v1572, %v1585
        %v1587 = vcombine.low %v1563, %v1579
        %v1588 = vcombine.high %v1563, %v1579
        %v1590 = vunpack.c.l.s4 1934713408
        %v1591 = vunpack.c.0.s8 %v1590
        %v1592 = vlaneseq
        %v1593 = vshrl.u32 %v1592, 7
        %v1594 = vsub.s32 %v1591, %v1593
        %v1595 = vrot.slane %v1587, %v1594
        %v1597 = vunpack.c.l.s4 1934713408
        %v1598 = vunpack.c.0.s8 %v1597
        %v1599 = vlaneseq
        %v1600 = vshrl.u32 %v1599, 7
        %v1601 = vsub.s32 %v1598, %v1600
        %v1602 = vrot.slane %v1588, %v1601
        %v1603 = vcombine.low %v1570, %v1586
        %v1604 = vcombine.high %v1570, %v1586
        %v1606 = vunpack.c.l.s4 1934713408
        %v1607 = vunpack.c.0.s8 %v1606
        %v1608 = vlaneseq
        %v1609 = vshrl.u32 %v1608, 7
        %v1610 = vsub.s32 %v1607, %v1609
        %v1611 = vrot.slane %v1603, %v1610
        %v1613 = vunpack.c.l.s4 1934713408
        %v1614 = vunpack.c.0.s8 %v1613
        %v1615 = vlaneseq
        %v1616 = vshrl.u32 %v1615, 7
        %v1617 = vsub.s32 %v1614, %v1616
        %v1618 = vrot.slane %v1604, %v1617
        %v1619 = vcombine.high %v1595, 0.0
        %v1620 = vcombine.high %v1602, 0.0
        %v1621 = vcombine.high %v1611, 0.0
        %v1622 = vcombine.high %v1618, 0.0
        %v1623 = vcombine.low %v1534, %v1542
        %v1624 = vcombine.high %v1534, %v1542
        %v1626 = vunpack.c.l.s4 1983009808
        %v1627 = vunpack.c.0.s8 %v1626
        %v1628 = vlaneseq
        %v1629 = vshrl.u32 %v1628, 7
        %v1630 = vsub.s32 %v1627, %v1629
        %v1631 = vrot.slane %v1623, %v1630
        %v1633 = vunpack.c.l.s4 1983009808
        %v1634 = vunpack.c.0.s8 %v1633
        %v1635 = vlaneseq
        %v1636 = vshrl.u32 %v1635, 7
        %v1637 = vsub.s32 %v1634, %v1636
        %v1638 = vrot.slane %v1624, %v1637
        %v1639 = vcombine.low %v1538, %v1546
        %v1640 = vcombine.high %v1538, %v1546
        %v1642 = vunpack.c.l.s4 1983009808
        %v1643 = vunpack.c.0.s8 %v1642
        %v1644 = vlaneseq
        %v1645 = vshrl.u32 %v1644, 7
        %v1646 = vsub.s32 %v1643, %v1645
        %v1647 = vrot.slane %v1639, %v1646
        %v1649 = vunpack.c.l.s4 1983009808
        %v1650 = vunpack.c.0.s8 %v1649
        %v1651 = vlaneseq
        %v1652 = vshrl.u32 %v1651, 7
        %v1653 = vsub.s32 %v1650, %v1652
        %v1654 = vrot.slane %v1640, %v1653
        %v1655 = vcombine.low %v1631, %v1647
        %v1656 = vcombine.high %v1631, %v1647
        %v1658 = vunpack.c.l.s4 1934713408
        %v1659 = vunpack.c.0.s8 %v1658
        %v1660 = vlaneseq
        %v1661 = vshrl.u32 %v1660, 7
        %v1662 = vsub.s32 %v1659, %v1661
        %v1663 = vrot.slane %v1655, %v1662
        %v1665 = vunpack.c.l.s4 1934713408
        %v1666 = vunpack.c.0.s8 %v1665
        %v1667 = vlaneseq
        %v1668 = vshrl.u32 %v1667, 7
        %v1669 = vsub.s32 %v1666, %v1668
        %v1670 = vrot.slane %v1656, %v1669
        %v1671 = vcombine.low %v1638, %v1654
        %v1672 = vcombine.high %v1638, %v1654
        %v1674 = vunpack.c.l.s4 1934713408
        %v1675 = vunpack.c.0.s8 %v1674
        %v1676 = vlaneseq
        %v1677 = vshrl.u32 %v1676, 7
        %v1678 = vsub.s32 %v1675, %v1677
        %v1679 = vrot.slane %v1671, %v1678
        %v1681 = vunpack.c.l.s4 1934713408
        %v1682 = vunpack.c.0.s8 %v1681
        %v1683 = vlaneseq
        %v1684 = vshrl.u32 %v1683, 7
        %v1685 = vsub.s32 %v1682, %v1684
        %v1686 = vrot.slane %v1672, %v1685
        %v1687 = vcombine.high %v1663, 0.0
        %v1688 = vcombine.high %v1670, 0.0
        %v1689 = vcombine.high %v1679, 0.0
        %v1690 = vcombine.high %v1686, 0.0
        %1692 = vrot.lane.b32.xlu0 %v1619, 16
        %v1693 = vpop.permute.xlu0 %1692
        %1696 = vrot.lane.b32.xlu0 %v1602, 32
        %v1697 = vpop.permute.xlu0 %1696
        %1700 = vrot.lane.b32.xlu0 %v1620, 48
        %v1701 = vpop.permute.xlu0 %1700
        %1704 = vrot.lane.b32.xlu0 %v1611, 64
        %v1705 = vpop.permute.xlu0 %1704
        %1708 = vrot.lane.b32.xlu0 %v1621, 80
        %v1709 = vpop.permute.xlu0 %1708
        %1712 = vrot.lane.b32.xlu0 %v1618, 96
        %v1713 = vpop.permute.xlu0 %1712
        %1716 = vrot.lane.b32.xlu0 %v1622, 112
        %v1717 = vpop.permute.xlu0 %1716
        %1720 = vrot.lane.b32.xlu0 %v1687, 16
        %v1721 = vpop.permute.xlu0 %1720
        %1724 = vrot.lane.b32.xlu0 %v1670, 32
        %v1725 = vpop.permute.xlu0 %1724
        %1728 = vrot.lane.b32.xlu0 %v1688, 48
        %v1729 = vpop.permute.xlu0 %1728
        %1732 = vrot.lane.b32.xlu0 %v1679, 64
        %v1733 = vpop.permute.xlu0 %1732
        %1736 = vrot.lane.b32.xlu0 %v1689, 80
        %v1737 = vpop.permute.xlu0 %1736
        %1740 = vrot.lane.b32.xlu0 %v1686, 96
        %v1741 = vpop.permute.xlu0 %1740
        %1744 = vrot.lane.b32.xlu0 %v1690, 112
        %v1745 = vpop.permute.xlu0 %1744
        %v1747 = vsel %vm573, %v1595, %v1693
        %v1748 = vsel %vm575, %v1747, %v1697
        %v1749 = vsel %vm577, %v1748, %v1701
        %v1750 = vsel %vm579, %v1749, %v1705
        %v1751 = vsel %vm581, %v1750, %v1709
        %v1752 = vsel %vm583, %v1751, %v1713
        %v1753 = vsel %vm585, %v1752, %v1717
        %v1754 = vsel %vm573, %v1663, %v1721
        %v1755 = vsel %vm575, %v1754, %v1725
        %v1756 = vsel %vm577, %v1755, %v1729
        %v1757 = vsel %vm579, %v1756, %v1733
        %v1758 = vsel %vm581, %v1757, %v1737
        %v1759 = vsel %vm583, %v1758, %v1741
        %v1760 = vsel %vm585, %v1759, %v1745
        %vm1761 = vcmask 1045504
        %v1762 = vrot.slane %v369, 2
        %v1763 = vrot.slane %v370, 2
        %v1764 = vsel %vm1761, %v1762, %v1763
        %v1765 = vrot.slane %v377, 2
        %v1766 = vsel %vm1761, %v1763, %v1765
        %v1767 = vrot.slane %v371, 2
        %v1768 = vrot.slane %v372, 2
        %v1769 = vsel %vm1761, %v1767, %v1768
        %v1770 = vrot.slane %v378, 2
        %v1771 = vsel %vm1761, %v1768, %v1770
        %v1772 = vrot.slane %v373, 2
        %v1773 = vrot.slane %v374, 2
        %v1774 = vsel %vm1761, %v1772, %v1773
        %v1775 = vrot.slane %v379, 2
        %v1776 = vsel %vm1761, %v1773, %v1775
        %v1777 = vrot.slane %v375, 2
        %v1778 = vrot.slane %v376, 2
        %v1779 = vsel %vm1761, %v1777, %v1778
        %v1780 = vrot.slane %v380, 2
        %v1781 = vsel %vm1761, %v1778, %v1780
        %v1790 = vcombine.low %v1764, %v1774
        %v1791 = vcombine.high %v1764, %v1774
        %v1793 = vunpack.c.l.s4 1983009808
        %v1794 = vunpack.c.0.s8 %v1793
        %v1795 = vlaneseq
        %v1796 = vshrl.u32 %v1795, 7
        %v1797 = vsub.s32 %v1794, %v1796
        %v1798 = vrot.slane %v1790, %v1797
        %v1800 = vunpack.c.l.s4 1983009808
        %v1801 = vunpack.c.0.s8 %v1800
        %v1802 = vlaneseq
        %v1803 = vshrl.u32 %v1802, 7
        %v1804 = vsub.s32 %v1801, %v1803
        %v1805 = vrot.slane %v1791, %v1804
        %v1806 = vcombine.low %v1769, %v1779
        %v1807 = vcombine.high %v1769, %v1779
        %v1809 = vunpack.c.l.s4 1983009808
        %v1810 = vunpack.c.0.s8 %v1809
        %v1811 = vlaneseq
        %v1812 = vshrl.u32 %v1811, 7
        %v1813 = vsub.s32 %v1810, %v1812
        %v1814 = vrot.slane %v1806, %v1813
        %v1816 = vunpack.c.l.s4 1983009808
        %v1817 = vunpack.c.0.s8 %v1816
        %v1818 = vlaneseq
        %v1819 = vshrl.u32 %v1818, 7
        %v1820 = vsub.s32 %v1817, %v1819
        %v1821 = vrot.slane %v1807, %v1820
        %v1822 = vcombine.low %v1798, %v1814
        %v1823 = vcombine.high %v1798, %v1814
        %v1825 = vunpack.c.l.s4 1934713408
        %v1826 = vunpack.c.0.s8 %v1825
        %v1827 = vlaneseq
        %v1828 = vshrl.u32 %v1827, 7
        %v1829 = vsub.s32 %v1826, %v1828
        %v1830 = vrot.slane %v1822, %v1829
        %v1832 = vunpack.c.l.s4 1934713408
        %v1833 = vunpack.c.0.s8 %v1832
        %v1834 = vlaneseq
        %v1835 = vshrl.u32 %v1834, 7
        %v1836 = vsub.s32 %v1833, %v1835
        %v1837 = vrot.slane %v1823, %v1836
        %v1838 = vcombine.low %v1805, %v1821
        %v1839 = vcombine.high %v1805, %v1821
        %v1841 = vunpack.c.l.s4 1934713408
        %v1842 = vunpack.c.0.s8 %v1841
        %v1843 = vlaneseq
        %v1844 = vshrl.u32 %v1843, 7
        %v1845 = vsub.s32 %v1842, %v1844
        %v1846 = vrot.slane %v1838, %v1845
        %v1848 = vunpack.c.l.s4 1934713408
        %v1849 = vunpack.c.0.s8 %v1848
        %v1850 = vlaneseq
        %v1851 = vshrl.u32 %v1850, 7
        %v1852 = vsub.s32 %v1849, %v1851
        %v1853 = vrot.slane %v1839, %v1852
        %v1854 = vcombine.high %v1830, 0.0
        %v1855 = vcombine.high %v1837, 0.0
        %v1856 = vcombine.high %v1846, 0.0
        %v1857 = vcombine.high %v1853, 0.0
        %v1858 = vcombine.low %v1766, %v1776
        %v1859 = vcombine.high %v1766, %v1776
        %v1861 = vunpack.c.l.s4 1983009808
        %v1862 = vunpack.c.0.s8 %v1861
        %v1863 = vlaneseq
        %v1864 = vshrl.u32 %v1863, 7
        %v1865 = vsub.s32 %v1862, %v1864
        %v1866 = vrot.slane %v1858, %v1865
        %v1868 = vunpack.c.l.s4 1983009808
        %v1869 = vunpack.c.0.s8 %v1868
        %v1870 = vlaneseq
        %v1871 = vshrl.u32 %v1870, 7
        %v1872 = vsub.s32 %v1869, %v1871
        %v1873 = vrot.slane %v1859, %v1872
        %v1874 = vcombine.low %v1771, %v1781
        %v1875 = vcombine.high %v1771, %v1781
        %v1877 = vunpack.c.l.s4 1983009808
        %v1878 = vunpack.c.0.s8 %v1877
        %v1879 = vlaneseq
        %v1880 = vshrl.u32 %v1879, 7
        %v1881 = vsub.s32 %v1878, %v1880
        %v1882 = vrot.slane %v1874, %v1881
        %v1884 = vunpack.c.l.s4 1983009808
        %v1885 = vunpack.c.0.s8 %v1884
        %v1886 = vlaneseq
        %v1887 = vshrl.u32 %v1886, 7
        %v1888 = vsub.s32 %v1885, %v1887
        %v1889 = vrot.slane %v1875, %v1888
        %v1890 = vcombine.low %v1866, %v1882
        %v1891 = vcombine.high %v1866, %v1882
        %v1893 = vunpack.c.l.s4 1934713408
        %v1894 = vunpack.c.0.s8 %v1893
        %v1895 = vlaneseq
        %v1896 = vshrl.u32 %v1895, 7
        %v1897 = vsub.s32 %v1894, %v1896
        %v1898 = vrot.slane %v1890, %v1897
        %v1900 = vunpack.c.l.s4 1934713408
        %v1901 = vunpack.c.0.s8 %v1900
        %v1902 = vlaneseq
        %v1903 = vshrl.u32 %v1902, 7
        %v1904 = vsub.s32 %v1901, %v1903
        %v1905 = vrot.slane %v1891, %v1904
        %v1906 = vcombine.low %v1873, %v1889
        %v1907 = vcombine.high %v1873, %v1889
        %v1909 = vunpack.c.l.s4 1934713408
        %v1910 = vunpack.c.0.s8 %v1909
        %v1911 = vlaneseq
        %v1912 = vshrl.u32 %v1911, 7
        %v1913 = vsub.s32 %v1910, %v1912
        %v1914 = vrot.slane %v1906, %v1913
        %v1916 = vunpack.c.l.s4 1934713408
        %v1917 = vunpack.c.0.s8 %v1916
        %v1918 = vlaneseq
        %v1919 = vshrl.u32 %v1918, 7
        %v1920 = vsub.s32 %v1917, %v1919
        %v1921 = vrot.slane %v1907, %v1920
        %v1922 = vcombine.high %v1898, 0.0
        %v1923 = vcombine.high %v1905, 0.0
        %v1924 = vcombine.high %v1914, 0.0
        %v1925 = vcombine.high %v1921, 0.0
        %1927 = vrot.lane.b32.xlu0 %v1854, 16
        %v1928 = vpop.permute.xlu0 %1927
        %1931 = vrot.lane.b32.xlu0 %v1837, 32
        %v1932 = vpop.permute.xlu0 %1931
        %1935 = vrot.lane.b32.xlu0 %v1855, 48
        %v1936 = vpop.permute.xlu0 %1935
        %1939 = vrot.lane.b32.xlu0 %v1846, 64
        %v1940 = vpop.permute.xlu0 %1939
        %1943 = vrot.lane.b32.xlu0 %v1856, 80
        %v1944 = vpop.permute.xlu0 %1943
        %1947 = vrot.lane.b32.xlu0 %v1853, 96
        %v1948 = vpop.permute.xlu0 %1947
        %1951 = vrot.lane.b32.xlu0 %v1857, 112
        %v1952 = vpop.permute.xlu0 %1951
        %1955 = vrot.lane.b32.xlu0 %v1922, 16
        %v1956 = vpop.permute.xlu0 %1955
        %1959 = vrot.lane.b32.xlu0 %v1905, 32
        %v1960 = vpop.permute.xlu0 %1959
        %1963 = vrot.lane.b32.xlu0 %v1923, 48
        %v1964 = vpop.permute.xlu0 %1963
        %1967 = vrot.lane.b32.xlu0 %v1914, 64
        %v1968 = vpop.permute.xlu0 %1967
        %1971 = vrot.lane.b32.xlu0 %v1924, 80
        %v1972 = vpop.permute.xlu0 %1971
        %1975 = vrot.lane.b32.xlu0 %v1921, 96
        %v1976 = vpop.permute.xlu0 %1975
        %1979 = vrot.lane.b32.xlu0 %v1925, 112
        %v1980 = vpop.permute.xlu0 %1979
        %v1982 = vsel %vm573, %v1830, %v1928
        %v1983 = vsel %vm575, %v1982, %v1932
        %v1984 = vsel %vm577, %v1983, %v1936
        %v1985 = vsel %vm579, %v1984, %v1940
        %v1986 = vsel %vm581, %v1985, %v1944
        %v1987 = vsel %vm583, %v1986, %v1948
        %v1988 = vsel %vm585, %v1987, %v1952
        %v1989 = vsel %vm573, %v1898, %v1956
        %v1990 = vsel %vm575, %v1989, %v1960
        %v1991 = vsel %vm577, %v1990, %v1964
        %v1992 = vsel %vm579, %v1991, %v1968
        %v1993 = vsel %vm581, %v1992, %v1972
        %v1994 = vsel %vm583, %v1993, %v1976
        %v1995 = vsel %vm585, %v1994, %v1980
        %1996 = vrot.lane.b32.xlu0 %v1764, 127
        %v1997 = vpop.permute.xlu0 %1996
        %1998 = vrot.lane.b32.xlu0 %v1766, 127
        %v1999 = vpop.permute.xlu0 %1998
        %2000 = vrot.lane.b32.xlu0 %v1769, 127
        %v2001 = vpop.permute.xlu0 %2000
        %2002 = vrot.lane.b32.xlu0 %v1771, 127
        %v2003 = vpop.permute.xlu0 %2002
        %2004 = vrot.lane.b32.xlu0 %v1774, 127
        %v2005 = vpop.permute.xlu0 %2004
        %2006 = vrot.lane.b32.xlu0 %v1776, 127
        %v2007 = vpop.permute.xlu0 %2006
        %2008 = vrot.lane.b32.xlu0 %v1779, 127
        %v2009 = vpop.permute.xlu0 %2008
        %2010 = vrot.lane.b32.xlu0 %v1781, 127
        %v2011 = vpop.permute.xlu0 %2010
        %v2020 = vcombine.low %v1997, %v2005
        %v2021 = vcombine.high %v1997, %v2005
        %v2023 = vunpack.c.l.s4 1983009808
        %v2024 = vunpack.c.0.s8 %v2023
        %v2025 = vlaneseq
        %v2026 = vshrl.u32 %v2025, 7
        %v2027 = vsub.s32 %v2024, %v2026
        %v2028 = vrot.slane %v2020, %v2027
        %v2030 = vunpack.c.l.s4 1983009808
        %v2031 = vunpack.c.0.s8 %v2030
        %v2032 = vlaneseq
        %v2033 = vshrl.u32 %v2032, 7
        %v2034 = vsub.s32 %v2031, %v2033
        %v2035 = vrot.slane %v2021, %v2034
        %v2036 = vcombine.low %v2001, %v2009
        %v2037 = vcombine.high %v2001, %v2009
        %v2039 = vunpack.c.l.s4 1983009808
        %v2040 = vunpack.c.0.s8 %v2039
        %v2041 = vlaneseq
        %v2042 = vshrl.u32 %v2041, 7
        %v2043 = vsub.s32 %v2040, %v2042
        %v2044 = vrot.slane %v2036, %v2043
        %v2046 = vunpack.c.l.s4 1983009808
        %v2047 = vunpack.c.0.s8 %v2046
        %v2048 = vlaneseq
        %v2049 = vshrl.u32 %v2048, 7
        %v2050 = vsub.s32 %v2047, %v2049
        %v2051 = vrot.slane %v2037, %v2050
        %v2052 = vcombine.low %v2028, %v2044
        %v2053 = vcombine.high %v2028, %v2044
        %v2055 = vunpack.c.l.s4 1934713408
        %v2056 = vunpack.c.0.s8 %v2055
        %v2057 = vlaneseq
        %v2058 = vshrl.u32 %v2057, 7
        %v2059 = vsub.s32 %v2056, %v2058
        %v2060 = vrot.slane %v2052, %v2059
        %v2062 = vunpack.c.l.s4 1934713408
        %v2063 = vunpack.c.0.s8 %v2062
        %v2064 = vlaneseq
        %v2065 = vshrl.u32 %v2064, 7
        %v2066 = vsub.s32 %v2063, %v2065
        %v2067 = vrot.slane %v2053, %v2066
        %v2068 = vcombine.low %v2035, %v2051
        %v2069 = vcombine.high %v2035, %v2051
        %v2071 = vunpack.c.l.s4 1934713408
        %v2072 = vunpack.c.0.s8 %v2071
        %v2073 = vlaneseq
        %v2074 = vshrl.u32 %v2073, 7
        %v2075 = vsub.s32 %v2072, %v2074
        %v2076 = vrot.slane %v2068, %v2075
        %v2078 = vunpack.c.l.s4 1934713408
        %v2079 = vunpack.c.0.s8 %v2078
        %v2080 = vlaneseq
        %v2081 = vshrl.u32 %v2080, 7
        %v2082 = vsub.s32 %v2079, %v2081
        %v2083 = vrot.slane %v2069, %v2082
        %v2084 = vcombine.high %v2060, 0.0
        %v2085 = vcombine.high %v2067, 0.0
        %v2086 = vcombine.high %v2076, 0.0
        %v2087 = vcombine.high %v2083, 0.0
        %v2088 = vcombine.low %v1999, %v2007
        %v2089 = vcombine.high %v1999, %v2007
        %v2091 = vunpack.c.l.s4 1983009808
        %v2092 = vunpack.c.0.s8 %v2091
        %v2093 = vlaneseq
        %v2094 = vshrl.u32 %v2093, 7
        %v2095 = vsub.s32 %v2092, %v2094
        %v2096 = vrot.slane %v2088, %v2095
        %v2098 = vunpack.c.l.s4 1983009808
        %v2099 = vunpack.c.0.s8 %v2098
        %v2100 = vlaneseq
        %v2101 = vshrl.u32 %v2100, 7
        %v2102 = vsub.s32 %v2099, %v2101
        %v2103 = vrot.slane %v2089, %v2102
        %v2104 = vcombine.low %v2003, %v2011
        %v2105 = vcombine.high %v2003, %v2011
        %v2107 = vunpack.c.l.s4 1983009808
        %v2108 = vunpack.c.0.s8 %v2107
        %v2109 = vlaneseq
        %v2110 = vshrl.u32 %v2109, 7
        %v2111 = vsub.s32 %v2108, %v2110
        %v2112 = vrot.slane %v2104, %v2111
        %v2114 = vunpack.c.l.s4 1983009808
        %v2115 = vunpack.c.0.s8 %v2114
        %v2116 = vlaneseq
        %v2117 = vshrl.u32 %v2116, 7
        %v2118 = vsub.s32 %v2115, %v2117
        %v2119 = vrot.slane %v2105, %v2118
        %v2120 = vcombine.low %v2096, %v2112
        %v2121 = vcombine.high %v2096, %v2112
        %v2123 = vunpack.c.l.s4 1934713408
        %v2124 = vunpack.c.0.s8 %v2123
        %v2125 = vlaneseq
        %v2126 = vshrl.u32 %v2125, 7
        %v2127 = vsub.s32 %v2124, %v2126
        %v2128 = vrot.slane %v2120, %v2127
        %v2130 = vunpack.c.l.s4 1934713408
        %v2131 = vunpack.c.0.s8 %v2130
        %v2132 = vlaneseq
        %v2133 = vshrl.u32 %v2132, 7
        %v2134 = vsub.s32 %v2131, %v2133
        %v2135 = vrot.slane %v2121, %v2134
        %v2136 = vcombine.low %v2103, %v2119
        %v2137 = vcombine.high %v2103, %v2119
        %v2139 = vunpack.c.l.s4 1934713408
        %v2140 = vunpack.c.0.s8 %v2139
        %v2141 = vlaneseq
        %v2142 = vshrl.u32 %v2141, 7
        %v2143 = vsub.s32 %v2140, %v2142
        %v2144 = vrot.slane %v2136, %v2143
        %v2146 = vunpack.c.l.s4 1934713408
        %v2147 = vunpack.c.0.s8 %v2146
        %v2148 = vlaneseq
        %v2149 = vshrl.u32 %v2148, 7
        %v2150 = vsub.s32 %v2147, %v2149
        %v2151 = vrot.slane %v2137, %v2150
        %v2152 = vcombine.high %v2128, 0.0
        %v2153 = vcombine.high %v2135, 0.0
        %v2154 = vcombine.high %v2144, 0.0
        %v2155 = vcombine.high %v2151, 0.0
        %2157 = vrot.lane.b32.xlu0 %v2084, 16
        %v2158 = vpop.permute.xlu0 %2157
        %2161 = vrot.lane.b32.xlu0 %v2067, 32
        %v2162 = vpop.permute.xlu0 %2161
        %2165 = vrot.lane.b32.xlu0 %v2085, 48
        %v2166 = vpop.permute.xlu0 %2165
        %2169 = vrot.lane.b32.xlu0 %v2076, 64
        %v2170 = vpop.permute.xlu0 %2169
        %2173 = vrot.lane.b32.xlu0 %v2086, 80
        %v2174 = vpop.permute.xlu0 %2173
        %2177 = vrot.lane.b32.xlu0 %v2083, 96
        %v2178 = vpop.permute.xlu0 %2177
        %2181 = vrot.lane.b32.xlu0 %v2087, 112
        %v2182 = vpop.permute.xlu0 %2181
        %2185 = vrot.lane.b32.xlu0 %v2152, 16
        %v2186 = vpop.permute.xlu0 %2185
        %2189 = vrot.lane.b32.xlu0 %v2135, 32
        %v2190 = vpop.permute.xlu0 %2189
        %2193 = vrot.lane.b32.xlu0 %v2153, 48
        %v2194 = vpop.permute.xlu0 %2193
        %2197 = vrot.lane.b32.xlu0 %v2144, 64
        %v2198 = vpop.permute.xlu0 %2197
        %2201 = vrot.lane.b32.xlu0 %v2154, 80
        %v2202 = vpop.permute.xlu0 %2201
        %2205 = vrot.lane.b32.xlu0 %v2151, 96
        %v2206 = vpop.permute.xlu0 %2205
        %2209 = vrot.lane.b32.xlu0 %v2155, 112
        %v2210 = vpop.permute.xlu0 %2209
        %v2212 = vsel %vm573, %v2060, %v2158
        %v2213 = vsel %vm575, %v2212, %v2162
        %v2214 = vsel %vm577, %v2213, %v2166
        %v2215 = vsel %vm579, %v2214, %v2170
        %v2216 = vsel %vm581, %v2215, %v2174
        %v2217 = vsel %vm583, %v2216, %v2178
        %v2218 = vsel %vm585, %v2217, %v2182
        %v2219 = vsel %vm573, %v2128, %v2186
        %v2220 = vsel %vm575, %v2219, %v2190
        %v2221 = vsel %vm577, %v2220, %v2194
        %v2222 = vsel %vm579, %v2221, %v2198
        %v2223 = vsel %vm581, %v2222, %v2202
        %v2224 = vsel %vm583, %v2223, %v2206
        %v2225 = vsel %vm585, %v2224, %v2210
        %2226 = vrot.lane.b32.xlu0 %v1764, 126
        %v2227 = vpop.permute.xlu0 %2226
        %2228 = vrot.lane.b32.xlu0 %v1766, 126
        %v2229 = vpop.permute.xlu0 %2228
        %2230 = vrot.lane.b32.xlu0 %v1769, 126
        %v2231 = vpop.permute.xlu0 %2230
        %2232 = vrot.lane.b32.xlu0 %v1771, 126
        %v2233 = vpop.permute.xlu0 %2232
        %2234 = vrot.lane.b32.xlu0 %v1774, 126
        %v2235 = vpop.permute.xlu0 %2234
        %2236 = vrot.lane.b32.xlu0 %v1776, 126
        %v2237 = vpop.permute.xlu0 %2236
        %2238 = vrot.lane.b32.xlu0 %v1779, 126
        %v2239 = vpop.permute.xlu0 %2238
        %2240 = vrot.lane.b32.xlu0 %v1781, 126
        %v2241 = vpop.permute.xlu0 %2240
        %v2250 = vcombine.low %v2227, %v2235
        %v2251 = vcombine.high %v2227, %v2235
        %v2253 = vunpack.c.l.s4 1983009808
        %v2254 = vunpack.c.0.s8 %v2253
        %v2255 = vlaneseq
        %v2256 = vshrl.u32 %v2255, 7
        %v2257 = vsub.s32 %v2254, %v2256
        %v2258 = vrot.slane %v2250, %v2257
        %v2260 = vunpack.c.l.s4 1983009808
        %v2261 = vunpack.c.0.s8 %v2260
        %v2262 = vlaneseq
        %v2263 = vshrl.u32 %v2262, 7
        %v2264 = vsub.s32 %v2261, %v2263
        %v2265 = vrot.slane %v2251, %v2264
        %v2266 = vcombine.low %v2231, %v2239
        %v2267 = vcombine.high %v2231, %v2239
        %v2269 = vunpack.c.l.s4 1983009808
        %v2270 = vunpack.c.0.s8 %v2269
        %v2271 = vlaneseq
        %v2272 = vshrl.u32 %v2271, 7
        %v2273 = vsub.s32 %v2270, %v2272
        %v2274 = vrot.slane %v2266, %v2273
        %v2276 = vunpack.c.l.s4 1983009808
        %v2277 = vunpack.c.0.s8 %v2276
        %v2278 = vlaneseq
        %v2279 = vshrl.u32 %v2278, 7
        %v2280 = vsub.s32 %v2277, %v2279
        %v2281 = vrot.slane %v2267, %v2280
        %v2282 = vcombine.low %v2258, %v2274
        %v2283 = vcombine.high %v2258, %v2274
        %v2285 = vunpack.c.l.s4 1934713408
        %v2286 = vunpack.c.0.s8 %v2285
        %v2287 = vlaneseq
        %v2288 = vshrl.u32 %v2287, 7
        %v2289 = vsub.s32 %v2286, %v2288
        %v2290 = vrot.slane %v2282, %v2289
        %v2292 = vunpack.c.l.s4 1934713408
        %v2293 = vunpack.c.0.s8 %v2292
        %v2294 = vlaneseq
        %v2295 = vshrl.u32 %v2294, 7
        %v2296 = vsub.s32 %v2293, %v2295
        %v2297 = vrot.slane %v2283, %v2296
        %v2298 = vcombine.low %v2265, %v2281
        %v2299 = vcombine.high %v2265, %v2281
        %v2301 = vunpack.c.l.s4 1934713408
        %v2302 = vunpack.c.0.s8 %v2301
        %v2303 = vlaneseq
        %v2304 = vshrl.u32 %v2303, 7
        %v2305 = vsub.s32 %v2302, %v2304
        %v2306 = vrot.slane %v2298, %v2305
        %v2308 = vunpack.c.l.s4 1934713408
        %v2309 = vunpack.c.0.s8 %v2308
        %v2310 = vlaneseq
        %v2311 = vshrl.u32 %v2310, 7
        %v2312 = vsub.s32 %v2309, %v2311
        %v2313 = vrot.slane %v2299, %v2312
        %v2314 = vcombine.high %v2290, 0.0
        %v2315 = vcombine.high %v2297, 0.0
        %v2316 = vcombine.high %v2306, 0.0
        %v2317 = vcombine.high %v2313, 0.0
        %v2318 = vcombine.low %v2229, %v2237
        %v2319 = vcombine.high %v2229, %v2237
        %v2321 = vunpack.c.l.s4 1983009808
        %v2322 = vunpack.c.0.s8 %v2321
        %v2323 = vlaneseq
        %v2324 = vshrl.u32 %v2323, 7
        %v2325 = vsub.s32 %v2322, %v2324
        %v2326 = vrot.slane %v2318, %v2325
        %v2328 = vunpack.c.l.s4 1983009808
        %v2329 = vunpack.c.0.s8 %v2328
        %v2330 = vlaneseq
        %v2331 = vshrl.u32 %v2330, 7
        %v2332 = vsub.s32 %v2329, %v2331
        %v2333 = vrot.slane %v2319, %v2332
        %v2334 = vcombine.low %v2233, %v2241
        %v2335 = vcombine.high %v2233, %v2241
        %v2337 = vunpack.c.l.s4 1983009808
        %v2338 = vunpack.c.0.s8 %v2337
        %v2339 = vlaneseq
        %v2340 = vshrl.u32 %v2339, 7
        %v2341 = vsub.s32 %v2338, %v2340
        %v2342 = vrot.slane %v2334, %v2341
        %v2344 = vunpack.c.l.s4 1983009808
        %v2345 = vunpack.c.0.s8 %v2344
        %v2346 = vlaneseq
        %v2347 = vshrl.u32 %v2346, 7
        %v2348 = vsub.s32 %v2345, %v2347
        %v2349 = vrot.slane %v2335, %v2348
        %v2350 = vcombine.low %v2326, %v2342
        %v2351 = vcombine.high %v2326, %v2342
        %v2353 = vunpack.c.l.s4 1934713408
        %v2354 = vunpack.c.0.s8 %v2353
        %v2355 = vlaneseq
        %v2356 = vshrl.u32 %v2355, 7
        %v2357 = vsub.s32 %v2354, %v2356
        %v2358 = vrot.slane %v2350, %v2357
        %v2360 = vunpack.c.l.s4 1934713408
        %v2361 = vunpack.c.0.s8 %v2360
        %v2362 = vlaneseq
        %v2363 = vshrl.u32 %v2362, 7
        %v2364 = vsub.s32 %v2361, %v2363
        %v2365 = vrot.slane %v2351, %v2364
        %v2366 = vcombine.low %v2333, %v2349
        %v2367 = vcombine.high %v2333, %v2349
        %v2369 = vunpack.c.l.s4 1934713408
        %v2370 = vunpack.c.0.s8 %v2369
        %v2371 = vlaneseq
        %v2372 = vshrl.u32 %v2371, 7
        %v2373 = vsub.s32 %v2370, %v2372
        %v2374 = vrot.slane %v2366, %v2373
        %v2376 = vunpack.c.l.s4 1934713408
        %v2377 = vunpack.c.0.s8 %v2376
        %v2378 = vlaneseq
        %v2379 = vshrl.u32 %v2378, 7
        %v2380 = vsub.s32 %v2377, %v2379
        %v2381 = vrot.slane %v2367, %v2380
        %v2382 = vcombine.high %v2358, 0.0
        %v2383 = vcombine.high %v2365, 0.0
        %v2384 = vcombine.high %v2374, 0.0
        %v2385 = vcombine.high %v2381, 0.0
        %2387 = vrot.lane.b32.xlu0 %v2314, 16
        %v2388 = vpop.permute.xlu0 %2387
        %2391 = vrot.lane.b32.xlu0 %v2297, 32
        %v2392 = vpop.permute.xlu0 %2391
        %2395 = vrot.lane.b32.xlu0 %v2315, 48
        %v2396 = vpop.permute.xlu0 %2395
        %2399 = vrot.lane.b32.xlu0 %v2306, 64
        %v2400 = vpop.permute.xlu0 %2399
        %2403 = vrot.lane.b32.xlu0 %v2316, 80
        %v2404 = vpop.permute.xlu0 %2403
        %2407 = vrot.lane.b32.xlu0 %v2313, 96
        %v2408 = vpop.permute.xlu0 %2407
        %2411 = vrot.lane.b32.xlu0 %v2317, 112
        %v2412 = vpop.permute.xlu0 %2411
        %2415 = vrot.lane.b32.xlu0 %v2382, 16
        %v2416 = vpop.permute.xlu0 %2415
        %2419 = vrot.lane.b32.xlu0 %v2365, 32
        %v2420 = vpop.permute.xlu0 %2419
        %2423 = vrot.lane.b32.xlu0 %v2383, 48
        %v2424 = vpop.permute.xlu0 %2423
        %2427 = vrot.lane.b32.xlu0 %v2374, 64
        %v2428 = vpop.permute.xlu0 %2427
        %2431 = vrot.lane.b32.xlu0 %v2384, 80
        %v2432 = vpop.permute.xlu0 %2431
        %2435 = vrot.lane.b32.xlu0 %v2381, 96
        %v2436 = vpop.permute.xlu0 %2435
        %2439 = vrot.lane.b32.xlu0 %v2385, 112
        %v2440 = vpop.permute.xlu0 %2439
        %v2442 = vsel %vm573, %v2290, %v2388
        %v2443 = vsel %vm575, %v2442, %v2392
        %v2444 = vsel %vm577, %v2443, %v2396
        %v2445 = vsel %vm579, %v2444, %v2400
        %v2446 = vsel %vm581, %v2445, %v2404
        %v2447 = vsel %vm583, %v2446, %v2408
        %v2448 = vsel %vm585, %v2447, %v2412
        %v2449 = vsel %vm573, %v2358, %v2416
        %v2450 = vsel %vm575, %v2449, %v2420
        %v2451 = vsel %vm577, %v2450, %v2424
        %v2452 = vsel %vm579, %v2451, %v2428
        %v2453 = vsel %vm581, %v2452, %v2432
        %v2454 = vsel %vm583, %v2453, %v2436
        %v2455 = vsel %vm585, %v2454, %v2440
        %v2458 = vrot.slane %v824, 4
        %v2459 = vrot.slane %v831, 4
        %v2464 = vrot.slane %v1293, 4
        %v2465 = vrot.slane %v1300, 4
        %v2470 = vrot.slane %v1753, 4
        %v2471 = vrot.slane %v1760, 4
        %v2476 = vrot.slane %v2218, 4
        %v2477 = vrot.slane %v2225, 4
        %vm2480 = vcmask 1043456
        %v2481 = vsel %vm2480, %v586, %v2458
        %v2482 = vsel %vm2480, %v593, %v2459
        %v2483 = vsel %vm2480, %v1054, %v2464
        %v2484 = vsel %vm2480, %v1061, %v2465
        %v2485 = vsel %vm2480, %v1523, %v2470
        %v2486 = vsel %vm2480, %v1530, %v2471
        %v2487 = vsel %vm2480, %v1988, %v2476
        %v2488 = vsel %vm2480, %v1995, %v2477
        %v2489 = vld [vmem:[%s2] sm:$0xff]
        %v2490 = vld [vmem:[%s2 + $0x8] sm:$0xff]
        %v2491 = vld [vmem:[%s2 + $0x10] sm:$0xff]
        %v2492 = vld [vmem:[%s2 + $0x18] sm:$0x7]
        %v2493 = vld [vmem:[%s3] sm:$0xff]
        %v2494 = vld [vmem:[%s3 + $0x8] sm:$0xff]
        %v2495 = vld [vmem:[%s3 + $0x10] sm:$0xff]
        %v2496 = vld [vmem:[%s3 + $0x18] sm:$0x7]
        %2498 = vset.pattern.permute.xlu0 0
        %2499 = vperm.xlu0 %2498, %v2493
        %v2500 = vpop.permute.xlu0 %2499
        %2503 = vset.pattern.permute.xlu0 0
        %2504 = vperm.xlu0 %2503, %v2494
        %v2505 = vpop.permute.xlu0 %2504
        %2508 = vset.pattern.permute.xlu0 0
        %2509 = vperm.xlu0 %2508, %v2495
        %v2510 = vpop.permute.xlu0 %2509
        %2513 = vset.pattern.permute.xlu0 0
        %2514 = vperm.xlu0 %2513, %v2496
        %v2515 = vpop.permute.xlu0 %2514
        %vm2517 = vcmask 293888
        %v2519 = vsel %vm2517, %v2489, 0
        %v2522 = vsel %vm2517, %v2490, 0
        %v2525 = vsel %vm2517, %v2491, 0
        %v2528 = vsel %vm2517, %v2492, 0
        %v2531 = vsel %vm2480, %v2448, 0
        %v2534 = vsel %vm2480, %v2455, 0
        %2536 = vmatprep.subr.mxu0 0.0
        %2537 = vmatpush1.msra.mxu0 0.0
        %2538 = vmatprep.subr.mxu0 0.0
        %2539 = vmatpush1.msra.mxu0 0.0
        %2540 = vmatprep.subr.mxu0 0.0
        %2541 = vmatpush1.msra.mxu0 0.0
        %2542 = vmatprep.subr.mxu0 0.0
        %2543 = vmatpush1.msra.mxu0 0.0
        %2544 = vmatprep.subr.mxu0 0.0
        %2545 = vmatpush1.msra.mxu0 0.0
        %2546 = vmatprep.subr.mxu0 0.0
        %2547 = vmatpush1.msra.mxu0 0.0
        %2548 = vmatprep.subr.mxu0 0.0
        %2549 = vmatpush1.msra.mxu0 0.0
        %2550 = vmatprep.subr.mxu0 0.0
        %2551 = vmatpush1.msra.mxu0 0.0
        %2552 = vmatprep.subr.mxu0 0.0
        %2553 = vmatpush1.msra.mxu0 0.0
        %2554 = vmatprep.subr.mxu0 0.0
        %2555 = vmatpush1.msra.mxu0 0.0
        %2556 = vmatprep.subr.mxu0 0.0
        %2557 = vmatpush1.msra.mxu0 0.0
        %2558 = vmatprep.subr.mxu0 %v2534
        %2559 = vmatpush1.msra.mxu0 %v2531
        %2560 = vmatprep.subr.mxu0 %v2488
        %2561 = vmatpush1.msra.mxu0 %v2487
        %2562 = vmatprep.subr.mxu0 %v2486
        %2563 = vmatpush1.msra.mxu0 %v2485
        %2564 = vmatprep.subr.mxu0 %v2484
        %2565 = vmatpush1.msra.mxu0 %v2483
        %2566 = vmatprep.subr.mxu0 %v2482
        %2567 = vmatpush1.msra.mxu0 %v2481
        %2568 = vmatprep.subr.mxu0 0.0
        %2569 = vmatpush2.msra.mxu0 0.0
        %2570 = vmatprep.subr.mxu0 0.0
        %2571 = vmatpush2.msra.mxu0 0.0
        %2572 = vmatprep.subr.mxu0 0.0
        %2573 = vmatpush2.msra.mxu0 0.0
        %2574 = vmatprep.subr.mxu0 0.0
        %2575 = vmatpush2.msra.mxu0 0.0
        %2576 = vmatprep.subr.mxu0 0.0
        %2577 = vmatpush2.msra.mxu0 0.0
        %2578 = vmatprep.subr.mxu0 0.0
        %2579 = vmatpush2.msra.mxu0 0.0
        %2580 = vmatprep.subr.mxu0 0.0
        %2581 = vmatpush2.msra.mxu0 0.0
        %2582 = vmatprep.subr.mxu0 0.0
        %2583 = vmatpush2.msra.mxu0 0.0
        %2584 = vmatprep.subr.mxu0 0.0
        %2585 = vmatpush2.msra.mxu0 0.0
        %2586 = vmatprep.subr.mxu0 0.0
        %2587 = vmatpush2.msra.mxu0 0.0
        %2588 = vmatprep.subr.mxu0 0.0
        %2589 = vmatpush2.msra.mxu0 0.0
        %2590 = vmatprep.subr.mxu0 0.0
        %2591 = vmatpush2.msra.mxu0 0.0
        %2592 = vmatprep.subr.mxu0 0.0
        %2593 = vmatpush2.msra.mxu0 0.0
        %2594 = vmatprep.subr.mxu0 0.0
        %2595 = vmatpush2.msra.mxu0 0.0
        %2596 = vmatprep.subr.mxu0 0.0
        %2597 = vmatpush2.msra.mxu0 0.0
        %2598 = vmatprep.subr.mxu0 0.0
        %2599 = vmatpush2.msra.mxu0 0.0
        %2600 = vmatprep.mubr.f32.mxu0 0.0
        %2601 = vmatmul.mubr.f32.gmra.mxu0 %v2519
        %v2602 = vpop.f32.mrf.mxu0
        %v2603 = vadd.f32 %v2500, %v2602
        %v2604 = vpop.f32.mrf.mxu0
        %v2605 = vadd.f32 %v2500, %v2604
        %2606 = vmatprep.mubr.f32.mxu0 0.0
        %2607 = vmatmul.mubr.f32.gmra.mxu0 %v2522
        %v2608 = vpop.f32.mrf.mxu0
        %v2609 = vadd.f32 %v2505, %v2608
        %v2610 = vpop.f32.mrf.mxu0
        %v2611 = vadd.f32 %v2505, %v2610
        %2612 = vmatprep.mubr.f32.mxu0 0.0
        %2613 = vmatmul.mubr.f32.gmra.mxu0 %v2525
        %v2614 = vpop.f32.mrf.mxu0
        %v2615 = vadd.f32 %v2510, %v2614
        %v2616 = vpop.f32.mrf.mxu0
        %v2617 = vadd.f32 %v2510, %v2616
        %2618 = vmatprep.mubr.f32.mxu0 0.0
        %2619 = vmatmul.mubr.f32.gmra.mxu0 %v2528
        %v2620 = vpop.f32.mrf.mxu0
        %v2621 = vadd.f32 %v2515, %v2620
        %v2622 = vpop.f32.mrf.mxu0
        %v2623 = vadd.f32 %v2515, %v2622
        %2624 = vdwg.mxu0
        %2625 = vst [vmem:[%s367] sm:$0xff] %v2603
        %2626 = vst [vmem:[%s367 + $0x8] sm:$0xff] %v2605
        %2627 = vst [vmem:[%s367 + $0x10] sm:$0xff] %v2609
        %2628 = vst [vmem:[%s367 + $0x18] sm:$0xff] %v2611
        %2629 = vst [vmem:[%s367 + $0x20] sm:$0xff] %v2615
        %2630 = vst [vmem:[%s367 + $0x28] sm:$0xff] %v2617
        %2631 = vst [vmem:[%s367 + $0x30] sm:$0x7] %v2621
        %2632 = vst [vmem:[%s367 + $0x38] sm:$0x7] %v2623
        %s2633 = smul.u32 2, %s20
        %p2634 = scmp.lt.s32.totalorder %s19, 1
        %s2635 = scalar_select %p2634, %s19, 1
        %p2636 = scmp.lt.s32.totalorder %s2633, 1
        %s2637 = scalar_select %p2636, %s2633, 1
        %s2638 = smul.addr %s2635, 8
        %s2639 = sadd.s32 %s2637, %s2638
        %s2640 = smul.addr %s2639, 8
        %s2641 = scalar_lea.vmem %s4, %s2640
        // Predicated region
        $region113: #{dcn_forward.2} parent=103 // pred_check
          %p2642 = pneg %p149
        $region114: #{dcn_forward.2} parent=103 // pred_check_branch
          %2644 = sbr.rel (%p2642) target = $region116
        $region115: #{dcn_forward.2} parent=103 // pred_region
          %s2645 = smul.u32 2, %s20
        $region116: #{dcn_forward.2} parent=103 // pred_fallthru
          _
      $region104: #{dcn_forward.2} parent=5 // pred_fallthru
        _
      %p2646 = scmp.le.s32.totalorder 2, %s10
      // Predicated region
      $region117: #{dcn_forward.2} parent=5 // pred_check
        %p2647 = pneg %p2646
      $region118: #{dcn_forward.2} parent=5 // pred_check_branch
        %2649 = sbr.rel (%p2647) target = $region120
      $region119: #{dcn_forward.2} parent=5 // pred_region
        %s2650 = ssub.s32 %s10, 2
        // Predicated region
        $region121: #{dcn_forward.2} parent=119 // pred_check
          %p2651 = pneg %p155
        $region122: #{dcn_forward.2} parent=119 // pred_check_branch
          %2653 = sbr.rel (%p2651) target = $region124
        $region123: #{dcn_forward.2} parent=119 // pred_region
          %s2654 = smul.u32 2, %s22
          %p2655 = scmp.lt.s32.totalorder %s21, 1
          %s2656 = scalar_select %p2655, %s21, 1
          %p2657 = scmp.lt.s32.totalorder %s2654, 1
          %s2658 = scalar_select %p2657, %s2654, 1
          %s2659 = smul.addr %s2656, 8
          %s2660 = sadd.s32 %s2658, %s2659
          %s2661 = smul.addr %s2660, 8
          %s2662 = scalar_lea.vmem %s4, %s2661
        $region124: #{dcn_forward.2} parent=119 // pred_fallthru
          _
      $region120: #{dcn_forward.2} parent=5 // pred_fallthru
        _
    $region6: #{dcn_forward.2} parent=1 // loop_footer
      %s14 = sadd.s32 1, %s10
    $region7: #{dcn_forward.2} parent=1 // loop_footer_branch
      %9 = sbr.rel target = $region3
    $region8: #{dcn_forward.2} parent=1 // loop_exit
      _

// kernel: dcn_forward.3
$region0: #{dcn_forward.3}
  #allocation0 [shape = 'u32[]', space=smem, size = 0x4, offset = 0x4, fixed_abs, tag = 'smem constant byte address 0x4 - core index']
  #allocation1 [shape = 'u32[144,128]{1,0:T(1,128)}', space=vmem, size = 0x12000, scoped, tag = 'internal scratch']
  #allocation2 [shape = 'f32[72,256]{1,0:T(8,128)}', space=vmem, size = 0x12000, scoped, tag = 'scratch operand']
  #allocation3 [shape = 'f32[9,256]{1,0:T(8,128)}', space=vmem, size = 0x4000, scoped, tag = 'scratch operand']
  %s0 = inlined_call_operand.vmem [shape: f32[2,4,256], index: 0, kind: input, shape index: {}]
  %s1 = inlined_call_operand.vmem [shape: f32[2,27,256], index: 1, kind: input, shape index: {}]
  %s2 = inlined_call_operand.vmem [shape: f32[9,256], index: 2, kind: input, shape index: {}]
  %s3 = inlined_call_operand.vmem [shape: f32[9,256], index: 3, kind: input, shape index: {}]
  %s4 = inlined_call_operand.vmem [shape: f32[72,4], index: 4, kind: input, shape index: {}]
  %s5 = inlined_call_operand.vmem [shape: f32[8,1], index: 5, kind: input, shape index: {}]
  %s6 = inlined_call_operand.vmem [shape: f32[2,8,256], index: 6, kind: output, shape index: {}]
  %s7 = sld [smem:[#allocation0]]
  $region68: #{dcn_forward.3} parent=0
    _
  %s9 = ssub.s32 1, %s7
  %s10 = scalar_select 0, %s9, %s7
  loop: start=0, step=1, limit=4
  $region2: #{dcn_forward.3} parent=0 // loop_pre_header
    _
  $region3: #{dcn_forward.3} parent=0 // loop_header
    %s12 = sphi 0, %s16
    %p13 = scmp.ge.s32.totalorder %s12, 4
    %s19 = sphi 0, %s31
    %s20 = sphi 0, %s27
    %s21 = sphi 0, %s19
    %s22 = sphi 0, %s20
    %s23 = sphi 0, %s21
    %s24 = sphi 0, %s22
    %s34 = sphi 0, %s36
    %s37 = sphi 0, %s34
    %s38 = sphi 0, %s37
    %s54 = sphi 0, %s38
    %s62 = sphi 0, %s64
    %s65 = sphi 0, %s62
    %s66 = sphi 0, %s65
    %s82 = sphi 0, %s66
    %s88 = sphi 0, %s90
    %s91 = sphi 0, %s88
    %s92 = sphi 0, %s91
    %s108 = sphi 0, %s92
    %s114 = sphi 0, %s116
    %s117 = sphi 0, %s114
    %s118 = sphi 0, %s117
    %s134 = sphi 0, %s118
    %s138 = sphi 0, %s138
    %s140 = sphi 0, %s138
    %s141 = sphi 0, %s140
    %s155 = sphi 0, %s141
    %s159 = sphi 0, %s159
    %s161 = sphi 0, %s159
    %s162 = sphi 0, %s161
    %s176 = sphi 0, %s162
    %s184 = sphi 0, %s186
    %s187 = sphi 0, %s184
    %s188 = sphi 0, %s187
    %s204 = sphi 0, %s188
  $region4: #{dcn_forward.3} parent=0 // loop_header_branch
    %15 = sbr.rel (%p13) target = $region8
  $region5: #{dcn_forward.3} parent=0 // loop_body
    %s17 = ssub.s32 %s12, 1
    %s18 = ssub.s32 %s12, 2
    %s25 = sadd.s32 1, %s20
    %p26 = scmp.ge.s32.totalorder %s25, 1
    %s27 = scalar_select %p26, 0, %s25
    %s28 = sadd.s32 1, %s19
    %s29 = scalar_select %p26, %s28, %s19
    %p30 = scmp.ge.s32.totalorder %s29, 2
    %s31 = scalar_select %p30, 0, %s29
    %s32 = ssub.s32 %s19, %s31
    %p33 = scmp.eq.s32.totalorder %s32, 0
    %s35 = sadd.s32 %s34, 1
    %s36 = scalar_select %p33, %s34, %s35
    %p39 = pneg %p33
    %p40 = scmp.eq.s32.totalorder %s12, 1
    %p41 = por %p39, %p40
    %p42 = scmp.ne.s32.totalorder %s34, %s37
    %p43 = scmp.eq.s32.totalorder %s12, 0
    %p44 = por %p42, %p43
    %p45 = scmp.ne.s32.totalorder %s34, %s37
    %p46 = scmp.eq.s32.totalorder %s17, 1
    %p47 = por %p45, %p46
    %p48 = scmp.ne.s32.totalorder %s37, %s38
    %p49 = scmp.eq.s32.totalorder %s17, 0
    %p50 = por %p48, %p49
    %p51 = scmp.ne.s32.totalorder %s37, %s38
    %p52 = scmp.eq.s32.totalorder %s18, 1
    %p53 = por %p51, %p52
    %p55 = scmp.ne.s32.totalorder %s38, %s54
    %p56 = scmp.eq.s32.totalorder %s18, 0
    %p57 = por %p55, %p56
    %s58 = ssub.s32 %s19, %s31
    %s59 = ssub.s32 %s20, %s27
    %s60 = sor.u32 %s58, %s59
    %p61 = scmp.eq.s32.totalorder %s60, 0
    %s63 = sadd.s32 %s62, 1
    %s64 = scalar_select %p61, %s62, %s63
    %p67 = pneg %p61
    %p68 = scmp.eq.s32.totalorder %s12, 1
    %p69 = por %p67, %p68
    %p70 = scmp.ne.s32.totalorder %s62, %s65
    %p71 = scmp.eq.s32.totalorder %s12, 0
    %p72 = por %p70, %p71
    %p73 = scmp.ne.s32.totalorder %s62, %s65
    %p74 = scmp.eq.s32.totalorder %s17, 1
    %p75 = por %p73, %p74
    %p76 = scmp.ne.s32.totalorder %s65, %s66
    %p77 = scmp.eq.s32.totalorder %s17, 0
    %p78 = por %p76, %p77
    %p79 = scmp.ne.s32.totalorder %s65, %s66
    %p80 = scmp.eq.s32.totalorder %s18, 1
    %p81 = por %p79, %p80
    %p83 = scmp.ne.s32.totalorder %s66, %s82
    %p84 = scmp.eq.s32.totalorder %s18, 0
    %p85 = por %p83, %p84
    %s86 = ssub.s32 %s20, %s27
    %p87 = scmp.eq.s32.totalorder %s86, 0
    %s89 = sadd.s32 %s88, 1
    %s90 = scalar_select %p87, %s88, %s89
    %p93 = pneg %p87
    %p94 = scmp.eq.s32.totalorder %s12, 1
    %p95 = por %p93, %p94
    %p96 = scmp.ne.s32.totalorder %s88, %s91
    %p97 = scmp.eq.s32.totalorder %s12, 0
    %p98 = por %p96, %p97
    %p99 = scmp.ne.s32.totalorder %s88, %s91
    %p100 = scmp.eq.s32.totalorder %s17, 1
    %p101 = por %p99, %p100
    %p102 = scmp.ne.s32.totalorder %s91, %s92
    %p103 = scmp.eq.s32.totalorder %s17, 0
    %p104 = por %p102, %p103
    %p105 = scmp.ne.s32.totalorder %s91, %s92
    %p106 = scmp.eq.s32.totalorder %s18, 1
    %p107 = por %p105, %p106
    %p109 = scmp.ne.s32.totalorder %s92, %s108
    %p110 = scmp.eq.s32.totalorder %s18, 0
    %p111 = por %p109, %p110
    %s112 = ssub.s32 %s20, %s27
    %p113 = scmp.eq.s32.totalorder %s112, 0
    %s115 = sadd.s32 %s114, 1
    %s116 = scalar_select %p113, %s114, %s115
    %p119 = pneg %p113
    %p120 = scmp.eq.s32.totalorder %s12, 1
    %p121 = por %p119, %p120
    %p122 = scmp.ne.s32.totalorder %s114, %s117
    %p123 = scmp.eq.s32.totalorder %s12, 0
    %p124 = por %p122, %p123
    %p125 = scmp.ne.s32.totalorder %s114, %s117
    %p126 = scmp.eq.s32.totalorder %s17, 1
    %p127 = por %p125, %p126
    %p128 = scmp.ne.s32.totalorder %s117, %s118
    %p129 = scmp.eq.s32.totalorder %s17, 0
    %p130 = por %p128, %p129
    %p131 = scmp.ne.s32.totalorder %s117, %s118
    %p132 = scmp.eq.s32.totalorder %s18, 1
    %p133 = por %p131, %p132
    %p135 = scmp.ne.s32.totalorder %s118, %s134
    %p136 = scmp.eq.s32.totalorder %s18, 0
    %p137 = por %p135, %p136
    %s139 = sadd.s32 %s138, 1
    %p142 = scmp.eq.s32.totalorder %s12, 1
    %p143 = scmp.ne.s32.totalorder %s138, %s140
    %p144 = scmp.eq.s32.totalorder %s12, 0
    %p145 = por %p143, %p144
    %p146 = scmp.ne.s32.totalorder %s138, %s140
    %p147 = scmp.eq.s32.totalorder %s17, 1
    %p148 = por %p146, %p147
    %p149 = scmp.ne.s32.totalorder %s140, %s141
    %p150 = scmp.eq.s32.totalorder %s17, 0
    %p151 = por %p149, %p150
    %p152 = scmp.ne.s32.totalorder %s140, %s141
    %p153 = scmp.eq.s32.totalorder %s18, 1
    %p154 = por %p152, %p153
    %p156 = scmp.ne.s32.totalorder %s141, %s155
    %p157 = scmp.eq.s32.totalorder %s18, 0
    %p158 = por %p156, %p157
    %s160 = sadd.s32 %s159, 1
    %p163 = scmp.eq.s32.totalorder %s12, 1
    %p164 = scmp.ne.s32.totalorder %s159, %s161
    %p165 = scmp.eq.s32.totalorder %s12, 0
    %p166 = por %p164, %p165
    %p167 = scmp.ne.s32.totalorder %s159, %s161
    %p168 = scmp.eq.s32.totalorder %s17, 1
    %p169 = por %p167, %p168
    %p170 = scmp.ne.s32.totalorder %s161, %s162
    %p171 = scmp.eq.s32.totalorder %s17, 0
    %p172 = por %p170, %p171
    %p173 = scmp.ne.s32.totalorder %s161, %s162
    %p174 = scmp.eq.s32.totalorder %s18, 1
    %p175 = por %p173, %p174
    %p177 = scmp.ne.s32.totalorder %s162, %s176
    %p178 = scmp.eq.s32.totalorder %s18, 0
    %p179 = por %p177, %p178
    %s180 = ssub.s32 %s19, %s31
    %s181 = ssub.s32 %s20, %s27
    %s182 = sor.u32 %s180, %s181
    %p183 = scmp.eq.s32.totalorder %s182, 0
    %s185 = sadd.s32 %s184, 1
    %s186 = scalar_select %p183, %s184, %s185
    %p189 = pneg %p183
    %p190 = scmp.eq.s32.totalorder %s12, 1
    %p191 = por %p189, %p190
    %p192 = scmp.ne.s32.totalorder %s184, %s187
    %p193 = scmp.eq.s32.totalorder %s12, 0
    %p194 = por %p192, %p193
    %p195 = scmp.ne.s32.totalorder %s184, %s187
    %p196 = scmp.eq.s32.totalorder %s17, 1
    %p197 = por %p195, %p196
    %p198 = scmp.ne.s32.totalorder %s187, %s188
    %p199 = scmp.eq.s32.totalorder %s17, 0
    %p200 = por %p198, %p199
    %p201 = scmp.ne.s32.totalorder %s187, %s188
    %p202 = scmp.eq.s32.totalorder %s18, 1
    %p203 = por %p201, %p202
    %p205 = scmp.ne.s32.totalorder %s188, %s204
    %p206 = scmp.eq.s32.totalorder %s18, 0
    %p207 = por %p205, %p206
    %p208 = scmp.le.s32.totalorder 1, %s12
    %p209 = scmp.lt.s32.totalorder %s12, 3
    %p210 = pnand %p208, %p209
    %p211 = pneg %p210
    // Predicated region
    $region9: #{dcn_forward.3} parent=5 // pred_check
      _
    $region10: #{dcn_forward.3} parent=5 // pred_check_branch
      %213 = sbr.rel (%p210) target = $region12
    $region11: #{dcn_forward.3} parent=5 // pred_region
      %s214 = ssub.s32 %s12, 1
      // Predicated region
      $region13: #{dcn_forward.3} parent=11 // pred_check
        %p215 = pneg %p104
      $region14: #{dcn_forward.3} parent=11 // pred_check_branch
        %217 = sbr.rel (%p215) target = $region16
      $region15: #{dcn_forward.3} parent=11 // pred_region
        %s218 = smul.u32 2, %s22
        %p219 = scmp.lt.s32.totalorder %s218, 1
        %s220 = scalar_select %p219, %s218, 1
        %s221 = smul.addr %s220, 8
        %s222 = scalar_lea.vmem %s2, %s221
        %s223 = smul.u32 2, %s22
      $region16: #{dcn_forward.3} parent=11 // pred_fallthru
        _
      // Predicated region
      $region17: #{dcn_forward.3} parent=11 // pred_check
        %p224 = pneg %p130
      $region18: #{dcn_forward.3} parent=11 // pred_check_branch
        %226 = sbr.rel (%p224) target = $region20
      $region19: #{dcn_forward.3} parent=11 // pred_region
        %s227 = smul.u32 2, %s22
        %p228 = scmp.lt.s32.totalorder %s227, 1
        %s229 = scalar_select %p228, %s227, 1
        %s230 = smul.addr %s229, 8
        %s231 = scalar_lea.vmem %s3, %s230
        %s232 = smul.u32 2, %s22
      $region20: #{dcn_forward.3} parent=11 // pred_fallthru
        _
      // Predicated region
      $region21: #{dcn_forward.3} parent=11 // pred_check
        %p233 = pneg %p151
      $region22: #{dcn_forward.3} parent=11 // pred_check_branch
        %235 = sbr.rel (%p233) target = $region24
      $region23: #{dcn_forward.3} parent=11 // pred_region
        _
      $region24: #{dcn_forward.3} parent=11 // pred_fallthru
        _
      // Predicated region
      $region25: #{dcn_forward.3} parent=11 // pred_check
        %p236 = pneg %p172
      $region26: #{dcn_forward.3} parent=11 // pred_check_branch
        %238 = sbr.rel (%p236) target = $region28
      $region27: #{dcn_forward.3} parent=11 // pred_region
        _
      $region28: #{dcn_forward.3} parent=11 // pred_fallthru
        _
    $region12: #{dcn_forward.3} parent=5 // pred_fallthru
      _
    %p239 = scmp.lt.s32.totalorder %s12, 2
    // Predicated region
    $region29: #{dcn_forward.3} parent=5 // pred_check
      %p240 = pneg %p239
    $region30: #{dcn_forward.3} parent=5 // pred_check_branch
      %242 = sbr.rel (%p240) target = $region32
    $region31: #{dcn_forward.3} parent=5 // pred_region
      // Predicated region
      $region33: #{dcn_forward.3} parent=31 // pred_check
        %p243 = pneg %p44
      $region34: #{dcn_forward.3} parent=31 // pred_check_branch
        %245 = sbr.rel (%p243) target = $region36
      $region35: #{dcn_forward.3} parent=31 // pred_region
        %p246 = scmp.lt.s32.totalorder %s19, 1
        %s247 = scalar_select %p246, %s19, 1
        %s248 = smul.addr %s247, 2
        %s249 = smul.addr %s248, 4
        %s250 = scalar_lea.vmem %s0, %s249
      $region36: #{dcn_forward.3} parent=31 // pred_fallthru
        _
      // Predicated region
      $region37: #{dcn_forward.3} parent=31 // pred_check
        %p251 = pneg %p72
      $region38: #{dcn_forward.3} parent=31 // pred_check_branch
        %253 = sbr.rel (%p251) target = $region40
      $region39: #{dcn_forward.3} parent=31 // pred_region
        %s254 = smul.u32 2, %s20
        %p255 = scmp.lt.s32.totalorder %s19, 1
        %s256 = scalar_select %p255, %s19, 1
        %p257 = scmp.lt.s32.totalorder %s254, 1
        %s258 = scalar_select %p257, %s254, 1
        %s259 = smul.addr %s256, 8
        %s260 = sadd.s32 %s258, %s259
        %s261 = smul.addr %s260, 8
        %s262 = scalar_lea.vmem %s1, %s261
        %s263 = smul.u32 2, %s20
      $region40: #{dcn_forward.3} parent=31 // pred_fallthru
        _
    $region32: #{dcn_forward.3} parent=5 // pred_fallthru
      _
    %p264 = scmp.le.s32.totalorder 1, %s12
    %p265 = scmp.lt.s32.totalorder %s12, 3
    %p266 = pnand %p264, %p265
    %p267 = pneg %p266
    // Predicated region
    $region41: #{dcn_forward.3} parent=5 // pred_check
      _
    $region42: #{dcn_forward.3} parent=5 // pred_check_branch
      %269 = sbr.rel (%p266) target = $region44
    $region43: #{dcn_forward.3} parent=5 // pred_region
      %s270 = ssub.s32 %s12, 1
      %p271 = scmp.lt.s32.totalorder %s21, 1
      %s272 = scalar_select %p271, %s21, 1
      %s273 = smul.addr %s272, 2
      %s274 = smul.addr %s273, 4
      %s275 = scalar_lea.vmem %s0, %s274
      %p276 = pneg %p50
      %p277 = pneg %p47
      %s278 = smul.u32 2, %s22
      %p279 = scmp.lt.s32.totalorder %s21, 1
      %s280 = scalar_select %p279, %s21, 1
      %p281 = scmp.lt.s32.totalorder %s278, 1
      %s282 = scalar_select %p281, %s278, 1
      %s283 = smul.addr %s280, 8
      %s284 = sadd.s32 %s282, %s283
      %s285 = smul.addr %s284, 8
      %s286 = scalar_lea.vmem %s1, %s285
      %p287 = pneg %p78
      %p288 = pneg %p75
      %s289 = smul.u32 2, %s22
      %p290 = scmp.lt.s32.totalorder %s289, 1
      %s291 = scalar_select %p290, %s289, 1
      %s292 = smul.addr %s291, 8
      %s293 = scalar_lea.vmem %s2, %s292
      %p294 = pneg %p104
      %p295 = pneg %p101
      %s296 = smul.u32 2, %s22
      %p297 = scmp.lt.s32.totalorder %s296, 1
      %s298 = scalar_select %p297, %s296, 1
      %s299 = smul.addr %s298, 8
      %s300 = scalar_lea.vmem %s3, %s299
      %p301 = pneg %p130
      %p302 = pneg %p127
      %p303 = pneg %p151
      %p304 = pneg %p148
      %p305 = pneg %p172
      %p306 = pneg %p169
      %p307 = pneg %p200
      %p308 = pneg %p197
      %s309 = smul.u32 2, %s22
      %p310 = scmp.lt.s32.totalorder %s21, 1
      %s311 = scalar_select %p310, %s21, 1
      %p312 = scmp.lt.s32.totalorder %s309, 1
      %s313 = scalar_select %p312, %s309, 1
      %s314 = smul.addr %s311, 2
      %s315 = sadd.s32 %s313, %s314
      %s316 = smul.addr %s315, 8
      %s317 = scalar_lea.vmem %s6, %s316
      %p318 = scmp.lt.s32.totalorder %s21, 1
      %s319 = scalar_select %p318, %s21, 1
      %s320 = smul.addr %s319, 2
      %s321 = smul.addr %s320, 4
      %s322 = scalar_lea.vmem %s0, %s321
      %s323 = smul.u32 2, %s22
      %p324 = scmp.lt.s32.totalorder %s21, 1
      %s325 = scalar_select %p324, %s21, 1
      %p326 = scmp.lt.s32.totalorder %s323, 1
      %s327 = scalar_select %p326, %s323, 1
      %s328 = smul.addr %s325, 8
      %s329 = sadd.s32 %s327, %s328
      %s330 = smul.addr %s329, 8
      %s331 = scalar_lea.vmem %s1, %s330
      %s332 = smul.u32 2, %s22
      %s333 = smul.u32 2, %s22
      %p334 = scmp.lt.s32.totalorder %s333, 1
      %s335 = scalar_select %p334, %s333, 1
      %s336 = smul.addr %s335, 8
      %s337 = scalar_lea.vmem %s2, %s336
      %s338 = smul.u32 2, %s22
      %s339 = smul.u32 2, %s22
      %p340 = scmp.lt.s32.totalorder %s339, 1
      %s341 = scalar_select %p340, %s339, 1
      %s342 = smul.addr %s341, 8
      %s343 = scalar_lea.vmem %s3, %s342
      %s344 = smul.u32 2, %s22
      %s345 = smul.u32 2, %s22
      %p346 = scmp.lt.s32.totalorder %s21, 1
      %s347 = scalar_select %p346, %s21, 1
      %p348 = scmp.lt.s32.totalorder %s345, 1
      %s349 = scalar_select %p348, %s345, 1
      %s350 = smul.addr %s347, 2
      %s351 = sadd.s32 %s349, %s350
      %s352 = smul.addr %s351, 8
      %s353 = scalar_lea.vmem %s6, %s352
      %s354 = smul.u32 2, %s22
      %p355 = scmp.eq.s32.totalorder %s22, 0
      // Predicated region
      $region45: #{dcn_forward.3} parent=43 // pred_check
        %p356 = pneg %p355
      $region46: #{dcn_forward.3} parent=43 // pred_check_branch
        %358 = sbr.rel (%p356) target = $region48
      $region47: #{dcn_forward.3} parent=43 // pred_region
        %v359 = vld [vmem:[%s4] sm:$0xff]
        %v360 = vld [vmem:[%s4 + $0x8] sm:$0xff]
        %v361 = vld [vmem:[%s4 + $0x10] sm:$0xff]
        %v362 = vld [vmem:[%s4 + $0x18] sm:$0xff]
        %v363 = vld [vmem:[%s4 + $0x20] sm:$0xff]
        %v364 = vld [vmem:[%s4 + $0x28] sm:$0xff]
        %v365 = vld [vmem:[%s4 + $0x30] sm:$0xff]
        %v366 = vld [vmem:[%s4 + $0x38] sm:$0xff]
        %v367 = vld [vmem:[%s4 + $0x40] sm:$0xff]
        %v368 = vld [vmem:[%s322] sm:$0xff]
        %v370 = vcombine.high %v368, %v368
        %vm371 = vcmask 31744
        %v373 = vsel %vm371, %v359, 0
        %v376 = vsel %vm371, %v360, 0
        %v379 = vsel %vm371, %v361, 0
        %v382 = vsel %vm371, %v362, 0
        %v385 = vsel %vm371, %v363, 0
        %v388 = vsel %vm371, %v364, 0
        %v391 = vsel %vm371, %v365, 0
        %v394 = vsel %vm371, %v366, 0
        %v397 = vsel %vm371, %v367, 0
        %vm399 = vcmask 1043456
        %v400 = vsel %vm399, %v368, 0
        %v402 = vsel %vm399, %v370, 0
        %404 = vmatprep.subr.mxu0 0.0
        %405 = vmatpush1.msra.mxu0 0.0
        %406 = vmatprep.subr.mxu0 0.0
        %407 = vmatpush1.msra.mxu0 0.0
        %408 = vmatprep.subr.mxu0 0.0
        %409 = vmatpush1.msra.mxu0 0.0
        %410 = vmatprep.subr.mxu0 0.0
        %411 = vmatpush1.msra.mxu0 0.0
        %412 = vmatprep.subr.mxu0 0.0
        %413 = vmatpush1.msra.mxu0 0.0
        %414 = vmatprep.subr.mxu0 0.0
        %415 = vmatpush1.msra.mxu0 0.0
        %416 = vmatprep.subr.mxu0 0.0
        %417 = vmatpush1.msra.mxu0 0.0
        %418 = vmatprep.subr.mxu0 0.0
        %419 = vmatpush1.msra.mxu0 0.0
        %420 = vmatprep.subr.mxu0 0.0
        %421 = vmatpush1.msra.mxu0 0.0
        %422 = vmatprep.subr.mxu0 0.0
        %423 = vmatpush1.msra.mxu0 0.0
        %424 = vmatprep.subr.mxu0 0.0
        %425 = vmatpush1.msra.mxu0 0.0
        %426 = vmatprep.subr.mxu0 0.0
        %427 = vmatpush1.msra.mxu0 0.0
        %428 = vmatprep.subr.mxu0 0.0
        %429 = vmatpush1.msra.mxu0 0.0
        %430 = vmatprep.subr.mxu0 0.0
        %431 = vmatpush1.msra.mxu0 0.0
        %432 = vmatprep.subr.mxu0 0.0
        %433 = vmatpush1.msra.mxu0 0.0
        %434 = vmatprep.subr.mxu0 %v402
        %435 = vmatpush1.msra.mxu0 %v400
        %436 = vmatprep.subr.mxu0 0.0
        %437 = vmatpush2.msra.mxu0 0.0
        %438 = vmatprep.subr.mxu0 0.0
        %439 = vmatpush2.msra.mxu0 0.0
        %440 = vmatprep.subr.mxu0 0.0
        %441 = vmatpush2.msra.mxu0 0.0
        %442 = vmatprep.subr.mxu0 0.0
        %443 = vmatpush2.msra.mxu0 0.0
        %444 = vmatprep.subr.mxu0 0.0
        %445 = vmatpush2.msra.mxu0 0.0
        %446 = vmatprep.subr.mxu0 0.0
        %447 = vmatpush2.msra.mxu0 0.0
        %448 = vmatprep.subr.mxu0 0.0
        %449 = vmatpush2.msra.mxu0 0.0
        %450 = vmatprep.subr.mxu0 0.0
        %451 = vmatpush2.msra.mxu0 0.0
        %452 = vmatprep.subr.mxu0 0.0
        %453 = vmatpush2.msra.mxu0 0.0
        %454 = vmatprep.subr.mxu0 0.0
        %455 = vmatpush2.msra.mxu0 0.0
        %456 = vmatprep.subr.mxu0 0.0
        %457 = vmatpush2.msra.mxu0 0.0
        %458 = vmatprep.subr.mxu0 0.0
        %459 = vmatpush2.msra.mxu0 0.0
        %460 = vmatprep.subr.mxu0 0.0
        %461 = vmatpush2.msra.mxu0 0.0
        %462 = vmatprep.subr.mxu0 0.0
        %463 = vmatpush2.msra.mxu0 0.0
        %464 = vmatprep.subr.mxu0 0.0
        %465 = vmatpush2.msra.mxu0 0.0
        %466 = vmatprep.subr.mxu0 0.0
        %467 = vmatpush2.msra.mxu0 0.0
        %468 = vmatprep.mubr.f32.mxu0 0.0
        %469 = vmatmul.mubr.f32.gmra.mxu0 %v373
        %v470 = vpop.f32.mrf.mxu0
        %v471 = vadd.f32 0.0, %v470
        %v472 = vpop.f32.mrf.mxu0
        %v473 = vadd.f32 0.0, %v472
        %474 = vmatprep.mubr.f32.mxu0 0.0
        %475 = vmatmul.mubr.f32.gmra.mxu0 %v376
        %v476 = vpop.f32.mrf.mxu0
        %v477 = vadd.f32 0.0, %v476
        %v478 = vpop.f32.mrf.mxu0
        %v479 = vadd.f32 0.0, %v478
        %480 = vmatprep.mubr.f32.mxu0 0.0
        %481 = vmatmul.mubr.f32.gmra.mxu0 %v379
        %v482 = vpop.f32.mrf.mxu0
        %v483 = vadd.f32 0.0, %v482
        %v484 = vpop.f32.mrf.mxu0
        %v485 = vadd.f32 0.0, %v484
        %486 = vmatprep.mubr.f32.mxu0 0.0
        %487 = vmatmul.mubr.f32.gmra.mxu0 %v382
        %v488 = vpop.f32.mrf.mxu0
        %v489 = vadd.f32 0.0, %v488
        %v490 = vpop.f32.mrf.mxu0
        %v491 = vadd.f32 0.0, %v490
        %492 = vmatprep.mubr.f32.mxu0 0.0
        %493 = vmatmul.mubr.f32.gmra.mxu0 %v385
        %v494 = vpop.f32.mrf.mxu0
        %v495 = vadd.f32 0.0, %v494
        %v496 = vpop.f32.mrf.mxu0
        %v497 = vadd.f32 0.0, %v496
        %498 = vmatprep.mubr.f32.mxu0 0.0
        %499 = vmatmul.mubr.f32.gmra.mxu0 %v388
        %v500 = vpop.f32.mrf.mxu0
        %v501 = vadd.f32 0.0, %v500
        %v502 = vpop.f32.mrf.mxu0
        %v503 = vadd.f32 0.0, %v502
        %504 = vmatprep.mubr.f32.mxu0 0.0
        %505 = vmatmul.mubr.f32.gmra.mxu0 %v391
        %v506 = vpop.f32.mrf.mxu0
        %v507 = vadd.f32 0.0, %v506
        %v508 = vpop.f32.mrf.mxu0
        %v509 = vadd.f32 0.0, %v508
        %510 = vmatprep.mubr.f32.mxu0 0.0
        %511 = vmatmul.mubr.f32.gmra.mxu0 %v394
        %v512 = vpop.f32.mrf.mxu0
        %v513 = vadd.f32 0.0, %v512
        %v514 = vpop.f32.mrf.mxu0
        %v515 = vadd.f32 0.0, %v514
        %516 = vmatprep.mubr.f32.mxu0 0.0
        %517 = vmatmul.mubr.f32.gmra.mxu0 %v397
        %v518 = vpop.f32.mrf.mxu0
        %v519 = vadd.f32 0.0, %v518
        %v520 = vpop.f32.mrf.mxu0
        %v521 = vadd.f32 0.0, %v520
        %522 = vdwg.mxu0
        %523 = vst [vmem:[#allocation2] sm:$0xff] %v471
        %524 = vst [vmem:[#allocation2 + $0x8] sm:$0xff] %v473
        %525 = vst [vmem:[#allocation2 + $0x10] sm:$0xff] %v477
        %526 = vst [vmem:[#allocation2 + $0x18] sm:$0xff] %v479
        %527 = vst [vmem:[#allocation2 + $0x20] sm:$0xff] %v483
        %528 = vst [vmem:[#allocation2 + $0x28] sm:$0xff] %v485
        %529 = vst [vmem:[#allocation2 + $0x30] sm:$0xff] %v489
        %530 = vst [vmem:[#allocation2 + $0x38] sm:$0xff] %v491
        %531 = vst [vmem:[#allocation2 + $0x40] sm:$0xff] %v495
        %532 = vst [vmem:[#allocation2 + $0x48] sm:$0xff] %v497
        %533 = vst [vmem:[#allocation2 + $0x50] sm:$0xff] %v501
        %534 = vst [vmem:[#allocation2 + $0x58] sm:$0xff] %v503
        %535 = vst [vmem:[#allocation2 + $0x60] sm:$0xff] %v507
        %536 = vst [vmem:[#allocation2 + $0x68] sm:$0xff] %v509
        %537 = vst [vmem:[#allocation2 + $0x70] sm:$0xff] %v513
        %538 = vst [vmem:[#allocation2 + $0x78] sm:$0xff] %v515
        %539 = vst [vmem:[#allocation2 + $0x80] sm:$0xff] %v519
        %540 = vst [vmem:[#allocation2 + $0x88] sm:$0xff] %v521
      $region48: #{dcn_forward.3} parent=43 // pred_fallthru
        _
      %v541 = vld [vmem:[%s331 + $0x20] sm:$0xfc]
      %v542 = vld [vmem:[%s331 + $0x28] sm:$0xfc]
      %v543 = vld [vmem:[%s331 + $0x30] sm:$0x7]
      %v544 = vld [vmem:[%s331 + $0x38] sm:$0x7]
      %v545 = vxor.u32 %v541, 2147483648
      %v546 = vxor.u32 %v542, 2147483648
      %v547 = vxor.u32 %v543, 2147483648
      %v548 = vxor.u32 %v544, 2147483648
      %v549 = vmul.f32 %v545, 1.442695
      %v550 = vpow.pop %v549
      %v551 = vmul.f32 %v546, 1.442695
      %v552 = vpow.pop %v551
      %v553 = vmul.f32 %v547, 1.442695
      %v554 = vpow.pop %v553
      %v555 = vmul.f32 %v548, 1.442695
      %v556 = vpow.pop %v555
      %v557 = vadd.f32 %v550, 1.0
      %v558 = vadd.f32 %v552, 1.0
      %v559 = vadd.f32 %v554, 1.0
      %v560 = vadd.f32 %v556, 1.0
      %v561 = vrcp.pop %v557
      %v562 = vmul.f32 1.0, %v561
      %v563 = vrcp.pop %v558
      %v564 = vmul.f32 1.0, %v563
      %v565 = vrcp.pop %v559
      %v566 = vmul.f32 1.0, %v565
      %v567 = vrcp.pop %v560
      %v568 = vmul.f32 1.0, %v567
      %vm573 = vcmask 1045504
      %v574 = vrot.slane %v562, 2
      %v575 = vrot.slane %v566, 2
      %v576 = vsel %vm573, %v574, %v575
      %v577 = vrot.slane %v564, 2
      %v578 = vrot.slane %v568, 2
      %v579 = vsel %vm573, %v577, %v578
      %584 = vst [vmem:[#allocation3] sm:$0xff] %v576
      %585 = vst [vmem:[#allocation3 + $0x8] sm:$0xff] %v579
      %586 = vst [vmem:[#allocation3 + $0x10] sm:$0x1] %v575
      %587 = vst [vmem:[#allocation3 + $0x18] sm:$0x1] %v578
      %v588 = vlaneseq
      %v589 = vshrl.u32 %v588, 7
      %v590 = vadd.s32 %v589, 8
      %v591 = vadd.s32 %v589, 16
      %v592 = vadd.s32 %v589, 24
      %v593 = vadd.s32 %v589, 32
      %v594 = vadd.s32 %v589, 40
      %v595 = vadd.s32 %v589, 48
      %v596 = vadd.s32 %v589, 56
      %v597 = vadd.s32 %v589, 64
      %v598 = vadd.s32 %v589, 72
      %v599 = vadd.s32 %v589, 80
      %v600 = vadd.s32 %v589, 88
      %v601 = vadd.s32 %v589, 96
      %v602 = vadd.s32 %v589, 104
      %v603 = vadd.s32 %v589, 112
      %v604 = vadd.s32 %v589, 120
      %v605 = vadd.s32 %v589, 128
      %v606 = vadd.s32 %v589, 136
      %v607 = vadd.s32 %v589, 144
      %v608 = vadd.s32 %v589, 152
      %v609 = vadd.s32 %v589, 160
      %v610 = vadd.s32 %v589, 168
      %v611 = vadd.s32 %v589, 176
      %v612 = vadd.s32 %v589, 184
      %v613 = vadd.s32 %v589, 192
      %v614 = vadd.s32 %v589, 200
      %v615 = vadd.s32 %v589, 208
      %v616 = vadd.s32 %v589, 216
      %v617 = vadd.s32 %v589, 224
      %v618 = vadd.s32 %v589, 232
      %v619 = vadd.s32 %v589, 240
      %v620 = vadd.s32 %v589, 248
      loop: start=0, step=1, limit=9
      $region49: #{dcn_forward.3} parent=43 // loop_pre_header
        _
      $region50: #{dcn_forward.3} parent=43 // loop_header
        %s622 = sphi 0, %s626
        %p623 = scmp.ge.s32.totalorder %s622, 9
        %v627 = vphi 0.0, %v1567
        %v628 = vphi 0.0, %v1568
      $region51: #{dcn_forward.3} parent=43 // loop_header_branch
        %625 = sbr.rel (%p623) target = $region55
      $region52: #{dcn_forward.3} parent=43 // loop_body
        %s629 = sshra.s32 %s622, 3
        %s630 = sand.u32 %s622, 7
        %s631 = sshra.s32 %s622, 3
        %s632 = sand.u32 %s622, 7
        %s633 = smul.u32 %s629, 2
        %s634 = smul.u32 %s633, 8
        %s635 = sadd.s32 %s634, %s632
        %s636 = scalar_lea.vmem %s331, %s635
        %v637 = vld [vmem:[%s636] ss:$8 sm:$0x3]
        %s638 = sadd.s32 %s622, 9
        %s639 = sshra.s32 %s638, 3
        %s640 = sand.u32 %s638, 7
        %s641 = sshra.s32 %s638, 3
        %s642 = sand.u32 %s638, 7
        %s643 = smul.u32 %s639, 2
        %s644 = smul.u32 %s643, 8
        %s645 = sadd.s32 %s644, %s642
        %s646 = scalar_lea.vmem %s331, %s645
        %v647 = vld [vmem:[%s646] ss:$8 sm:$0x3]
        %s648 = scalar_lea.vmem [#allocation3], %s635
        %v649 = vld [vmem:[%s648] ss:$8 sm:$0x3]
        %s650 = scalar_lea.vmem %s337, %s635
        %v651 = vld [vmem:[%s650] ss:$8 sm:$0x3]
        %v652 = vadd.f32 %v651, %v637
        %s653 = scalar_lea.vmem %s343, %s635
        %v654 = vld [vmem:[%s653] ss:$8 sm:$0x3]
        %v655 = vadd.f32 %v654, %v647
        %v656 = vfloor.f32 %v652
        %v657 = vfloor.f32 %v655
        %v658 = vsub.f32 %v652, %v656
        %v659 = vsub.f32 %v655, %v657
        %v660 = vcvt.f32.s32.to.zero.pseudo %v656
        %v661 = vcvt.f32.s32.to.zero.pseudo %v657
        %vm662 = vcmp.gt.f32.partialorder %v652, -1.0
        %vm663 = vcmp.lt.f32.partialorder %v652, 16.0
        %vm664 = vmand %vm662, %vm663
        %vm665 = vcmp.gt.f32.partialorder %v655, -1.0
        %vm666 = vmand %vm664, %vm665
        %vm667 = vcmp.lt.f32.partialorder %v655, 16.0
        %vm668 = vmand %vm666, %vm667
        %vm669 = vcmp.ge.s32.totalorder %v660, 0
        %vm670 = vmand %vm668, %vm669
        %vm671 = vcmp.lt.s32.totalorder %v660, 16
        %vm672 = vmand %vm670, %vm671
        %v673 = vadd.s32 %v660, 1
        %vm674 = vcmp.ge.s32.totalorder %v673, 0
        %vm675 = vmand %vm668, %vm674
        %vm676 = vcmp.lt.s32.totalorder %v673, 16
        %vm677 = vmand %vm675, %vm676
        %vm678 = vcmp.ge.s32.totalorder %v661, 0
        %vm679 = vcmp.lt.s32.totalorder %v661, 16
        %vm680 = vmand %vm678, %vm679
        %v681 = vadd.s32 %v661, 1
        %vm682 = vcmp.ge.s32.totalorder %v681, 0
        %vm683 = vcmp.lt.s32.totalorder %v681, 16
        %vm684 = vmand %vm682, %vm683
        %vm685 = vmand %vm672, %vm680
        %v686 = vsub.f32 1.0, %v658
        %v687 = vsub.f32 1.0, %v659
        %v688 = vmul.f32 %v686, %v687
        %v689 = vmul.f32 %v688, %v649
        %v690 = vsel %vm685, %v689, 0.0
        %vm691 = vmand %vm672, %vm684
        %v692 = vmul.f32 %v686, %v659
        %v693 = vmul.f32 %v692, %v649
        %v694 = vsel %vm691, %v693, 0.0
        %vm695 = vmand %vm677, %vm680
        %v696 = vmul.f32 %v658, %v687
        %v697 = vmul.f32 %v696, %v649
        %v698 = vsel %vm695, %v697, 0.0
        %vm699 = vmand %vm677, %vm684
        %v700 = vmul.f32 %v658, %v659
        %v701 = vmul.f32 %v700, %v649
        %v702 = vsel %vm699, %v701, 0.0
        %v703 = vmul.u32 %v660, 16
        %v704 = vadd.s32 %v703, %v661
        %v705 = vlaneseq
        %v706 = vshrl.u32 %v705, 7
        %v707 = vsub.s32 0, %v706
        %v708 = vrot.slane %v704, %v707
        %v709 = vlaneseq
        %v710 = vshrl.u32 %v709, 7
        %v711 = vsub.s32 1, %v710
        %v712 = vrot.slane %v704, %v711
        %vm713 = vcmp.eq.s32.totalorder %v589, %v708
        %vm714 = vcmp.eq.s32.totalorder %v589, %v712
        %vm715 = vcmp.eq.s32.totalorder %v590, %v708
        %vm716 = vcmp.eq.s32.totalorder %v590, %v712
        %vm717 = vcmp.eq.s32.totalorder %v591, %v708
        %vm718 = vcmp.eq.s32.totalorder %v591, %v712
        %vm719 = vcmp.eq.s32.totalorder %v592, %v708
        %vm720 = vcmp.eq.s32.totalorder %v592, %v712
        %vm721 = vcmp.eq.s32.totalorder %v593, %v708
        %vm722 = vcmp.eq.s32.totalorder %v593, %v712
        %vm723 = vcmp.eq.s32.totalorder %v594, %v708
        %vm724 = vcmp.eq.s32.totalorder %v594, %v712
        %vm725 = vcmp.eq.s32.totalorder %v595, %v708
        %vm726 = vcmp.eq.s32.totalorder %v595, %v712
        %vm727 = vcmp.eq.s32.totalorder %v596, %v708
        %vm728 = vcmp.eq.s32.totalorder %v596, %v712
        %vm729 = vcmp.eq.s32.totalorder %v597, %v708
        %vm730 = vcmp.eq.s32.totalorder %v597, %v712
        %vm731 = vcmp.eq.s32.totalorder %v598, %v708
        %vm732 = vcmp.eq.s32.totalorder %v598, %v712
        %vm733 = vcmp.eq.s32.totalorder %v599, %v708
        %vm734 = vcmp.eq.s32.totalorder %v599, %v712
        %vm735 = vcmp.eq.s32.totalorder %v600, %v708
        %vm736 = vcmp.eq.s32.totalorder %v600, %v712
        %vm737 = vcmp.eq.s32.totalorder %v601, %v708
        %vm738 = vcmp.eq.s32.totalorder %v601, %v712
        %vm739 = vcmp.eq.s32.totalorder %v602, %v708
        %vm740 = vcmp.eq.s32.totalorder %v602, %v712
        %vm741 = vcmp.eq.s32.totalorder %v603, %v708
        %vm742 = vcmp.eq.s32.totalorder %v603, %v712
        %vm743 = vcmp.eq.s32.totalorder %v604, %v708
        %vm744 = vcmp.eq.s32.totalorder %v604, %v712
        %vm745 = vcmp.eq.s32.totalorder %v605, %v708
        %vm746 = vcmp.eq.s32.totalorder %v605, %v712
        %vm747 = vcmp.eq.s32.totalorder %v606, %v708
        %vm748 = vcmp.eq.s32.totalorder %v606, %v712
        %vm749 = vcmp.eq.s32.totalorder %v607, %v708
        %vm750 = vcmp.eq.s32.totalorder %v607, %v712
        %vm751 = vcmp.eq.s32.totalorder %v608, %v708
        %vm752 = vcmp.eq.s32.totalorder %v608, %v712
        %vm753 = vcmp.eq.s32.totalorder %v609, %v708
        %vm754 = vcmp.eq.s32.totalorder %v609, %v712
        %vm755 = vcmp.eq.s32.totalorder %v610, %v708
        %vm756 = vcmp.eq.s32.totalorder %v610, %v712
        %vm757 = vcmp.eq.s32.totalorder %v611, %v708
        %vm758 = vcmp.eq.s32.totalorder %v611, %v712
        %vm759 = vcmp.eq.s32.totalorder %v612, %v708
        %vm760 = vcmp.eq.s32.totalorder %v612, %v712
        %vm761 = vcmp.eq.s32.totalorder %v613, %v708
        %vm762 = vcmp.eq.s32.totalorder %v613, %v712
        %vm763 = vcmp.eq.s32.totalorder %v614, %v708
        %vm764 = vcmp.eq.s32.totalorder %v614, %v712
        %vm765 = vcmp.eq.s32.totalorder %v615, %v708
        %vm766 = vcmp.eq.s32.totalorder %v615, %v712
        %vm767 = vcmp.eq.s32.totalorder %v616, %v708
        %vm768 = vcmp.eq.s32.totalorder %v616, %v712
        %vm769 = vcmp.eq.s32.totalorder %v617, %v708
        %vm770 = vcmp.eq.s32.totalorder %v617, %v712
        %vm771 = vcmp.eq.s32.totalorder %v618, %v708
        %vm772 = vcmp.eq.s32.totalorder %v618, %v712
        %vm773 = vcmp.eq.s32.totalorder %v619, %v708
        %vm774 = vcmp.eq.s32.totalorder %v619, %v712
        %vm775 = vcmp.eq.s32.totalorder %v620, %v708
        %vm776 = vcmp.eq.s32.totalorder %v620, %v712
        %v778 = vlaneseq
        %v779 = vshrl.u32 %v778, 7
        %v780 = vsub.s32 0, %v779
        %v781 = vrot.slane %v690, %v780
        %v782 = vlaneseq
        %v783 = vshrl.u32 %v782, 7
        %v784 = vsub.s32 1, %v783
        %v785 = vrot.slane %v690, %v784
        %v788 = vsel %vm713, %v781, 0.0
        %v789 = vsel %vm714, %v785, 0.0
        %v790 = vsel %vm715, %v781, 0.0
        %v791 = vsel %vm716, %v785, 0.0
        %v792 = vsel %vm717, %v781, 0.0
        %v793 = vsel %vm718, %v785, 0.0
        %v794 = vsel %vm719, %v781, 0.0
        %v795 = vsel %vm720, %v785, 0.0
        %v796 = vsel %vm721, %v781, 0.0
        %v797 = vsel %vm722, %v785, 0.0
        %v798 = vsel %vm723, %v781, 0.0
        %v799 = vsel %vm724, %v785, 0.0
        %v800 = vsel %vm725, %v781, 0.0
        %v801 = vsel %vm726, %v785, 0.0
        %v802 = vsel %vm727, %v781, 0.0
        %v803 = vsel %vm728, %v785, 0.0
        %v804 = vsel %vm729, %v781, 0.0
        %v805 = vsel %vm730, %v785, 0.0
        %v806 = vsel %vm731, %v781, 0.0
        %v807 = vsel %vm732, %v785, 0.0
        %v808 = vsel %vm733, %v781, 0.0
        %v809 = vsel %vm734, %v785, 0.0
        %v810 = vsel %vm735, %v781, 0.0
        %v811 = vsel %vm736, %v785, 0.0
        %v812 = vsel %vm737, %v781, 0.0
        %v813 = vsel %vm738, %v785, 0.0
        %v814 = vsel %vm739, %v781, 0.0
        %v815 = vsel %vm740, %v785, 0.0
        %v816 = vsel %vm741, %v781, 0.0
        %v817 = vsel %vm742, %v785, 0.0
        %v818 = vsel %vm743, %v781, 0.0
        %v819 = vsel %vm744, %v785, 0.0
        %v820 = vsel %vm745, %v781, 0.0
        %v821 = vsel %vm746, %v785, 0.0
        %v822 = vsel %vm747, %v781, 0.0
        %v823 = vsel %vm748, %v785, 0.0
        %v824 = vsel %vm749, %v781, 0.0
        %v825 = vsel %vm750, %v785, 0.0
        %v826 = vsel %vm751, %v781, 0.0
        %v827 = vsel %vm752, %v785, 0.0
        %v828 = vsel %vm753, %v781, 0.0
        %v829 = vsel %vm754, %v785, 0.0
        %v830 = vsel %vm755, %v781, 0.0
        %v831 = vsel %vm756, %v785, 0.0
        %v832 = vsel %vm757, %v781, 0.0
        %v833 = vsel %vm758, %v785, 0.0
        %v834 = vsel %vm759, %v781, 0.0
        %v835 = vsel %vm760, %v785, 0.0
        %v836 = vsel %vm761, %v781, 0.0
        %v837 = vsel %vm762, %v785, 0.0
        %v838 = vsel %vm763, %v781, 0.0
        %v839 = vsel %vm764, %v785, 0.0
        %v840 = vsel %vm765, %v781, 0.0
        %v841 = vsel %vm766, %v785, 0.0
        %v842 = vsel %vm767, %v781, 0.0
        %v843 = vsel %vm768, %v785, 0.0
        %v844 = vsel %vm769, %v781, 0.0
        %v845 = vsel %vm770, %v785, 0.0
        %v846 = vsel %vm771, %v781, 0.0
        %v847 = vsel %vm772, %v785, 0.0
        %v848 = vsel %vm773, %v781, 0.0
        %v849 = vsel %vm774, %v785, 0.0
        %v850 = vsel %vm775, %v781, 0.0
        %v851 = vsel %vm776, %v785, 0.0
        %v852 = vadd.s32 %v704, 1
        %v853 = vlaneseq
        %v854 = vshrl.u32 %v853, 7
        %v855 = vsub.s32 0, %v854
        %v856 = vrot.slane %v852, %v855
        %v857 = vlaneseq
        %v858 = vshrl.u32 %v857, 7
        %v859 = vsub.s32 1, %v858
        %v860 = vrot.slane %v852, %v859
        %vm861 = vcmp.eq.s32.totalorder %v589, %v856
        %vm862 = vcmp.eq.s32.totalorder %v589, %v860
        %vm863 = vcmp.eq.s32.totalorder %v590, %v856
        %vm864 = vcmp.eq.s32.totalorder %v590, %v860
        %vm865 = vcmp.eq.s32.totalorder %v591, %v856
        %vm866 = vcmp.eq.s32.totalorder %v591, %v860
        %vm867 = vcmp.eq.s32.totalorder %v592, %v856
        %vm868 = vcmp.eq.s32.totalorder %v592, %v860
        %vm869 = vcmp.eq.s32.totalorder %v593, %v856
        %vm870 = vcmp.eq.s32.totalorder %v593, %v860
        %vm871 = vcmp.eq.s32.totalorder %v594, %v856
        %vm872 = vcmp.eq.s32.totalorder %v594, %v860
        %vm873 = vcmp.eq.s32.totalorder %v595, %v856
        %vm874 = vcmp.eq.s32.totalorder %v595, %v860
        %vm875 = vcmp.eq.s32.totalorder %v596, %v856
        %vm876 = vcmp.eq.s32.totalorder %v596, %v860
        %vm877 = vcmp.eq.s32.totalorder %v597, %v856
        %vm878 = vcmp.eq.s32.totalorder %v597, %v860
        %vm879 = vcmp.eq.s32.totalorder %v598, %v856
        %vm880 = vcmp.eq.s32.totalorder %v598, %v860
        %vm881 = vcmp.eq.s32.totalorder %v599, %v856
        %vm882 = vcmp.eq.s32.totalorder %v599, %v860
        %vm883 = vcmp.eq.s32.totalorder %v600, %v856
        %vm884 = vcmp.eq.s32.totalorder %v600, %v860
        %vm885 = vcmp.eq.s32.totalorder %v601, %v856
        %vm886 = vcmp.eq.s32.totalorder %v601, %v860
        %vm887 = vcmp.eq.s32.totalorder %v602, %v856
        %vm888 = vcmp.eq.s32.totalorder %v602, %v860
        %vm889 = vcmp.eq.s32.totalorder %v603, %v856
        %vm890 = vcmp.eq.s32.totalorder %v603, %v860
        %vm891 = vcmp.eq.s32.totalorder %v604, %v856
        %vm892 = vcmp.eq.s32.totalorder %v604, %v860
        %vm893 = vcmp.eq.s32.totalorder %v605, %v856
        %vm894 = vcmp.eq.s32.totalorder %v605, %v860
        %vm895 = vcmp.eq.s32.totalorder %v606, %v856
        %vm896 = vcmp.eq.s32.totalorder %v606, %v860
        %vm897 = vcmp.eq.s32.totalorder %v607, %v856
        %vm898 = vcmp.eq.s32.totalorder %v607, %v860
        %vm899 = vcmp.eq.s32.totalorder %v608, %v856
        %vm900 = vcmp.eq.s32.totalorder %v608, %v860
        %vm901 = vcmp.eq.s32.totalorder %v609, %v856
        %vm902 = vcmp.eq.s32.totalorder %v609, %v860
        %vm903 = vcmp.eq.s32.totalorder %v610, %v856
        %vm904 = vcmp.eq.s32.totalorder %v610, %v860
        %vm905 = vcmp.eq.s32.totalorder %v611, %v856
        %vm906 = vcmp.eq.s32.totalorder %v611, %v860
        %vm907 = vcmp.eq.s32.totalorder %v612, %v856
        %vm908 = vcmp.eq.s32.totalorder %v612, %v860
        %vm909 = vcmp.eq.s32.totalorder %v613, %v856
        %vm910 = vcmp.eq.s32.totalorder %v613, %v860
        %vm911 = vcmp.eq.s32.totalorder %v614, %v856
        %vm912 = vcmp.eq.s32.totalorder %v614, %v860
        %vm913 = vcmp.eq.s32.totalorder %v615, %v856
        %vm914 = vcmp.eq.s32.totalorder %v615, %v860
        %vm915 = vcmp.eq.s32.totalorder %v616, %v856
        %vm916 = vcmp.eq.s32.totalorder %v616, %v860
        %vm917 = vcmp.eq.s32.totalorder %v617, %v856
        %vm918 = vcmp.eq.s32.totalorder %v617, %v860
        %vm919 = vcmp.eq.s32.totalorder %v618, %v856
        %vm920 = vcmp.eq.s32.totalorder %v618, %v860
        %vm921 = vcmp.eq.s32.totalorder %v619, %v856
        %vm922 = vcmp.eq.s32.totalorder %v619, %v860
        %vm923 = vcmp.eq.s32.totalorder %v620, %v856
        %vm924 = vcmp.eq.s32.totalorder %v620, %v860
        %v926 = vlaneseq
        %v927 = vshrl.u32 %v926, 7
        %v928 = vsub.s32 0, %v927
        %v929 = vrot.slane %v694, %v928
        %v930 = vlaneseq
        %v931 = vshrl.u32 %v930, 7
        %v932 = vsub.s32 1, %v931
        %v933 = vrot.slane %v694, %v932
        %v936 = vsel %vm861, %v929, 0.0
        %v937 = vsel %vm862, %v933, 0.0
        %v938 = vsel %vm863, %v929, 0.0
        %v939 = vsel %vm864, %v933, 0.0
        %v940 = vsel %vm865, %v929, 0.0
        %v941 = vsel %vm866, %v933, 0.0
        %v942 = vsel %vm867, %v929, 0.0
        %v943 = vsel %vm868, %v933, 0.0
        %v944 = vsel %vm869, %v929, 0.0
        %v945 = vsel %vm870, %v933, 0.0
        %v946 = vsel %vm871, %v929, 0.0
        %v947 = vsel %vm872, %v933, 0.0
        %v948 = vsel %vm873, %v929, 0.0
        %v949 = vsel %vm874, %v933, 0.0
        %v950 = vsel %vm875, %v929, 0.0
        %v951 = vsel %vm876, %v933, 0.0
        %v952 = vsel %vm877, %v929, 0.0
        %v953 = vsel %vm878, %v933, 0.0
        %v954 = vsel %vm879, %v929, 0.0
        %v955 = vsel %vm880, %v933, 0.0
        %v956 = vsel %vm881, %v929, 0.0
        %v957 = vsel %vm882, %v933, 0.0
        %v958 = vsel %vm883, %v929, 0.0
        %v959 = vsel %vm884, %v933, 0.0
        %v960 = vsel %vm885, %v929, 0.0
        %v961 = vsel %vm886, %v933, 0.0
        %v962 = vsel %vm887, %v929, 0.0
        %v963 = vsel %vm888, %v933, 0.0
        %v964 = vsel %vm889, %v929, 0.0
        %v965 = vsel %vm890, %v933, 0.0
        %v966 = vsel %vm891, %v929, 0.0
        %v967 = vsel %vm892, %v933, 0.0
        %v968 = vsel %vm893, %v929, 0.0
        %v969 = vsel %vm894, %v933, 0.0
        %v970 = vsel %vm895, %v929, 0.0
        %v971 = vsel %vm896, %v933, 0.0
        %v972 = vsel %vm897, %v929, 0.0
        %v973 = vsel %vm898, %v933, 0.0
        %v974 = vsel %vm899, %v929, 0.0
        %v975 = vsel %vm900, %v933, 0.0
        %v976 = vsel %vm901, %v929, 0.0
        %v977 = vsel %vm902, %v933, 0.0
        %v978 = vsel %vm903, %v929, 0.0
        %v979 = vsel %vm904, %v933, 0.0
        %v980 = vsel %vm905, %v929, 0.0
        %v981 = vsel %vm906, %v933, 0.0
        %v982 = vsel %vm907, %v929, 0.0
        %v983 = vsel %vm908, %v933, 0.0
        %v984 = vsel %vm909, %v929, 0.0
        %v985 = vsel %vm910, %v933, 0.0
        %v986 = vsel %vm911, %v929, 0.0
        %v987 = vsel %vm912, %v933, 0.0
        %v988 = vsel %vm913, %v929, 0.0
        %v989 = vsel %vm914, %v933, 0.0
        %v990 = vsel %vm915, %v929, 0.0
        %v991 = vsel %vm916, %v933, 0.0
        %v992 = vsel %vm917, %v929, 0.0
        %v993 = vsel %vm918, %v933, 0.0
        %v994 = vsel %vm919, %v929, 0.0
        %v995 = vsel %vm920, %v933, 0.0
        %v996 = vsel %vm921, %v929, 0.0
        %v997 = vsel %vm922, %v933, 0.0
        %v998 = vsel %vm923, %v929, 0.0
        %v999 = vsel %vm924, %v933, 0.0
        %v1000 = vadd.f32 %v788, %v936
        %v1001 = vadd.f32 %v789, %v937
        %v1002 = vadd.f32 %v790, %v938
        %v1003 = vadd.f32 %v791, %v939
        %v1004 = vadd.f32 %v792, %v940
        %v1005 = vadd.f32 %v793, %v941
        %v1006 = vadd.f32 %v794, %v942
        %v1007 = vadd.f32 %v795, %v943
        %v1008 = vadd.f32 %v796, %v944
        %v1009 = vadd.f32 %v797, %v945
        %v1010 = vadd.f32 %v798, %v946
        %v1011 = vadd.f32 %v799, %v947
        %v1012 = vadd.f32 %v800, %v948
        %v1013 = vadd.f32 %v801, %v949
        %v1014 = vadd.f32 %v802, %v950
        %v1015 = vadd.f32 %v803, %v951
        %v1016 = vadd.f32 %v804, %v952
        %v1017 = vadd.f32 %v805, %v953
        %v1018 = vadd.f32 %v806, %v954
        %v1019 = vadd.f32 %v807, %v955
        %v1020 = vadd.f32 %v808, %v956
        %v1021 = vadd.f32 %v809, %v957
        %v1022 = vadd.f32 %v810, %v958
        %v1023 = vadd.f32 %v811, %v959
        %v1024 = vadd.f32 %v812, %v960
        %v1025 = vadd.f32 %v813, %v961
        %v1026 = vadd.f32 %v814, %v962
        %v1027 = vadd.f32 %v815, %v963
        %v1028 = vadd.f32 %v816, %v964
        %v1029 = vadd.f32 %v817, %v965
        %v1030 = vadd.f32 %v818, %v966
        %v1031 = vadd.f32 %v819, %v967
        %v1032 = vadd.f32 %v820, %v968
        %v1033 = vadd.f32 %v821, %v969
        %v1034 = vadd.f32 %v822, %v970
        %v1035 = vadd.f32 %v823, %v971
        %v1036 = vadd.f32 %v824, %v972
        %v1037 = vadd.f32 %v825, %v973
        %v1038 = vadd.f32 %v826, %v974
        %v1039 = vadd.f32 %v827, %v975
        %v1040 = vadd.f32 %v828, %v976
        %v1041 = vadd.f32 %v829, %v977
        %v1042 = vadd.f32 %v830, %v978
        %v1043 = vadd.f32 %v831, %v979
        %v1044 = vadd.f32 %v832, %v980
        %v1045 = vadd.f32 %v833, %v981
        %v1046 = vadd.f32 %v834, %v982
        %v1047 = vadd.f32 %v835, %v983
        %v1048 = vadd.f32 %v836, %v984
        %v1049 = vadd.f32 %v837, %v985
        %v1050 = vadd.f32 %v838, %v986
        %v1051 = vadd.f32 %v839, %v987
        %v1052 = vadd.f32 %v840, %v988
        %v1053 = vadd.f32 %v841, %v989
        %v1054 = vadd.f32 %v842, %v990
        %v1055 = vadd.f32 %v843, %v991
        %v1056 = vadd.f32 %v844, %v992
        %v1057 = vadd.f32 %v845, %v993
        %v1058 = vadd.f32 %v846, %v994
        %v1059 = vadd.f32 %v847, %v995
        %v1060 = vadd.f32 %v848, %v996
        %v1061 = vadd.f32 %v849, %v997
        %v1062 = vadd.f32 %v850, %v998
        %v1063 = vadd.f32 %v851, %v999
        %v1064 = vadd.s32 %v704, 16
        %v1065 = vlaneseq
        %v1066 = vshrl.u32 %v1065, 7
        %v1067 = vsub.s32 0, %v1066
        %v1068 = vrot.slane %v1064, %v1067
        %v1069 = vlaneseq
        %v1070 = vshrl.u32 %v1069, 7
        %v1071 = vsub.s32 1, %v1070
        %v1072 = vrot.slane %v1064, %v1071
        %vm1073 = vcmp.eq.s32.totalorder %v589, %v1068
        %vm1074 = vcmp.eq.s32.totalorder %v589, %v1072
        %vm1075 = vcmp.eq.s32.totalorder %v590, %v1068
        %vm1076 = vcmp.eq.s32.totalorder %v590, %v1072
        %vm1077 = vcmp.eq.s32.totalorder %v591, %v1068
        %vm1078 = vcmp.eq.s32.totalorder %v591, %v1072
        %vm1079 = vcmp.eq.s32.totalorder %v592, %v1068
        %vm1080 = vcmp.eq.s32.totalorder %v592, %v1072
        %vm1081 = vcmp.eq.s32.totalorder %v593, %v1068
        %vm1082 = vcmp.eq.s32.totalorder %v593, %v1072
        %vm1083 = vcmp.eq.s32.totalorder %v594, %v1068
        %vm1084 = vcmp.eq.s32.totalorder %v594, %v1072
        %vm1085 = vcmp.eq.s32.totalorder %v595, %v1068
        %vm1086 = vcmp.eq.s32.totalorder %v595, %v1072
        %vm1087 = vcmp.eq.s32.totalorder %v596, %v1068
        %vm1088 = vcmp.eq.s32.totalorder %v596, %v1072
        %vm1089 = vcmp.eq.s32.totalorder %v597, %v1068
        %vm1090 = vcmp.eq.s32.totalorder %v597, %v1072
        %vm1091 = vcmp.eq.s32.totalorder %v598, %v1068
        %vm1092 = vcmp.eq.s32.totalorder %v598, %v1072
        %vm1093 = vcmp.eq.s32.totalorder %v599, %v1068
        %vm1094 = vcmp.eq.s32.totalorder %v599, %v1072
        %vm1095 = vcmp.eq.s32.totalorder %v600, %v1068
        %vm1096 = vcmp.eq.s32.totalorder %v600, %v1072
        %vm1097 = vcmp.eq.s32.totalorder %v601, %v1068
        %vm1098 = vcmp.eq.s32.totalorder %v601, %v1072
        %vm1099 = vcmp.eq.s32.totalorder %v602, %v1068
        %vm1100 = vcmp.eq.s32.totalorder %v602, %v1072
        %vm1101 = vcmp.eq.s32.totalorder %v603, %v1068
        %vm1102 = vcmp.eq.s32.totalorder %v603, %v1072
        %vm1103 = vcmp.eq.s32.totalorder %v604, %v1068
        %vm1104 = vcmp.eq.s32.totalorder %v604, %v1072
        %vm1105 = vcmp.eq.s32.totalorder %v605, %v1068
        %vm1106 = vcmp.eq.s32.totalorder %v605, %v1072
        %vm1107 = vcmp.eq.s32.totalorder %v606, %v1068
        %vm1108 = vcmp.eq.s32.totalorder %v606, %v1072
        %vm1109 = vcmp.eq.s32.totalorder %v607, %v1068
        %vm1110 = vcmp.eq.s32.totalorder %v607, %v1072
        %vm1111 = vcmp.eq.s32.totalorder %v608, %v1068
        %vm1112 = vcmp.eq.s32.totalorder %v608, %v1072
        %vm1113 = vcmp.eq.s32.totalorder %v609, %v1068
        %vm1114 = vcmp.eq.s32.totalorder %v609, %v1072
        %vm1115 = vcmp.eq.s32.totalorder %v610, %v1068
        %vm1116 = vcmp.eq.s32.totalorder %v610, %v1072
        %vm1117 = vcmp.eq.s32.totalorder %v611, %v1068
        %vm1118 = vcmp.eq.s32.totalorder %v611, %v1072
        %vm1119 = vcmp.eq.s32.totalorder %v612, %v1068
        %vm1120 = vcmp.eq.s32.totalorder %v612, %v1072
        %vm1121 = vcmp.eq.s32.totalorder %v613, %v1068
        %vm1122 = vcmp.eq.s32.totalorder %v613, %v1072
        %vm1123 = vcmp.eq.s32.totalorder %v614, %v1068
        %vm1124 = vcmp.eq.s32.totalorder %v614, %v1072
        %vm1125 = vcmp.eq.s32.totalorder %v615, %v1068
        %vm1126 = vcmp.eq.s32.totalorder %v615, %v1072
        %vm1127 = vcmp.eq.s32.totalorder %v616, %v1068
        %vm1128 = vcmp.eq.s32.totalorder %v616, %v1072
        %vm1129 = vcmp.eq.s32.totalorder %v617, %v1068
        %vm1130 = vcmp.eq.s32.totalorder %v617, %v1072
        %vm1131 = vcmp.eq.s32.totalorder %v618, %v1068
        %vm1132 = vcmp.eq.s32.totalorder %v618, %v1072
        %vm1133 = vcmp.eq.s32.totalorder %v619, %v1068
        %vm1134 = vcmp.eq.s32.totalorder %v619, %v1072
        %vm1135 = vcmp.eq.s32.totalorder %v620, %v1068
        %vm1136 = vcmp.eq.s32.totalorder %v620, %v1072
        %v1138 = vlaneseq
        %v1139 = vshrl.u32 %v1138, 7
        %v1140 = vsub.s32 0, %v1139
        %v1141 = vrot.slane %v698, %v1140
        %v1142 = vlaneseq
        %v1143 = vshrl.u32 %v1142, 7
        %v1144 = vsub.s32 1, %v1143
        %v1145 = vrot.slane %v698, %v1144
        %v1148 = vsel %vm1073, %v1141, 0.0
        %v1149 = vsel %vm1074, %v1145, 0.0
        %v1150 = vsel %vm1075, %v1141, 0.0
        %v1151 = vsel %vm1076, %v1145, 0.0
        %v1152 = vsel %vm1077, %v1141, 0.0
        %v1153 = vsel %vm1078, %v1145, 0.0
        %v1154 = vsel %vm1079, %v1141, 0.0
        %v1155 = vsel %vm1080, %v1145, 0.0
        %v1156 = vsel %vm1081, %v1141, 0.0
        %v1157 = vsel %vm1082, %v1145, 0.0
        %v1158 = vsel %vm1083, %v1141, 0.0
        %v1159 = vsel %vm1084, %v1145, 0.0
        %v1160 = vsel %vm1085, %v1141, 0.0
        %v1161 = vsel %vm1086, %v1145, 0.0
        %v1162 = vsel %vm1087, %v1141, 0.0
        %v1163 = vsel %vm1088, %v1145, 0.0
        %v1164 = vsel %vm1089, %v1141, 0.0
        %v1165 = vsel %vm1090, %v1145, 0.0
        %v1166 = vsel %vm1091, %v1141, 0.0
        %v1167 = vsel %vm1092, %v1145, 0.0
        %v1168 = vsel %vm1093, %v1141, 0.0
        %v1169 = vsel %vm1094, %v1145, 0.0
        %v1170 = vsel %vm1095, %v1141, 0.0
        %v1171 = vsel %vm1096, %v1145, 0.0
        %v1172 = vsel %vm1097, %v1141, 0.0
        %v1173 = vsel %vm1098, %v1145, 0.0
        %v1174 = vsel %vm1099, %v1141, 0.0
        %v1175 = vsel %vm1100, %v1145, 0.0
        %v1176 = vsel %vm1101, %v1141, 0.0
        %v1177 = vsel %vm1102, %v1145, 0.0
        %v1178 = vsel %vm1103, %v1141, 0.0
        %v1179 = vsel %vm1104, %v1145, 0.0
        %v1180 = vsel %vm1105, %v1141, 0.0
        %v1181 = vsel %vm1106, %v1145, 0.0
        %v1182 = vsel %vm1107, %v1141, 0.0
        %v1183 = vsel %vm1108, %v1145, 0.0
        %v1184 = vsel %vm1109, %v1141, 0.0
        %v1185 = vsel %vm1110, %v1145, 0.0
        %v1186 = vsel %vm1111, %v1141, 0.0
        %v1187 = vsel %vm1112, %v1145, 0.0
        %v1188 = vsel %vm1113, %v1141, 0.0
        %v1189 = vsel %vm1114, %v1145, 0.0
        %v1190 = vsel %vm1115, %v1141, 0.0
        %v1191 = vsel %vm1116, %v1145, 0.0
        %v1192 = vsel %vm1117, %v1141, 0.0
        %v1193 = vsel %vm1118, %v1145, 0.0
        %v1194 = vsel %vm1119, %v1141, 0.0
        %v1195 = vsel %vm1120, %v1145, 0.0
        %v1196 = vsel %vm1121, %v1141, 0.0
        %v1197 = vsel %vm1122, %v1145, 0.0
        %v1198 = vsel %vm1123, %v1141, 0.0
        %v1199 = vsel %vm1124, %v1145, 0.0
        %v1200 = vsel %vm1125, %v1141, 0.0
        %v1201 = vsel %vm1126, %v1145, 0.0
        %v1202 = vsel %vm1127, %v1141, 0.0
        %v1203 = vsel %vm1128, %v1145, 0.0
        %v1204 = vsel %vm1129, %v1141, 0.0
        %v1205 = vsel %vm1130, %v1145, 0.0
        %v1206 = vsel %vm1131, %v1141, 0.0
        %v1207 = vsel %vm1132, %v1145, 0.0
        %v1208 = vsel %vm1133, %v1141, 0.0
        %v1209 = vsel %vm1134, %v1145, 0.0
        %v1210 = vsel %vm1135, %v1141, 0.0
        %v1211 = vsel %vm1136, %v1145, 0.0
        %v1212 = vadd.f32 %v1000, %v1148
        %v1213 = vadd.f32 %v1001, %v1149
        %v1214 = vadd.f32 %v1002, %v1150
        %v1215 = vadd.f32 %v1003, %v1151
        %v1216 = vadd.f32 %v1004, %v1152
        %v1217 = vadd.f32 %v1005, %v1153
        %v1218 = vadd.f32 %v1006, %v1154
        %v1219 = vadd.f32 %v1007, %v1155
        %v1220 = vadd.f32 %v1008, %v1156
        %v1221 = vadd.f32 %v1009, %v1157
        %v1222 = vadd.f32 %v1010, %v1158
        %v1223 = vadd.f32 %v1011, %v1159
        %v1224 = vadd.f32 %v1012, %v1160
        %v1225 = vadd.f32 %v1013, %v1161
        %v1226 = vadd.f32 %v1014, %v1162
        %v1227 = vadd.f32 %v1015, %v1163
        %v1228 = vadd.f32 %v1016, %v1164
        %v1229 = vadd.f32 %v1017, %v1165
        %v1230 = vadd.f32 %v1018, %v1166
        %v1231 = vadd.f32 %v1019, %v1167
        %v1232 = vadd.f32 %v1020, %v1168
        %v1233 = vadd.f32 %v1021, %v1169
        %v1234 = vadd.f32 %v1022, %v1170
        %v1235 = vadd.f32 %v1023, %v1171
        %v1236 = vadd.f32 %v1024, %v1172
        %v1237 = vadd.f32 %v1025, %v1173
        %v1238 = vadd.f32 %v1026, %v1174
        %v1239 = vadd.f32 %v1027, %v1175
        %v1240 = vadd.f32 %v1028, %v1176
        %v1241 = vadd.f32 %v1029, %v1177
        %v1242 = vadd.f32 %v1030, %v1178
        %v1243 = vadd.f32 %v1031, %v1179
        %v1244 = vadd.f32 %v1032, %v1180
        %v1245 = vadd.f32 %v1033, %v1181
        %v1246 = vadd.f32 %v1034, %v1182
        %v1247 = vadd.f32 %v1035, %v1183
        %v1248 = vadd.f32 %v1036, %v1184
        %v1249 = vadd.f32 %v1037, %v1185
        %v1250 = vadd.f32 %v1038, %v1186
        %v1251 = vadd.f32 %v1039, %v1187
        %v1252 = vadd.f32 %v1040, %v1188
        %v1253 = vadd.f32 %v1041, %v1189
        %v1254 = vadd.f32 %v1042, %v1190
        %v1255 = vadd.f32 %v1043, %v1191
        %v1256 = vadd.f32 %v1044, %v1192
        %v1257 = vadd.f32 %v1045, %v1193
        %v1258 = vadd.f32 %v1046, %v1194
        %v1259 = vadd.f32 %v1047, %v1195
        %v1260 = vadd.f32 %v1048, %v1196
        %v1261 = vadd.f32 %v1049, %v1197
        %v1262 = vadd.f32 %v1050, %v1198
        %v1263 = vadd.f32 %v1051, %v1199
        %v1264 = vadd.f32 %v1052, %v1200
        %v1265 = vadd.f32 %v1053, %v1201
        %v1266 = vadd.f32 %v1054, %v1202
        %v1267 = vadd.f32 %v1055, %v1203
        %v1268 = vadd.f32 %v1056, %v1204
        %v1269 = vadd.f32 %v1057, %v1205
        %v1270 = vadd.f32 %v1058, %v1206
        %v1271 = vadd.f32 %v1059, %v1207
        %v1272 = vadd.f32 %v1060, %v1208
        %v1273 = vadd.f32 %v1061, %v1209
        %v1274 = vadd.f32 %v1062, %v1210
        %v1275 = vadd.f32 %v1063, %v1211
        %v1276 = vadd.s32 %v704, 17
        %v1277 = vlaneseq
        %v1278 = vshrl.u32 %v1277, 7
        %v1279 = vsub.s32 0, %v1278
        %v1280 = vrot.slane %v1276, %v1279
        %v1281 = vlaneseq
        %v1282 = vshrl.u32 %v1281, 7
        %v1283 = vsub.s32 1, %v1282
        %v1284 = vrot.slane %v1276, %v1283
        %vm1285 = vcmp.eq.s32.totalorder %v589, %v1280
        %vm1286 = vcmp.eq.s32.totalorder %v589, %v1284
        %vm1287 = vcmp.eq.s32.totalorder %v590, %v1280
        %vm1288 = vcmp.eq.s32.totalorder %v590, %v1284
        %vm1289 = vcmp.eq.s32.totalorder %v591, %v1280
        %vm1290 = vcmp.eq.s32.totalorder %v591, %v1284
        %vm1291 = vcmp.eq.s32.totalorder %v592, %v1280
        %vm1292 = vcmp.eq.s32.totalorder %v592, %v1284
        %vm1293 = vcmp.eq.s32.totalorder %v593, %v1280
        %vm1294 = vcmp.eq.s32.totalorder %v593, %v1284
        %vm1295 = vcmp.eq.s32.totalorder %v594, %v1280
        %vm1296 = vcmp.eq.s32.totalorder %v594, %v1284
        %vm1297 = vcmp.eq.s32.totalorder %v595, %v1280
        %vm1298 = vcmp.eq.s32.totalorder %v595, %v1284
        %vm1299 = vcmp.eq.s32.totalorder %v596, %v1280
        %vm1300 = vcmp.eq.s32.totalorder %v596, %v1284
        %vm1301 = vcmp.eq.s32.totalorder %v597, %v1280
        %vm1302 = vcmp.eq.s32.totalorder %v597, %v1284
        %vm1303 = vcmp.eq.s32.totalorder %v598, %v1280
        %vm1304 = vcmp.eq.s32.totalorder %v598, %v1284
        %vm1305 = vcmp.eq.s32.totalorder %v599, %v1280
        %vm1306 = vcmp.eq.s32.totalorder %v599, %v1284
        %vm1307 = vcmp.eq.s32.totalorder %v600, %v1280
        %vm1308 = vcmp.eq.s32.totalorder %v600, %v1284
        %vm1309 = vcmp.eq.s32.totalorder %v601, %v1280
        %vm1310 = vcmp.eq.s32.totalorder %v601, %v1284
        %vm1311 = vcmp.eq.s32.totalorder %v602, %v1280
        %vm1312 = vcmp.eq.s32.totalorder %v602, %v1284
        %vm1313 = vcmp.eq.s32.totalorder %v603, %v1280
        %vm1314 = vcmp.eq.s32.totalorder %v603, %v1284
        %vm1315 = vcmp.eq.s32.totalorder %v604, %v1280
        %vm1316 = vcmp.eq.s32.totalorder %v604, %v1284
        %vm1317 = vcmp.eq.s32.totalorder %v605, %v1280
        %vm1318 = vcmp.eq.s32.totalorder %v605, %v1284
        %vm1319 = vcmp.eq.s32.totalorder %v606, %v1280
        %vm1320 = vcmp.eq.s32.totalorder %v606, %v1284
        %vm1321 = vcmp.eq.s32.totalorder %v607, %v1280
        %vm1322 = vcmp.eq.s32.totalorder %v607, %v1284
        %vm1323 = vcmp.eq.s32.totalorder %v608, %v1280
        %vm1324 = vcmp.eq.s32.totalorder %v608, %v1284
        %vm1325 = vcmp.eq.s32.totalorder %v609, %v1280
        %vm1326 = vcmp.eq.s32.totalorder %v609, %v1284
        %vm1327 = vcmp.eq.s32.totalorder %v610, %v1280
        %vm1328 = vcmp.eq.s32.totalorder %v610, %v1284
        %vm1329 = vcmp.eq.s32.totalorder %v611, %v1280
        %vm1330 = vcmp.eq.s32.totalorder %v611, %v1284
        %vm1331 = vcmp.eq.s32.totalorder %v612, %v1280
        %vm1332 = vcmp.eq.s32.totalorder %v612, %v1284
        %vm1333 = vcmp.eq.s32.totalorder %v613, %v1280
        %vm1334 = vcmp.eq.s32.totalorder %v613, %v1284
        %vm1335 = vcmp.eq.s32.totalorder %v614, %v1280
        %vm1336 = vcmp.eq.s32.totalorder %v614, %v1284
        %vm1337 = vcmp.eq.s32.totalorder %v615, %v1280
        %vm1338 = vcmp.eq.s32.totalorder %v615, %v1284
        %vm1339 = vcmp.eq.s32.totalorder %v616, %v1280
        %vm1340 = vcmp.eq.s32.totalorder %v616, %v1284
        %vm1341 = vcmp.eq.s32.totalorder %v617, %v1280
        %vm1342 = vcmp.eq.s32.totalorder %v617, %v1284
        %vm1343 = vcmp.eq.s32.totalorder %v618, %v1280
        %vm1344 = vcmp.eq.s32.totalorder %v618, %v1284
        %vm1345 = vcmp.eq.s32.totalorder %v619, %v1280
        %vm1346 = vcmp.eq.s32.totalorder %v619, %v1284
        %vm1347 = vcmp.eq.s32.totalorder %v620, %v1280
        %vm1348 = vcmp.eq.s32.totalorder %v620, %v1284
        %v1350 = vlaneseq
        %v1351 = vshrl.u32 %v1350, 7
        %v1352 = vsub.s32 0, %v1351
        %v1353 = vrot.slane %v702, %v1352
        %v1354 = vlaneseq
        %v1355 = vshrl.u32 %v1354, 7
        %v1356 = vsub.s32 1, %v1355
        %v1357 = vrot.slane %v702, %v1356
        %v1360 = vsel %vm1285, %v1353, 0.0
        %v1361 = vsel %vm1286, %v1357, 0.0
        %v1362 = vsel %vm1287, %v1353, 0.0
        %v1363 = vsel %vm1288, %v1357, 0.0
        %v1364 = vsel %vm1289, %v1353, 0.0
        %v1365 = vsel %vm1290, %v1357, 0.0
        %v1366 = vsel %vm1291, %v1353, 0.0
        %v1367 = vsel %vm1292, %v1357, 0.0
        %v1368 = vsel %vm1293, %v1353, 0.0
        %v1369 = vsel %vm1294, %v1357, 0.0
        %v1370 = vsel %vm1295, %v1353, 0.0
        %v1371 = vsel %vm1296, %v1357, 0.0
        %v1372 = vsel %vm1297, %v1353, 0.0
        %v1373 = vsel %vm1298, %v1357, 0.0
        %v1374 = vsel %vm1299, %v1353, 0.0
        %v1375 = vsel %vm1300, %v1357, 0.0
        %v1376 = vsel %vm1301, %v1353, 0.0
        %v1377 = vsel %vm1302, %v1357, 0.0
        %v1378 = vsel %vm1303, %v1353, 0.0
        %v1379 = vsel %vm1304, %v1357, 0.0
        %v1380 = vsel %vm1305, %v1353, 0.0
        %v1381 = vsel %vm1306, %v1357, 0.0
        %v1382 = vsel %vm1307, %v1353, 0.0
        %v1383 = vsel %vm1308, %v1357, 0.0
        %v1384 = vsel %vm1309, %v1353, 0.0
        %v1385 = vsel %vm1310, %v1357, 0.0
        %v1386 = vsel %vm1311, %v1353, 0.0
        %v1387 = vsel %vm1312, %v1357, 0.0
        %v1388 = vsel %vm1313, %v1353, 0.0
        %v1389 = vsel %vm1314, %v1357, 0.0
        %v1390 = vsel %vm1315, %v1353, 0.0
        %v1391 = vsel %vm1316, %v1357, 0.0
        %v1392 = vsel %vm1317, %v1353, 0.0
        %v1393 = vsel %vm1318, %v1357, 0.0
        %v1394 = vsel %vm1319, %v1353, 0.0
        %v1395 = vsel %vm1320, %v1357, 0.0
        %v1396 = vsel %vm1321, %v1353, 0.0
        %v1397 = vsel %vm1322, %v1357, 0.0
        %v1398 = vsel %vm1323, %v1353, 0.0
        %v1399 = vsel %vm1324, %v1357, 0.0
        %v1400 = vsel %vm1325, %v1353, 0.0
        %v1401 = vsel %vm1326, %v1357, 0.0
        %v1402 = vsel %vm1327, %v1353, 0.0
        %v1403 = vsel %vm1328, %v1357, 0.0
        %v1404 = vsel %vm1329, %v1353, 0.0
        %v1405 = vsel %vm1330, %v1357, 0.0
        %v1406 = vsel %vm1331, %v1353, 0.0
        %v1407 = vsel %vm1332, %v1357, 0.0
        %v1408 = vsel %vm1333, %v1353, 0.0
        %v1409 = vsel %vm1334, %v1357, 0.0
        %v1410 = vsel %vm1335, %v1353, 0.0
        %v1411 = vsel %vm1336, %v1357, 0.0
        %v1412 = vsel %vm1337, %v1353, 0.0
        %v1413 = vsel %vm1338, %v1357, 0.0
        %v1414 = vsel %vm1339, %v1353, 0.0
        %v1415 = vsel %vm1340, %v1357, 0.0
        %v1416 = vsel %vm1341, %v1353, 0.0
        %v1417 = vsel %vm1342, %v1357, 0.0
        %v1418 = vsel %vm1343, %v1353, 0.0
        %v1419 = vsel %vm1344, %v1357, 0.0
        %v1420 = vsel %vm1345, %v1353, 0.0
        %v1421 = vsel %vm1346, %v1357, 0.0
        %v1422 = vsel %vm1347, %v1353, 0.0
        %v1423 = vsel %vm1348, %v1357, 0.0
        %v1424 = vadd.f32 %v1212, %v1360
        %v1425 = vadd.f32 %v1213, %v1361
        %v1426 = vadd.f32 %v1214, %v1362
        %v1427 = vadd.f32 %v1215, %v1363
        %v1428 = vadd.f32 %v1216, %v1364
        %v1429 = vadd.f32 %v1217, %v1365
        %v1430 = vadd.f32 %v1218, %v1366
        %v1431 = vadd.f32 %v1219, %v1367
        %v1432 = vadd.f32 %v1220, %v1368
        %v1433 = vadd.f32 %v1221, %v1369
        %v1434 = vadd.f32 %v1222, %v1370
        %v1435 = vadd.f32 %v1223, %v1371
        %v1436 = vadd.f32 %v1224, %v1372
        %v1437 = vadd.f32 %v1225, %v1373
        %v1438 = vadd.f32 %v1226, %v1374
        %v1439 = vadd.f32 %v1227, %v1375
        %v1440 = vadd.f32 %v1228, %v1376
        %v1441 = vadd.f32 %v1229, %v1377
        %v1442 = vadd.f32 %v1230, %v1378
        %v1443 = vadd.f32 %v1231, %v1379
        %v1444 = vadd.f32 %v1232, %v1380
        %v1445 = vadd.f32 %v1233, %v1381
        %v1446 = vadd.f32 %v1234, %v1382
        %v1447 = vadd.f32 %v1235, %v1383
        %v1448 = vadd.f32 %v1236, %v1384
        %v1449 = vadd.f32 %v1237, %v1385
        %v1450 = vadd.f32 %v1238, %v1386
        %v1451 = vadd.f32 %v1239, %v1387
        %v1452 = vadd.f32 %v1240, %v1388
        %v1453 = vadd.f32 %v1241, %v1389
        %v1454 = vadd.f32 %v1242, %v1390
        %v1455 = vadd.f32 %v1243, %v1391
        %v1456 = vadd.f32 %v1244, %v1392
        %v1457 = vadd.f32 %v1245, %v1393
        %v1458 = vadd.f32 %v1246, %v1394
        %v1459 = vadd.f32 %v1247, %v1395
        %v1460 = vadd.f32 %v1248, %v1396
        %v1461 = vadd.f32 %v1249, %v1397
        %v1462 = vadd.f32 %v1250, %v1398
        %v1463 = vadd.f32 %v1251, %v1399
        %v1464 = vadd.f32 %v1252, %v1400
        %v1465 = vadd.f32 %v1253, %v1401
        %v1466 = vadd.f32 %v1254, %v1402
        %v1467 = vadd.f32 %v1255, %v1403
        %v1468 = vadd.f32 %v1256, %v1404
        %v1469 = vadd.f32 %v1257, %v1405
        %v1470 = vadd.f32 %v1258, %v1406
        %v1471 = vadd.f32 %v1259, %v1407
        %v1472 = vadd.f32 %v1260, %v1408
        %v1473 = vadd.f32 %v1261, %v1409
        %v1474 = vadd.f32 %v1262, %v1410
        %v1475 = vadd.f32 %v1263, %v1411
        %v1476 = vadd.f32 %v1264, %v1412
        %v1477 = vadd.f32 %v1265, %v1413
        %v1478 = vadd.f32 %v1266, %v1414
        %v1479 = vadd.f32 %v1267, %v1415
        %v1480 = vadd.f32 %v1268, %v1416
        %v1481 = vadd.f32 %v1269, %v1417
        %v1482 = vadd.f32 %v1270, %v1418
        %v1483 = vadd.f32 %v1271, %v1419
        %v1484 = vadd.f32 %v1272, %v1420
        %v1485 = vadd.f32 %v1273, %v1421
        %v1486 = vadd.f32 %v1274, %v1422
        %v1487 = vadd.f32 %v1275, %v1423
        %s1488 = smul.u32 %s622, 8
        %s1489 = sshra.s32 %s1488, 3
        %s1490 = sand.u32 %s1488, 7
        %s1491 = smul.u32 %s1489, 2
        %s1492 = smul.addr %s1491, 8
        %s1493 = scalar_lea.vmem [#allocation2], %s1492
        %v1494 = vld [vmem:[%s1493] sm:$0xff]
        %v1495 = vld [vmem:[%s1493 + $0x8] sm:$0xff]
        %1496 = vmatprep.subr.mxu0 %v1455
        %1497 = vmatpush1.msra.mxu0 %v1454
        %1498 = vmatprep.subr.mxu0 %v1453
        %1499 = vmatpush1.msra.mxu0 %v1452
        %1500 = vmatprep.subr.mxu0 %v1451
        %1501 = vmatpush1.msra.mxu0 %v1450
        %1502 = vmatprep.subr.mxu0 %v1449
        %1503 = vmatpush1.msra.mxu0 %v1448
        %1504 = vmatprep.subr.mxu0 %v1447
        %1505 = vmatpush1.msra.mxu0 %v1446
        %1506 = vmatprep.subr.mxu0 %v1445
        %1507 = vmatpush1.msra.mxu0 %v1444
        %1508 = vmatprep.subr.mxu0 %v1443
        %1509 = vmatpush1.msra.mxu0 %v1442
        %1510 = vmatprep.subr.mxu0 %v1441
        %1511 = vmatpush1.msra.mxu0 %v1440
        %1512 = vmatprep.subr.mxu0 %v1439
        %1513 = vmatpush1.msra.mxu0 %v1438
        %1514 = vmatprep.subr.mxu0 %v1437
        %1515 = vmatpush1.msra.mxu0 %v1436
        %1516 = vmatprep.subr.mxu0 %v1435
        %1517 = vmatpush1.msra.mxu0 %v1434
        %1518 = vmatprep.subr.mxu0 %v1433
        %1519 = vmatpush1.msra.mxu0 %v1432
        %1520 = vmatprep.subr.mxu0 %v1431
        %1521 = vmatpush1.msra.mxu0 %v1430
        %1522 = vmatprep.subr.mxu0 %v1429
        %1523 = vmatpush1.msra.mxu0 %v1428
        %1524 = vmatprep.subr.mxu0 %v1427
        %1525 = vmatpush1.msra.mxu0 %v1426
        %1526 = vmatprep.subr.mxu0 %v1425
        %1527 = vmatpush1.msra.mxu0 %v1424
        %1528 = vmatprep.subr.mxu0 %v1487
        %1529 = vmatpush2.msra.mxu0 %v1486
        %1530 = vmatprep.subr.mxu0 %v1485
        %1531 = vmatpush2.msra.mxu0 %v1484
        %1532 = vmatprep.subr.mxu0 %v1483
        %1533 = vmatpush2.msra.mxu0 %v1482
        %1534 = vmatprep.subr.mxu0 %v1481
        %1535 = vmatpush2.msra.mxu0 %v1480
        %1536 = vmatprep.subr.mxu0 %v1479
        %1537 = vmatpush2.msra.mxu0 %v1478
        %1538 = vmatprep.subr.mxu0 %v1477
        %1539 = vmatpush2.msra.mxu0 %v1476
        %1540 = vmatprep.subr.mxu0 %v1475
        %1541 = vmatpush2.msra.mxu0 %v1474
        %1542 = vmatprep.subr.mxu0 %v1473
        %1543 = vmatpush2.msra.mxu0 %v1472
        %1544 = vmatprep.subr.mxu0 %v1471
        %1545 = vmatpush2.msra.mxu0 %v1470
        %1546 = vmatprep.subr.mxu0 %v1469
        %1547 = vmatpush2.msra.mxu0 %v1468
        %1548 = vmatprep.subr.mxu0 %v1467
        %1549 = vmatpush2.msra.mxu0 %v1466
        %1550 = vmatprep.subr.mxu0 %v1465
        %1551 = vmatpush2.msra.mxu0 %v1464
        %1552 = vmatprep.subr.mxu0 %v1463
        %1553 = vmatpush2.msra.mxu0 %v1462
        %1554 = vmatprep.subr.mxu0 %v1461
        %1555 = vmatpush2.msra.mxu0 %v1460
        %1556 = vmatprep.subr.mxu0 %v1459
        %1557 = vmatpush2.msra.mxu0 %v1458
        %1558 = vmatprep.subr.mxu0 %v1457
        %1559 = vmatpush2.msra.mxu0 %v1456
        %1560 = vmatprep.mubr.f32.mxu0 %v1495
        %1561 = vmatmul.mubr.f32.gmra.mxu0 %v1494
        %v1562 = vpop.f32.mrf.mxu0
        %v1563 = vadd.f32 0.0, %v1562
        %v1564 = vpop.f32.mrf.mxu0
        %v1565 = vadd.f32 0.0, %v1564
        %1566 = vdwg.mxu0
        %v1567 = vadd.f32 %v627, %v1563
        %v1568 = vadd.f32 %v628, %v1565
      $region53: #{dcn_forward.3} parent=43 // loop_footer
        %s626 = sadd.s32 1, %s622
      $region54: #{dcn_forward.3} parent=43 // loop_footer_branch
        %621 = sbr.rel target = $region50
      $region55: #{dcn_forward.3} parent=43 // loop_exit
        _
      %v1569 = vld [vmem:[%s5] sm:$0xff]
      %1571 = vset.pattern.permute.xlu0 0
      %1572 = vperm.xlu0 %1571, %v1569
      %v1573 = vpop.permute.xlu0 %1572
      %v1575 = vadd.f32 %v627, %v1573
      %v1576 = vadd.f32 %v628, %v1573
      %1577 = vst [vmem:[%s353] sm:$0xff] %v1575
      %1578 = vst [vmem:[%s353 + $0x8] sm:$0xff] %v1576
      %s1579 = smul.u32 2, %s22
      %p1580 = scmp.lt.s32.totalorder %s21, 1
      %s1581 = scalar_select %p1580, %s21, 1
      %p1582 = scmp.lt.s32.totalorder %s1579, 1
      %s1583 = scalar_select %p1582, %s1579, 1
      %s1584 = smul.addr %s1581, 2
      %s1585 = sadd.s32 %s1583, %s1584
      %s1586 = smul.addr %s1585, 8
      %s1587 = scalar_lea.vmem %s6, %s1586
      // Predicated region
      $region56: #{dcn_forward.3} parent=43 // pred_check
        %p1588 = pneg %p197
      $region57: #{dcn_forward.3} parent=43 // pred_check_branch
        %1590 = sbr.rel (%p1588) target = $region59
      $region58: #{dcn_forward.3} parent=43 // pred_region
        %s1591 = smul.u32 2, %s22
      $region59: #{dcn_forward.3} parent=43 // pred_fallthru
        _
    $region44: #{dcn_forward.3} parent=5 // pred_fallthru
      _
    %p1592 = scmp.le.s32.totalorder 2, %s12
    // Predicated region
    $region60: #{dcn_forward.3} parent=5 // pred_check
      %p1593 = pneg %p1592
    $region61: #{dcn_forward.3} parent=5 // pred_check_branch
      %1595 = sbr.rel (%p1593) target = $region63
    $region62: #{dcn_forward.3} parent=5 // pred_region
      %s1596 = ssub.s32 %s12, 2
      // Predicated region
      $region64: #{dcn_forward.3} parent=62 // pred_check
        %p1597 = pneg %p203
      $region65: #{dcn_forward.3} parent=62 // pred_check_branch
        %1599 = sbr.rel (%p1597) target = $region67
      $region66: #{dcn_forward.3} parent=62 // pred_region
        %s1600 = smul.u32 2, %s24
        %p1601 = scmp.lt.s32.totalorder %s23, 1
        %s1602 = scalar_select %p1601, %s23, 1
        %p1603 = scmp.lt.s32.totalorder %s1600, 1
        %s1604 = scalar_select %p1603, %s1600, 1
        %s1605 = smul.addr %s1602, 2
        %s1606 = sadd.s32 %s1604, %s1605
        %s1607 = smul.addr %s1606, 8
        %s1608 = scalar_lea.vmem %s6, %s1607
      $region67: #{dcn_forward.3} parent=62 // pred_fallthru
        _
    $region63: #{dcn_forward.3} parent=5 // pred_fallthru
      _
  $region6: #{dcn_forward.3} parent=0 // loop_footer
    %s16 = sadd.s32 1, %s12
  $region7: #{dcn_forward.3} parent=0 // loop_footer_branch
    %11 = sbr.rel target = $region3
  $region8: #{dcn_forward.3} parent=0 // loop_exit
    _

</llo_original>
